<compile_context>
chip_gen: v7x
topology: tpu7x:2x2x1
jax: 0.10.0
libtpu: 0.0.40
codegen_flags: <defaults>
</compile_context>

<pallas_src>
import functools

import jax
import jax.numpy as jnp
from jax.experimental import pallas as pl
from jax.experimental.pallas import tpu as pltpu

# ----------------------------- model config ---------------------------------
NUM_CLASSES = 16
EMBED_DIM = 32
HIDDEN_SIZE = 32
NUM_LAYERS = 2
BATCH = 4
SEQ = 8


# ----------------------------- Pallas kernel --------------------------------
def fused_rnn_kernel(tok_ref,
                     embw0_ref, whh0_ref, bhh0_ref,
                     w1_ref, b1_ref,
                     wproj_ref, bproj_ref,
                     logits_ref, hT_ref):
    """Embedding + 2-layer GRU + Linear in one grid step.

    tok_ref    : (B, S)    int32 token ids (batch-major, as given by the user)
    embw0_ref  : (C, 3H)   embed @ W_ih0 + b_ih0  (pre-folded, gate order r|z|n)
    whh0_ref   : (H, 3H)   layer-0 hidden weights
    bhh0_ref   : (1, 3H)   layer-0 hidden bias
    w1_ref     : (2H, 4H)  fused layer-1 weights: cols = [rz(sum) | i_n | h_n]
    b1_ref     : (1, 4H)   fused layer-1 bias     (same column layout)
    wproj_ref  : (H, C)    projection weights
    bproj_ref  : (1, C)    projection bias
    logits_ref : (B, S*C)  batch-major logits (row b, cols t*C:(t+1)*C)
    hT_ref     : (L, B, H) final hidden states
    """
    H = HIDDEN_SIZE
    B = BATCH
    C = NUM_CLASSES
    f32 = jnp.float32
    bf16 = jnp.bfloat16

    # ---- hoisted loads / casts / broadcasts (outside the unrolled loop) ----
    tok = tok_ref[...]                                    # (B, S) int32
    embw0 = embw0_ref[...]                                # (C, 3H) f32
    whh0 = whh0_ref[...].astype(bf16)                     # (H, 3H) bf16
    w1 = w1_ref[...].astype(bf16)                         # (2H, 4H) bf16
    wproj = wproj_ref[...]                                # (H, C)  f32
    bhh0_b = jnp.broadcast_to(bhh0_ref[...], (B, 3 * H))  # broadcast once
    b1_b = jnp.broadcast_to(b1_ref[...], (B, 4 * H))
    bproj_b = jnp.broadcast_to(bproj_ref[...], (B, C))
    cls_iota = jax.lax.broadcasted_iota(jnp.int32, (B, C), 1)

    # ---- fused embedding lookup + layer-0 input projection (off the serial
    # chain): gi0[t] = onehot(tok[:, t]) @ (embed @ W_ih0 + b_ih0). Exact
    # row-select via an MXU matmul; kept in f32 (cheap, one-time). ----
    gi0 = []
    for t in range(SEQ):
        onehot_t = (tok[:, t:t + 1] == cls_iota).astype(f32)        # (B, C)
        gi0.append(jnp.dot(onehot_t, embw0, preferred_element_type=f32))

    h0 = jnp.zeros((B, H), f32)
    h1 = jnp.zeros((B, H), f32)
    logits_t = []

    # seq is static and tiny: fully unrolled recurrence. Serial critical path
    # per step = one (B,H)x(H,3H) bf16 matmul (layer 0) + one (B,2H)x(2H,4H)
    # bf16 matmul (layer 1) + EUP nonlinearities.
    for t in range(SEQ):
        # ----- layer 0 -----
        gh0 = jnp.dot(h0.astype(bf16), whh0,
                      preferred_element_type=f32) + bhh0_b           # (B, 3H)
        g = gi0[t]
        r0 = jax.nn.sigmoid(g[:, 0 * H:1 * H] + gh0[:, 0 * H:1 * H])
        z0 = jax.nn.sigmoid(g[:, 1 * H:2 * H] + gh0[:, 1 * H:2 * H])
        n0 = jnp.tanh(g[:, 2 * H:3 * H] + r0 * gh0[:, 2 * H:3 * H])
        h0 = (1.0 - z0) * n0 + z0 * h0

        # ----- layer 1: single fused matmul for input+hidden gates -----
        x1 = jnp.concatenate([h0.astype(bf16), h1.astype(bf16)], axis=1)  # (B,2H)
        g1 = jnp.dot(x1, w1, preferred_element_type=f32) + b1_b           # (B,4H)
        r1 = jax.nn.sigmoid(g1[:, 0 * H:1 * H])           # rz preacts already summed
        z1 = jax.nn.sigmoid(g1[:, 1 * H:2 * H])
        n1 = jnp.tanh(g1[:, 2 * H:3 * H] + r1 * g1[:, 3 * H:4 * H])
        h1 = (1.0 - z1) * n1 + z1 * h1

        # ----- projection leaf (does not extend the serial chain) -----
        logits_t.append(jnp.dot(h1, wproj, preferred_element_type=f32) + bproj_b)

    # Single lane-dense (B, S*C) = (4, 128) store, already batch-major:
    # element (b, t*C + c)  ==  logits row b*S + t, class c.
    logits_ref[...] = jnp.concatenate(logits_t, axis=1)
    hT_ref[0] = h0
    hT_ref[1] = h1


# ----------------------------- wrapper ---------------------------------------
def pack_params(params):
    """One-time (init-time) repack of the GRU params into kernel-friendly form."""
    H = HIDDEN_SIZE
    p0, p1 = params["gru"]
    # Fold embedding table, layer-0 input weights and input bias into one table.
    embw0 = params["embed"] @ p0["w_ih"] + p0["b_ih"]                 # (C, 3H)
    # Fused layer-1 weight, columns = [r,z (input+hidden summed) | i_n | h_n].
    w1 = jnp.zeros((2 * H, 4 * H), jnp.float32)
    w1 = w1.at[:H, 0:2 * H].set(p1["w_ih"][:, 0:2 * H])
    w1 = w1.at[H:, 0:2 * H].set(p1["w_hh"][:, 0:2 * H])
    w1 = w1.at[:H, 2 * H:3 * H].set(p1["w_ih"][:, 2 * H:3 * H])
    w1 = w1.at[H:, 3 * H:4 * H].set(p1["w_hh"][:, 2 * H:3 * H])
    b1 = jnp.concatenate([p1["b_ih"][:, :2 * H] + p1["b_hh"][:, :2 * H],
                          p1["b_ih"][:, 2 * H:], p1["b_hh"][:, 2 * H:]], axis=1)
    return {
        "embw0": embw0,
        "whh0": p0["w_hh"], "bhh0": p0["b_hh"],
        "w1": w1, "b1": b1,
        "wproj": params["w_proj"], "bproj": params["b_proj"],
    }


@jax.jit
def rnn_forward(packed, x):
    """Mirrors RNN.forward: returns (logits (batch*seq, C), h0 (L, batch, H))."""
    args = (x, packed["embw0"], packed["whh0"], packed["bhh0"],
            packed["w1"], packed["b1"], packed["wproj"], packed["bproj"])

    logits_wide, h_final = pl.pallas_call(
        fused_rnn_kernel,
        out_shape=(
            jax.ShapeDtypeStruct((BATCH, SEQ * NUM_CLASSES), jnp.float32),
            jax.ShapeDtypeStruct((NUM_LAYERS, BATCH, HIDDEN_SIZE), jnp.float32),
        ),
        grid_spec=pltpu.PrefetchScalarGridSpec(
            num_scalar_prefetch=0,
            grid=(1,),                                    # single grid step
            in_specs=[pl.BlockSpec(a.shape, lambda i, n=a.ndim: (0,) * n)
                      for a in args],
            out_specs=(
                pl.BlockSpec((BATCH, SEQ * NUM_CLASSES), lambda i: (0, 0)),
                pl.BlockSpec((NUM_LAYERS, BATCH, HIDDEN_SIZE),
                             lambda i: (0, 0, 0)),
            ),
        ),
        # For batched/throughput inference on v7x (2 TCs), add a leading
        # "parallel" grid axis over independent sequence groups.
        compiler_params=pltpu.CompilerParams(
            dimension_semantics=("arbitrary",)),
    )(*args)

    # (B, S*C) row-major == (b*S + t, c): contiguous reshape, free under jit.
    logits = logits_wide.reshape(BATCH * SEQ, NUM_CLASSES)
    return logits, h_final


# ----------------------------- pure-JAX reference ----------------------------
def gru_layer_ref(x_seq, h0, w_ih, w_hh, b_ih, b_hh):
    H = HIDDEN_SIZE

    def step(h_prev, x_t):
        gi = x_t @ w_ih + b_ih
        gh = h_prev @ w_hh + b_hh
        r = jax.nn.sigmoid(gi[:, :H] + gh[:, :H])
        z = jax.nn.sigmoid(gi[:, H:2 * H] + gh[:, H:2 * H])
        n = jnp.tanh(gi[:, 2 * H:] + r * gh[:, 2 * H:])
        h_new = (1.0 - z) * n + z * h_prev
        return h_new, h_new

    hT, out = jax.lax.scan(step, h0, x_seq)
    return out, hT


def rnn_forward_ref(params, x):
    batch, seq = x.shape
    emb = jnp.take(params["embed"], x, axis=0)
    inp = jnp.transpose(emb, (1, 0, 2))
    h_finals = []
    for layer in range(NUM_LAYERS):
        p = params["gru"][layer]
        inp, hT = gru_layer_ref(inp,
                                jnp.zeros((batch, HIDDEN_SIZE), jnp.float32),
                                p["w_ih"], p["w_hh"], p["b_ih"], p["b_hh"])
        h_finals.append(hT)
    h_final = jnp.stack(h_finals, axis=0)
    flat = inp.reshape(seq * batch, HIDDEN_SIZE)
    logits = flat @ params["w_proj"] + params["b_proj"]
    logits = (logits.reshape(seq, batch, NUM_CLASSES)
              .transpose(1, 0, 2)
              .reshape(-1, NUM_CLASSES))
    return logits, h_final


# ----------------------------- parameters ------------------------------------
def init_params(key):
    keys = jax.random.split(key, 3 + 4 * NUM_LAYERS)
    k_iter = iter(keys)
    bound = 1.0 / jnp.sqrt(HIDDEN_SIZE)

    params = {
        # nn.Embedding default: N(0, 1)
        "embed": jax.random.normal(next(k_iter), (NUM_CLASSES, EMBED_DIM),
                                   jnp.float32),
        "gru": [],
        # nn.Linear default: U(-1/sqrt(fan_in), 1/sqrt(fan_in))
        "w_proj": jax.random.uniform(next(k_iter), (HIDDEN_SIZE, NUM_CLASSES),
                                     jnp.float32, -bound, bound),
        "b_proj": jax.random.uniform(next(k_iter), (1, NUM_CLASSES),
                                     jnp.float32, -bound, bound),
    }
    for layer in range(NUM_LAYERS):
        in_dim = EMBED_DIM if layer == 0 else HIDDEN_SIZE
        params["gru"].append({
            # fused gate layout: columns = [r | z | n], each H wide
            "w_ih": jax.random.uniform(next(k_iter),
                                       (in_dim, 3 * HIDDEN_SIZE),
                                       jnp.float32, -bound, bound),
            "w_hh": jax.random.uniform(next(k_iter),
                                       (HIDDEN_SIZE, 3 * HIDDEN_SIZE),
                                       jnp.float32, -bound, bound),
            "b_ih": jax.random.uniform(next(k_iter), (1, 3 * HIDDEN_SIZE),
                                       jnp.float32, -bound, bound),
            "b_hh": jax.random.uniform(next(k_iter), (1, 3 * HIDDEN_SIZE),
                                       jnp.float32, -bound, bound),
        })
    return params


# ----------------------------- main -------------------------------------------
if __name__ == "__main__":
    params = init_params(jax.random.PRNGKey(0))
    packed = pack_params(params)

    # inputs: token ids (batch, seq)
    x = jax.random.randint(jax.random.PRNGKey(0), (BATCH, SEQ), 0, NUM_CLASSES,
                           dtype=jnp.int32)

    logits, h_final = rnn_forward(packed, x)
    jax.block_until_ready((logits, h_final))

    # sanity check against pure-JAX f32 reference; tolerance relaxed because
    # the recurrent matmuls now use bf16 operands (f32 accumulation).
    ref_logits, ref_h = rnn_forward_ref(params, x)
    assert logits.shape == (BATCH * SEQ, NUM_CLASSES)
    assert h_final.shape == (NUM_LAYERS, BATCH, HIDDEN_SIZE)
    assert jnp.allclose(logits, ref_logits, atol=3e-2, rtol=3e-2), \
        float(jnp.max(jnp.abs(logits - ref_logits)))
    assert jnp.allclose(h_final, ref_h, atol=3e-2, rtol=3e-2), \
        float(jnp.max(jnp.abs(h_final - ref_h)))

    print("KERNEL_OK")
</pallas_src>

<mosaic_0001>
module attributes {stable_mosaic.version = 11 : i64} {
  func.func @fused_rnn_kernel(%arg0: i32, %arg1: memref<4x8xi32, #tpu.memory_space<vmem>>, %arg2: memref<16x96xf32, #tpu.memory_space<vmem>>, %arg3: memref<32x96xf32, #tpu.memory_space<vmem>>, %arg4: memref<1x96xf32, #tpu.memory_space<vmem>>, %arg5: memref<64x128xf32, #tpu.memory_space<vmem>>, %arg6: memref<1x128xf32, #tpu.memory_space<vmem>>, %arg7: memref<32x16xf32, #tpu.memory_space<vmem>>, %arg8: memref<1x16xf32, #tpu.memory_space<vmem>>, %arg9: memref<4x128xf32, #tpu.memory_space<vmem>>, %arg10: memref<2x4x32xf32, #tpu.memory_space<vmem>>) attributes {dimension_semantics = [#tpu.dimension_semantics<arbitrary>], iteration_bounds = array<i64: 1>, scalar_prefetch = 0 : i64, scratch_operands = 0 : i64, tpu.core_type = #tpu.core_type<tc>, window_params = [{pipeline_mode = #tpu.pipeline_mode<synchronous>, transform_indices = @transform_0, window_bounds = array<i64: 4, 8>}, {pipeline_mode = #tpu.pipeline_mode<synchronous>, transform_indices = @transform_1, window_bounds = array<i64: 16, 96>}, {pipeline_mode = #tpu.pipeline_mode<synchronous>, transform_indices = @transform_2, window_bounds = array<i64: 32, 96>}, {pipeline_mode = #tpu.pipeline_mode<synchronous>, transform_indices = @transform_3, window_bounds = array<i64: 1, 96>}, {pipeline_mode = #tpu.pipeline_mode<synchronous>, transform_indices = @transform_4, window_bounds = array<i64: 64, 128>}, {pipeline_mode = #tpu.pipeline_mode<synchronous>, transform_indices = @transform_5, window_bounds = array<i64: 1, 128>}, {pipeline_mode = #tpu.pipeline_mode<synchronous>, transform_indices = @transform_6, window_bounds = array<i64: 32, 16>}, {pipeline_mode = #tpu.pipeline_mode<synchronous>, transform_indices = @transform_7, window_bounds = array<i64: 1, 16>}, {pipeline_mode = #tpu.pipeline_mode<synchronous>, transform_indices = @transform_8, window_bounds = array<i64: 4, 128>}, {pipeline_mode = #tpu.pipeline_mode<synchronous>, transform_indices = @transform_9, window_bounds = array<i64: 2, 4, 32>}]} {
    %c0 = arith.constant 0 : index
    %c0_0 = arith.constant 0 : index
    %0 = vector.load %arg1[%c0, %c0_0] : memref<4x8xi32, #tpu.memory_space<vmem>>, vector<4x8xi32>
    %c0_1 = arith.constant 0 : index
    %c0_2 = arith.constant 0 : index
    %1 = vector.load %arg2[%c0_1, %c0_2] : memref<16x96xf32, #tpu.memory_space<vmem>>, vector<16x96xf32>
    %c0_3 = arith.constant 0 : index
    %c0_4 = arith.constant 0 : index
    %2 = vector.load %arg3[%c0_3, %c0_4] : memref<32x96xf32, #tpu.memory_space<vmem>>, vector<32x96xf32>
    %3 = arith.truncf %2 : vector<32x96xf32> to vector<32x96xbf16>
    %c0_5 = arith.constant 0 : index
    %c0_6 = arith.constant 0 : index
    %4 = vector.load %arg5[%c0_5, %c0_6] : memref<64x128xf32, #tpu.memory_space<vmem>>, vector<64x128xf32>
    %5 = arith.truncf %4 : vector<64x128xf32> to vector<64x128xbf16>
    %c0_7 = arith.constant 0 : index
    %c0_8 = arith.constant 0 : index
    %6 = vector.load %arg7[%c0_7, %c0_8] : memref<32x16xf32, #tpu.memory_space<vmem>>, vector<32x16xf32>
    %c0_9 = arith.constant 0 : index
    %c0_10 = arith.constant 0 : index
    %7 = vector.load %arg4[%c0_9, %c0_10] : memref<1x96xf32, #tpu.memory_space<vmem>>, vector<1x96xf32>
    %8 = vector.shape_cast %7 : vector<1x96xf32> to vector<1x96xf32>
    %9 = vector.broadcast %8 : vector<1x96xf32> to vector<4x96xf32>
    %c0_11 = arith.constant 0 : index
    %c0_12 = arith.constant 0 : index
    %10 = vector.load %arg6[%c0_11, %c0_12] : memref<1x128xf32, #tpu.memory_space<vmem>>, vector<1x128xf32>
    %11 = vector.shape_cast %10 : vector<1x128xf32> to vector<1x128xf32>
    %12 = vector.broadcast %11 : vector<1x128xf32> to vector<4x128xf32>
    %c0_13 = arith.constant 0 : index
    %c0_14 = arith.constant 0 : index
    %13 = vector.load %arg8[%c0_13, %c0_14] : memref<1x16xf32, #tpu.memory_space<vmem>>, vector<1x16xf32>
    %14 = vector.shape_cast %13 : vector<1x16xf32> to vector<1x16xf32>
    %15 = vector.broadcast %14 : vector<1x16xf32> to vector<4x16xf32>
    %16 = tpu.iota {dimensions = array<i32: 1>} : vector<4x16xi32>
    %17 = vector.extract_strided_slice %0 {offsets = [0, 0], sizes = [4, 1], strides = [1, 1]} : vector<4x8xi32> to vector<4x1xi32>
    %18 = vector.broadcast %17 : vector<4x1xi32> to vector<4x16xi32>
    %19 = arith.cmpi eq, %18, %16 : vector<4x16xi32>
    %20 = arith.extui %19 : vector<4x16xi1> to vector<4x16xi32>
    %21 = arith.sitofp %20 : vector<4x16xi32> to vector<4x16xf32>
    %cst = arith.constant dense<0.000000e+00> : vector<4x96xf32>
    %22 = tpu.matmul %21, %1, %cst {dimension_numbers = #tpu.dot_dimension_numbers<[1], [0], [0], [1], [0, 0, 1, 1], [], []>} : vector<4x16xf32>, vector<16x96xf32>, vector<4x96xf32> -> vector<4x96xf32>
    %23 = vector.extract_strided_slice %0 {offsets = [0, 1], sizes = [4, 1], strides = [1, 1]} : vector<4x8xi32> to vector<4x1xi32>
    %24 = vector.broadcast %23 : vector<4x1xi32> to vector<4x16xi32>
    %25 = arith.cmpi eq, %24, %16 : vector<4x16xi32>
    %26 = arith.extui %25 : vector<4x16xi1> to vector<4x16xi32>
    %27 = arith.sitofp %26 : vector<4x16xi32> to vector<4x16xf32>
    %cst_15 = arith.constant dense<0.000000e+00> : vector<4x96xf32>
    %28 = tpu.matmul %27, %1, %cst_15 {dimension_numbers = #tpu.dot_dimension_numbers<[1], [0], [0], [1], [0, 0, 1, 1], [], []>} : vector<4x16xf32>, vector<16x96xf32>, vector<4x96xf32> -> vector<4x96xf32>
    %29 = vector.extract_strided_slice %0 {offsets = [0, 2], sizes = [4, 1], strides = [1, 1]} : vector<4x8xi32> to vector<4x1xi32>
    %30 = vector.broadcast %29 : vector<4x1xi32> to vector<4x16xi32>
    %31 = arith.cmpi eq, %30, %16 : vector<4x16xi32>
    %32 = arith.extui %31 : vector<4x16xi1> to vector<4x16xi32>
    %33 = arith.sitofp %32 : vector<4x16xi32> to vector<4x16xf32>
    %cst_16 = arith.constant dense<0.000000e+00> : vector<4x96xf32>
    %34 = tpu.matmul %33, %1, %cst_16 {dimension_numbers = #tpu.dot_dimension_numbers<[1], [0], [0], [1], [0, 0, 1, 1], [], []>} : vector<4x16xf32>, vector<16x96xf32>, vector<4x96xf32> -> vector<4x96xf32>
    %35 = vector.extract_strided_slice %0 {offsets = [0, 3], sizes = [4, 1], strides = [1, 1]} : vector<4x8xi32> to vector<4x1xi32>
    %36 = vector.broadcast %35 : vector<4x1xi32> to vector<4x16xi32>
    %37 = arith.cmpi eq, %36, %16 : vector<4x16xi32>
    %38 = arith.extui %37 : vector<4x16xi1> to vector<4x16xi32>
    %39 = arith.sitofp %38 : vector<4x16xi32> to vector<4x16xf32>
    %cst_17 = arith.constant dense<0.000000e+00> : vector<4x96xf32>
    %40 = tpu.matmul %39, %1, %cst_17 {dimension_numbers = #tpu.dot_dimension_numbers<[1], [0], [0], [1], [0, 0, 1, 1], [], []>} : vector<4x16xf32>, vector<16x96xf32>, vector<4x96xf32> -> vector<4x96xf32>
    %41 = vector.extract_strided_slice %0 {offsets = [0, 4], sizes = [4, 1], strides = [1, 1]} : vector<4x8xi32> to vector<4x1xi32>
    %42 = vector.broadcast %41 : vector<4x1xi32> to vector<4x16xi32>
    %43 = arith.cmpi eq, %42, %16 : vector<4x16xi32>
    %44 = arith.extui %43 : vector<4x16xi1> to vector<4x16xi32>
    %45 = arith.sitofp %44 : vector<4x16xi32> to vector<4x16xf32>
    %cst_18 = arith.constant dense<0.000000e+00> : vector<4x96xf32>
    %46 = tpu.matmul %45, %1, %cst_18 {dimension_numbers = #tpu.dot_dimension_numbers<[1], [0], [0], [1], [0, 0, 1, 1], [], []>} : vector<4x16xf32>, vector<16x96xf32>, vector<4x96xf32> -> vector<4x96xf32>
    %47 = vector.extract_strided_slice %0 {offsets = [0, 5], sizes = [4, 1], strides = [1, 1]} : vector<4x8xi32> to vector<4x1xi32>
    %48 = vector.broadcast %47 : vector<4x1xi32> to vector<4x16xi32>
    %49 = arith.cmpi eq, %48, %16 : vector<4x16xi32>
    %50 = arith.extui %49 : vector<4x16xi1> to vector<4x16xi32>
    %51 = arith.sitofp %50 : vector<4x16xi32> to vector<4x16xf32>
    %cst_19 = arith.constant dense<0.000000e+00> : vector<4x96xf32>
    %52 = tpu.matmul %51, %1, %cst_19 {dimension_numbers = #tpu.dot_dimension_numbers<[1], [0], [0], [1], [0, 0, 1, 1], [], []>} : vector<4x16xf32>, vector<16x96xf32>, vector<4x96xf32> -> vector<4x96xf32>
    %53 = vector.extract_strided_slice %0 {offsets = [0, 6], sizes = [4, 1], strides = [1, 1]} : vector<4x8xi32> to vector<4x1xi32>
    %54 = vector.broadcast %53 : vector<4x1xi32> to vector<4x16xi32>
    %55 = arith.cmpi eq, %54, %16 : vector<4x16xi32>
    %56 = arith.extui %55 : vector<4x16xi1> to vector<4x16xi32>
    %57 = arith.sitofp %56 : vector<4x16xi32> to vector<4x16xf32>
    %cst_20 = arith.constant dense<0.000000e+00> : vector<4x96xf32>
    %58 = tpu.matmul %57, %1, %cst_20 {dimension_numbers = #tpu.dot_dimension_numbers<[1], [0], [0], [1], [0, 0, 1, 1], [], []>} : vector<4x16xf32>, vector<16x96xf32>, vector<4x96xf32> -> vector<4x96xf32>
    %59 = vector.extract_strided_slice %0 {offsets = [0, 7], sizes = [4, 1], strides = [1, 1]} : vector<4x8xi32> to vector<4x1xi32>
    %60 = vector.broadcast %59 : vector<4x1xi32> to vector<4x16xi32>
    %61 = arith.cmpi eq, %60, %16 : vector<4x16xi32>
    %62 = arith.extui %61 : vector<4x16xi1> to vector<4x16xi32>
    %63 = arith.sitofp %62 : vector<4x16xi32> to vector<4x16xf32>
    %cst_21 = arith.constant dense<0.000000e+00> : vector<4x96xf32>
    %64 = tpu.matmul %63, %1, %cst_21 {dimension_numbers = #tpu.dot_dimension_numbers<[1], [0], [0], [1], [0, 0, 1, 1], [], []>} : vector<4x16xf32>, vector<16x96xf32>, vector<4x96xf32> -> vector<4x96xf32>
    %cst_22 = arith.constant 0.000000e+00 : f32
    %65 = vector.broadcast %cst_22 : f32 to vector<4x32xf32>
    %cst_23 = arith.constant 0.000000e+00 : f32
    %66 = vector.broadcast %cst_23 : f32 to vector<4x32xf32>
    %67 = arith.truncf %65 : vector<4x32xf32> to vector<4x32xbf16>
    %cst_24 = arith.constant dense<0.000000e+00> : vector<4x96xf32>
    %68 = tpu.matmul %67, %3, %cst_24 {dimension_numbers = #tpu.dot_dimension_numbers<[1], [0], [0], [1], [0, 0, 1, 1], [], []>} : vector<4x32xbf16>, vector<32x96xbf16>, vector<4x96xf32> -> vector<4x96xf32>
    %69 = arith.addf %68, %9 : vector<4x96xf32>
    %70 = vector.extract_strided_slice %22 {offsets = [0, 0], sizes = [4, 32], strides = [1, 1]} : vector<4x96xf32> to vector<4x32xf32>
    %71 = vector.extract_strided_slice %69 {offsets = [0, 0], sizes = [4, 32], strides = [1, 1]} : vector<4x96xf32> to vector<4x32xf32>
    %72 = arith.addf %70, %71 : vector<4x32xf32>
    %73 = arith.negf %72 : vector<4x32xf32>
    %74 = math.exp %73 : vector<4x32xf32>
    %cst_25 = arith.constant 1.000000e+00 : f32
    %75 = vector.broadcast %cst_25 : f32 to vector<4x32xf32>
    %76 = arith.addf %75, %74 : vector<4x32xf32>
    %77 = arith.divf %75, %76 : vector<4x32xf32>
    %78 = vector.extract_strided_slice %22 {offsets = [0, 32], sizes = [4, 32], strides = [1, 1]} : vector<4x96xf32> to vector<4x32xf32>
    %79 = vector.extract_strided_slice %69 {offsets = [0, 32], sizes = [4, 32], strides = [1, 1]} : vector<4x96xf32> to vector<4x32xf32>
    %80 = arith.addf %78, %79 : vector<4x32xf32>
    %81 = arith.negf %80 : vector<4x32xf32>
    %82 = math.exp %81 : vector<4x32xf32>
    %cst_26 = arith.constant 1.000000e+00 : f32
    %83 = vector.broadcast %cst_26 : f32 to vector<4x32xf32>
    %84 = arith.addf %83, %82 : vector<4x32xf32>
    %85 = arith.divf %83, %84 : vector<4x32xf32>
    %86 = vector.extract_strided_slice %22 {offsets = [0, 64], sizes = [4, 32], strides = [1, 1]} : vector<4x96xf32> to vector<4x32xf32>
    %87 = vector.extract_strided_slice %69 {offsets = [0, 64], sizes = [4, 32], strides = [1, 1]} : vector<4x96xf32> to vector<4x32xf32>
    %88 = arith.mulf %77, %87 : vector<4x32xf32>
    %89 = arith.addf %86, %88 : vector<4x32xf32>
    %90 = math.tanh %89 : vector<4x32xf32>
    %cst_27 = arith.constant 1.000000e+00 : f32
    %91 = vector.broadcast %cst_27 : f32 to vector<4x32xf32>
    %92 = arith.subf %91, %85 : vector<4x32xf32>
    %93 = arith.mulf %92, %90 : vector<4x32xf32>
    %94 = arith.mulf %85, %65 : vector<4x32xf32>
    %95 = arith.addf %93, %94 : vector<4x32xf32>
    %96 = arith.truncf %95 : vector<4x32xf32> to vector<4x32xbf16>
    %97 = arith.truncf %66 : vector<4x32xf32> to vector<4x32xbf16>
    %98 = tpu.concatenate %96, %97 in 1 : vector<4x32xbf16>, vector<4x32xbf16> -> vector<4x64xbf16>
    %cst_28 = arith.constant dense<0.000000e+00> : vector<4x128xf32>
    %99 = tpu.matmul %98, %5, %cst_28 {dimension_numbers = #tpu.dot_dimension_numbers<[1], [0], [0], [1], [0, 0, 1, 1], [], []>} : vector<4x64xbf16>, vector<64x128xbf16>, vector<4x128xf32> -> vector<4x128xf32>
    %100 = arith.addf %99, %12 : vector<4x128xf32>
    %101 = vector.extract_strided_slice %100 {offsets = [0, 0], sizes = [4, 32], strides = [1, 1]} : vector<4x128xf32> to vector<4x32xf32>
    %102 = arith.negf %101 : vector<4x32xf32>
    %103 = math.exp %102 : vector<4x32xf32>
    %cst_29 = arith.constant 1.000000e+00 : f32
    %104 = vector.broadcast %cst_29 : f32 to vector<4x32xf32>
    %105 = arith.addf %104, %103 : vector<4x32xf32>
    %106 = arith.divf %104, %105 : vector<4x32xf32>
    %107 = vector.extract_strided_slice %100 {offsets = [0, 32], sizes = [4, 32], strides = [1, 1]} : vector<4x128xf32> to vector<4x32xf32>
    %108 = arith.negf %107 : vector<4x32xf32>
    %109 = math.exp %108 : vector<4x32xf32>
    %cst_30 = arith.constant 1.000000e+00 : f32
    %110 = vector.broadcast %cst_30 : f32 to vector<4x32xf32>
    %111 = arith.addf %110, %109 : vector<4x32xf32>
    %112 = arith.divf %110, %111 : vector<4x32xf32>
    %113 = vector.extract_strided_slice %100 {offsets = [0, 64], sizes = [4, 32], strides = [1, 1]} : vector<4x128xf32> to vector<4x32xf32>
    %114 = vector.extract_strided_slice %100 {offsets = [0, 96], sizes = [4, 32], strides = [1, 1]} : vector<4x128xf32> to vector<4x32xf32>
    %115 = arith.mulf %106, %114 : vector<4x32xf32>
    %116 = arith.addf %113, %115 : vector<4x32xf32>
    %117 = math.tanh %116 : vector<4x32xf32>
    %cst_31 = arith.constant 1.000000e+00 : f32
    %118 = vector.broadcast %cst_31 : f32 to vector<4x32xf32>
    %119 = arith.subf %118, %112 : vector<4x32xf32>
    %120 = arith.mulf %119, %117 : vector<4x32xf32>
    %121 = arith.mulf %112, %66 : vector<4x32xf32>
    %122 = arith.addf %120, %121 : vector<4x32xf32>
    %cst_32 = arith.constant dense<0.000000e+00> : vector<4x16xf32>
    %123 = tpu.matmul %122, %6, %cst_32 {dimension_numbers = #tpu.dot_dimension_numbers<[1], [0], [0], [1], [0, 0, 1, 1], [], []>} : vector<4x32xf32>, vector<32x16xf32>, vector<4x16xf32> -> vector<4x16xf32>
    %124 = arith.addf %123, %15 : vector<4x16xf32>
    %125 = arith.truncf %95 : vector<4x32xf32> to vector<4x32xbf16>
    %cst_33 = arith.constant dense<0.000000e+00> : vector<4x96xf32>
    %126 = tpu.matmul %125, %3, %cst_33 {dimension_numbers = #tpu.dot_dimension_numbers<[1], [0], [0], [1], [0, 0, 1, 1], [], []>} : vector<4x32xbf16>, vector<32x96xbf16>, vector<4x96xf32> -> vector<4x96xf32>
    %127 = arith.addf %126, %9 : vector<4x96xf32>
    %128 = vector.extract_strided_slice %28 {offsets = [0, 0], sizes = [4, 32], strides = [1, 1]} : vector<4x96xf32> to vector<4x32xf32>
    %129 = vector.extract_strided_slice %127 {offsets = [0, 0], sizes = [4, 32], strides = [1, 1]} : vector<4x96xf32> to vector<4x32xf32>
    %130 = arith.addf %128, %129 : vector<4x32xf32>
    %131 = arith.negf %130 : vector<4x32xf32>
    %132 = math.exp %131 : vector<4x32xf32>
    %cst_34 = arith.constant 1.000000e+00 : f32
    %133 = vector.broadcast %cst_34 : f32 to vector<4x32xf32>
    %134 = arith.addf %133, %132 : vector<4x32xf32>
    %135 = arith.divf %133, %134 : vector<4x32xf32>
    %136 = vector.extract_strided_slice %28 {offsets = [0, 32], sizes = [4, 32], strides = [1, 1]} : vector<4x96xf32> to vector<4x32xf32>
    %137 = vector.extract_strided_slice %127 {offsets = [0, 32], sizes = [4, 32], strides = [1, 1]} : vector<4x96xf32> to vector<4x32xf32>
    %138 = arith.addf %136, %137 : vector<4x32xf32>
    %139 = arith.negf %138 : vector<4x32xf32>
    %140 = math.exp %139 : vector<4x32xf32>
    %cst_35 = arith.constant 1.000000e+00 : f32
    %141 = vector.broadcast %cst_35 : f32 to vector<4x32xf32>
    %142 = arith.addf %141, %140 : vector<4x32xf32>
    %143 = arith.divf %141, %142 : vector<4x32xf32>
    %144 = vector.extract_strided_slice %28 {offsets = [0, 64], sizes = [4, 32], strides = [1, 1]} : vector<4x96xf32> to vector<4x32xf32>
    %145 = vector.extract_strided_slice %127 {offsets = [0, 64], sizes = [4, 32], strides = [1, 1]} : vector<4x96xf32> to vector<4x32xf32>
    %146 = arith.mulf %135, %145 : vector<4x32xf32>
    %147 = arith.addf %144, %146 : vector<4x32xf32>
    %148 = math.tanh %147 : vector<4x32xf32>
    %cst_36 = arith.constant 1.000000e+00 : f32
    %149 = vector.broadcast %cst_36 : f32 to vector<4x32xf32>
    %150 = arith.subf %149, %143 : vector<4x32xf32>
    %151 = arith.mulf %150, %148 : vector<4x32xf32>
    %152 = arith.mulf %143, %95 : vector<4x32xf32>
    %153 = arith.addf %151, %152 : vector<4x32xf32>
    %154 = arith.truncf %153 : vector<4x32xf32> to vector<4x32xbf16>
    %155 = arith.truncf %122 : vector<4x32xf32> to vector<4x32xbf16>
    %156 = tpu.concatenate %154, %155 in 1 : vector<4x32xbf16>, vector<4x32xbf16> -> vector<4x64xbf16>
    %cst_37 = arith.constant dense<0.000000e+00> : vector<4x128xf32>
    %157 = tpu.matmul %156, %5, %cst_37 {dimension_numbers = #tpu.dot_dimension_numbers<[1], [0], [0], [1], [0, 0, 1, 1], [], []>} : vector<4x64xbf16>, vector<64x128xbf16>, vector<4x128xf32> -> vector<4x128xf32>
    %158 = arith.addf %157, %12 : vector<4x128xf32>
    %159 = vector.extract_strided_slice %158 {offsets = [0, 0], sizes = [4, 32], strides = [1, 1]} : vector<4x128xf32> to vector<4x32xf32>
    %160 = arith.negf %159 : vector<4x32xf32>
    %161 = math.exp %160 : vector<4x32xf32>
    %cst_38 = arith.constant 1.000000e+00 : f32
    %162 = vector.broadcast %cst_38 : f32 to vector<4x32xf32>
    %163 = arith.addf %162, %161 : vector<4x32xf32>
    %164 = arith.divf %162, %163 : vector<4x32xf32>
    %165 = vector.extract_strided_slice %158 {offsets = [0, 32], sizes = [4, 32], strides = [1, 1]} : vector<4x128xf32> to vector<4x32xf32>
    %166 = arith.negf %165 : vector<4x32xf32>
    %167 = math.exp %166 : vector<4x32xf32>
    %cst_39 = arith.constant 1.000000e+00 : f32
    %168 = vector.broadcast %cst_39 : f32 to vector<4x32xf32>
    %169 = arith.addf %168, %167 : vector<4x32xf32>
    %170 = arith.divf %168, %169 : vector<4x32xf32>
    %171 = vector.extract_strided_slice %158 {offsets = [0, 64], sizes = [4, 32], strides = [1, 1]} : vector<4x128xf32> to vector<4x32xf32>
    %172 = vector.extract_strided_slice %158 {offsets = [0, 96], sizes = [4, 32], strides = [1, 1]} : vector<4x128xf32> to vector<4x32xf32>
    %173 = arith.mulf %164, %172 : vector<4x32xf32>
    %174 = arith.addf %171, %173 : vector<4x32xf32>
    %175 = math.tanh %174 : vector<4x32xf32>
    %cst_40 = arith.constant 1.000000e+00 : f32
    %176 = vector.broadcast %cst_40 : f32 to vector<4x32xf32>
    %177 = arith.subf %176, %170 : vector<4x32xf32>
    %178 = arith.mulf %177, %175 : vector<4x32xf32>
    %179 = arith.mulf %170, %122 : vector<4x32xf32>
    %180 = arith.addf %178, %179 : vector<4x32xf32>
    %cst_41 = arith.constant dense<0.000000e+00> : vector<4x16xf32>
    %181 = tpu.matmul %180, %6, %cst_41 {dimension_numbers = #tpu.dot_dimension_numbers<[1], [0], [0], [1], [0, 0, 1, 1], [], []>} : vector<4x32xf32>, vector<32x16xf32>, vector<4x16xf32> -> vector<4x16xf32>
    %182 = arith.addf %181, %15 : vector<4x16xf32>
    %183 = arith.truncf %153 : vector<4x32xf32> to vector<4x32xbf16>
    %cst_42 = arith.constant dense<0.000000e+00> : vector<4x96xf32>
    %184 = tpu.matmul %183, %3, %cst_42 {dimension_numbers = #tpu.dot_dimension_numbers<[1], [0], [0], [1], [0, 0, 1, 1], [], []>} : vector<4x32xbf16>, vector<32x96xbf16>, vector<4x96xf32> -> vector<4x96xf32>
    %185 = arith.addf %184, %9 : vector<4x96xf32>
    %186 = vector.extract_strided_slice %34 {offsets = [0, 0], sizes = [4, 32], strides = [1, 1]} : vector<4x96xf32> to vector<4x32xf32>
    %187 = vector.extract_strided_slice %185 {offsets = [0, 0], sizes = [4, 32], strides = [1, 1]} : vector<4x96xf32> to vector<4x32xf32>
    %188 = arith.addf %186, %187 : vector<4x32xf32>
    %189 = arith.negf %188 : vector<4x32xf32>
    %190 = math.exp %189 : vector<4x32xf32>
    %cst_43 = arith.constant 1.000000e+00 : f32
    %191 = vector.broadcast %cst_43 : f32 to vector<4x32xf32>
    %192 = arith.addf %191, %190 : vector<4x32xf32>
    %193 = arith.divf %191, %192 : vector<4x32xf32>
    %194 = vector.extract_strided_slice %34 {offsets = [0, 32], sizes = [4, 32], strides = [1, 1]} : vector<4x96xf32> to vector<4x32xf32>
    %195 = vector.extract_strided_slice %185 {offsets = [0, 32], sizes = [4, 32], strides = [1, 1]} : vector<4x96xf32> to vector<4x32xf32>
    %196 = arith.addf %194, %195 : vector<4x32xf32>
    %197 = arith.negf %196 : vector<4x32xf32>
    %198 = math.exp %197 : vector<4x32xf32>
    %cst_44 = arith.constant 1.000000e+00 : f32
    %199 = vector.broadcast %cst_44 : f32 to vector<4x32xf32>
    %200 = arith.addf %199, %198 : vector<4x32xf32>
    %201 = arith.divf %199, %200 : vector<4x32xf32>
    %202 = vector.extract_strided_slice %34 {offsets = [0, 64], sizes = [4, 32], strides = [1, 1]} : vector<4x96xf32> to vector<4x32xf32>
    %203 = vector.extract_strided_slice %185 {offsets = [0, 64], sizes = [4, 32], strides = [1, 1]} : vector<4x96xf32> to vector<4x32xf32>
    %204 = arith.mulf %193, %203 : vector<4x32xf32>
    %205 = arith.addf %202, %204 : vector<4x32xf32>
    %206 = math.tanh %205 : vector<4x32xf32>
    %cst_45 = arith.constant 1.000000e+00 : f32
    %207 = vector.broadcast %cst_45 : f32 to vector<4x32xf32>
    %208 = arith.subf %207, %201 : vector<4x32xf32>
    %209 = arith.mulf %208, %206 : vector<4x32xf32>
    %210 = arith.mulf %201, %153 : vector<4x32xf32>
    %211 = arith.addf %209, %210 : vector<4x32xf32>
    %212 = arith.truncf %211 : vector<4x32xf32> to vector<4x32xbf16>
    %213 = arith.truncf %180 : vector<4x32xf32> to vector<4x32xbf16>
    %214 = tpu.concatenate %212, %213 in 1 : vector<4x32xbf16>, vector<4x32xbf16> -> vector<4x64xbf16>
    %cst_46 = arith.constant dense<0.000000e+00> : vector<4x128xf32>
    %215 = tpu.matmul %214, %5, %cst_46 {dimension_numbers = #tpu.dot_dimension_numbers<[1], [0], [0], [1], [0, 0, 1, 1], [], []>} : vector<4x64xbf16>, vector<64x128xbf16>, vector<4x128xf32> -> vector<4x128xf32>
    %216 = arith.addf %215, %12 : vector<4x128xf32>
    %217 = vector.extract_strided_slice %216 {offsets = [0, 0], sizes = [4, 32], strides = [1, 1]} : vector<4x128xf32> to vector<4x32xf32>
    %218 = arith.negf %217 : vector<4x32xf32>
    %219 = math.exp %218 : vector<4x32xf32>
    %cst_47 = arith.constant 1.000000e+00 : f32
    %220 = vector.broadcast %cst_47 : f32 to vector<4x32xf32>
    %221 = arith.addf %220, %219 : vector<4x32xf32>
    %222 = arith.divf %220, %221 : vector<4x32xf32>
    %223 = vector.extract_strided_slice %216 {offsets = [0, 32], sizes = [4, 32], strides = [1, 1]} : vector<4x128xf32> to vector<4x32xf32>
    %224 = arith.negf %223 : vector<4x32xf32>
    %225 = math.exp %224 : vector<4x32xf32>
    %cst_48 = arith.constant 1.000000e+00 : f32
    %226 = vector.broadcast %cst_48 : f32 to vector<4x32xf32>
    %227 = arith.addf %226, %225 : vector<4x32xf32>
    %228 = arith.divf %226, %227 : vector<4x32xf32>
    %229 = vector.extract_strided_slice %216 {offsets = [0, 64], sizes = [4, 32], strides = [1, 1]} : vector<4x128xf32> to vector<4x32xf32>
    %230 = vector.extract_strided_slice %216 {offsets = [0, 96], sizes = [4, 32], strides = [1, 1]} : vector<4x128xf32> to vector<4x32xf32>
    %231 = arith.mulf %222, %230 : vector<4x32xf32>
    %232 = arith.addf %229, %231 : vector<4x32xf32>
    %233 = math.tanh %232 : vector<4x32xf32>
    %cst_49 = arith.constant 1.000000e+00 : f32
    %234 = vector.broadcast %cst_49 : f32 to vector<4x32xf32>
    %235 = arith.subf %234, %228 : vector<4x32xf32>
    %236 = arith.mulf %235, %233 : vector<4x32xf32>
    %237 = arith.mulf %228, %180 : vector<4x32xf32>
    %238 = arith.addf %236, %237 : vector<4x32xf32>
    %cst_50 = arith.constant dense<0.000000e+00> : vector<4x16xf32>
    %239 = tpu.matmul %238, %6, %cst_50 {dimension_numbers = #tpu.dot_dimension_numbers<[1], [0], [0], [1], [0, 0, 1, 1], [], []>} : vector<4x32xf32>, vector<32x16xf32>, vector<4x16xf32> -> vector<4x16xf32>
    %240 = arith.addf %239, %15 : vector<4x16xf32>
    %241 = arith.truncf %211 : vector<4x32xf32> to vector<4x32xbf16>
    %cst_51 = arith.constant dense<0.000000e+00> : vector<4x96xf32>
    %242 = tpu.matmul %241, %3, %cst_51 {dimension_numbers = #tpu.dot_dimension_numbers<[1], [0], [0], [1], [0, 0, 1, 1], [], []>} : vector<4x32xbf16>, vector<32x96xbf16>, vector<4x96xf32> -> vector<4x96xf32>
    %243 = arith.addf %242, %9 : vector<4x96xf32>
    %244 = vector.extract_strided_slice %40 {offsets = [0, 0], sizes = [4, 32], strides = [1, 1]} : vector<4x96xf32> to vector<4x32xf32>
    %245 = vector.extract_strided_slice %243 {offsets = [0, 0], sizes = [4, 32], strides = [1, 1]} : vector<4x96xf32> to vector<4x32xf32>
    %246 = arith.addf %244, %245 : vector<4x32xf32>
    %247 = arith.negf %246 : vector<4x32xf32>
    %248 = math.exp %247 : vector<4x32xf32>
    %cst_52 = arith.constant 1.000000e+00 : f32
    %249 = vector.broadcast %cst_52 : f32 to vector<4x32xf32>
    %250 = arith.addf %249, %248 : vector<4x32xf32>
    %251 = arith.divf %249, %250 : vector<4x32xf32>
    %252 = vector.extract_strided_slice %40 {offsets = [0, 32], sizes = [4, 32], strides = [1, 1]} : vector<4x96xf32> to vector<4x32xf32>
    %253 = vector.extract_strided_slice %243 {offsets = [0, 32], sizes = [4, 32], strides = [1, 1]} : vector<4x96xf32> to vector<4x32xf32>
    %254 = arith.addf %252, %253 : vector<4x32xf32>
    %255 = arith.negf %254 : vector<4x32xf32>
    %256 = math.exp %255 : vector<4x32xf32>
    %cst_53 = arith.constant 1.000000e+00 : f32
    %257 = vector.broadcast %cst_53 : f32 to vector<4x32xf32>
    %258 = arith.addf %257, %256 : vector<4x32xf32>
    %259 = arith.divf %257, %258 : vector<4x32xf32>
    %260 = vector.extract_strided_slice %40 {offsets = [0, 64], sizes = [4, 32], strides = [1, 1]} : vector<4x96xf32> to vector<4x32xf32>
    %261 = vector.extract_strided_slice %243 {offsets = [0, 64], sizes = [4, 32], strides = [1, 1]} : vector<4x96xf32> to vector<4x32xf32>
    %262 = arith.mulf %251, %261 : vector<4x32xf32>
    %263 = arith.addf %260, %262 : vector<4x32xf32>
    %264 = math.tanh %263 : vector<4x32xf32>
    %cst_54 = arith.constant 1.000000e+00 : f32
    %265 = vector.broadcast %cst_54 : f32 to vector<4x32xf32>
    %266 = arith.subf %265, %259 : vector<4x32xf32>
    %267 = arith.mulf %266, %264 : vector<4x32xf32>
    %268 = arith.mulf %259, %211 : vector<4x32xf32>
    %269 = arith.addf %267, %268 : vector<4x32xf32>
    %270 = arith.truncf %269 : vector<4x32xf32> to vector<4x32xbf16>
    %271 = arith.truncf %238 : vector<4x32xf32> to vector<4x32xbf16>
    %272 = tpu.concatenate %270, %271 in 1 : vector<4x32xbf16>, vector<4x32xbf16> -> vector<4x64xbf16>
    %cst_55 = arith.constant dense<0.000000e+00> : vector<4x128xf32>
    %273 = tpu.matmul %272, %5, %cst_55 {dimension_numbers = #tpu.dot_dimension_numbers<[1], [0], [0], [1], [0, 0, 1, 1], [], []>} : vector<4x64xbf16>, vector<64x128xbf16>, vector<4x128xf32> -> vector<4x128xf32>
    %274 = arith.addf %273, %12 : vector<4x128xf32>
    %275 = vector.extract_strided_slice %274 {offsets = [0, 0], sizes = [4, 32], strides = [1, 1]} : vector<4x128xf32> to vector<4x32xf32>
    %276 = arith.negf %275 : vector<4x32xf32>
    %277 = math.exp %276 : vector<4x32xf32>
    %cst_56 = arith.constant 1.000000e+00 : f32
    %278 = vector.broadcast %cst_56 : f32 to vector<4x32xf32>
    %279 = arith.addf %278, %277 : vector<4x32xf32>
    %280 = arith.divf %278, %279 : vector<4x32xf32>
    %281 = vector.extract_strided_slice %274 {offsets = [0, 32], sizes = [4, 32], strides = [1, 1]} : vector<4x128xf32> to vector<4x32xf32>
    %282 = arith.negf %281 : vector<4x32xf32>
    %283 = math.exp %282 : vector<4x32xf32>
    %cst_57 = arith.constant 1.000000e+00 : f32
    %284 = vector.broadcast %cst_57 : f32 to vector<4x32xf32>
    %285 = arith.addf %284, %283 : vector<4x32xf32>
    %286 = arith.divf %284, %285 : vector<4x32xf32>
    %287 = vector.extract_strided_slice %274 {offsets = [0, 64], sizes = [4, 32], strides = [1, 1]} : vector<4x128xf32> to vector<4x32xf32>
    %288 = vector.extract_strided_slice %274 {offsets = [0, 96], sizes = [4, 32], strides = [1, 1]} : vector<4x128xf32> to vector<4x32xf32>
    %289 = arith.mulf %280, %288 : vector<4x32xf32>
    %290 = arith.addf %287, %289 : vector<4x32xf32>
    %291 = math.tanh %290 : vector<4x32xf32>
    %cst_58 = arith.constant 1.000000e+00 : f32
    %292 = vector.broadcast %cst_58 : f32 to vector<4x32xf32>
    %293 = arith.subf %292, %286 : vector<4x32xf32>
    %294 = arith.mulf %293, %291 : vector<4x32xf32>
    %295 = arith.mulf %286, %238 : vector<4x32xf32>
    %296 = arith.addf %294, %295 : vector<4x32xf32>
    %cst_59 = arith.constant dense<0.000000e+00> : vector<4x16xf32>
    %297 = tpu.matmul %296, %6, %cst_59 {dimension_numbers = #tpu.dot_dimension_numbers<[1], [0], [0], [1], [0, 0, 1, 1], [], []>} : vector<4x32xf32>, vector<32x16xf32>, vector<4x16xf32> -> vector<4x16xf32>
    %298 = arith.addf %297, %15 : vector<4x16xf32>
    %299 = arith.truncf %269 : vector<4x32xf32> to vector<4x32xbf16>
    %cst_60 = arith.constant dense<0.000000e+00> : vector<4x96xf32>
    %300 = tpu.matmul %299, %3, %cst_60 {dimension_numbers = #tpu.dot_dimension_numbers<[1], [0], [0], [1], [0, 0, 1, 1], [], []>} : vector<4x32xbf16>, vector<32x96xbf16>, vector<4x96xf32> -> vector<4x96xf32>
    %301 = arith.addf %300, %9 : vector<4x96xf32>
    %302 = vector.extract_strided_slice %46 {offsets = [0, 0], sizes = [4, 32], strides = [1, 1]} : vector<4x96xf32> to vector<4x32xf32>
    %303 = vector.extract_strided_slice %301 {offsets = [0, 0], sizes = [4, 32], strides = [1, 1]} : vector<4x96xf32> to vector<4x32xf32>
    %304 = arith.addf %302, %303 : vector<4x32xf32>
    %305 = arith.negf %304 : vector<4x32xf32>
    %306 = math.exp %305 : vector<4x32xf32>
    %cst_61 = arith.constant 1.000000e+00 : f32
    %307 = vector.broadcast %cst_61 : f32 to vector<4x32xf32>
    %308 = arith.addf %307, %306 : vector<4x32xf32>
    %309 = arith.divf %307, %308 : vector<4x32xf32>
    %310 = vector.extract_strided_slice %46 {offsets = [0, 32], sizes = [4, 32], strides = [1, 1]} : vector<4x96xf32> to vector<4x32xf32>
    %311 = vector.extract_strided_slice %301 {offsets = [0, 32], sizes = [4, 32], strides = [1, 1]} : vector<4x96xf32> to vector<4x32xf32>
    %312 = arith.addf %310, %311 : vector<4x32xf32>
    %313 = arith.negf %312 : vector<4x32xf32>
    %314 = math.exp %313 : vector<4x32xf32>
    %cst_62 = arith.constant 1.000000e+00 : f32
    %315 = vector.broadcast %cst_62 : f32 to vector<4x32xf32>
    %316 = arith.addf %315, %314 : vector<4x32xf32>
    %317 = arith.divf %315, %316 : vector<4x32xf32>
    %318 = vector.extract_strided_slice %46 {offsets = [0, 64], sizes = [4, 32], strides = [1, 1]} : vector<4x96xf32> to vector<4x32xf32>
    %319 = vector.extract_strided_slice %301 {offsets = [0, 64], sizes = [4, 32], strides = [1, 1]} : vector<4x96xf32> to vector<4x32xf32>
    %320 = arith.mulf %309, %319 : vector<4x32xf32>
    %321 = arith.addf %318, %320 : vector<4x32xf32>
    %322 = math.tanh %321 : vector<4x32xf32>
    %cst_63 = arith.constant 1.000000e+00 : f32
    %323 = vector.broadcast %cst_63 : f32 to vector<4x32xf32>
    %324 = arith.subf %323, %317 : vector<4x32xf32>
    %325 = arith.mulf %324, %322 : vector<4x32xf32>
    %326 = arith.mulf %317, %269 : vector<4x32xf32>
    %327 = arith.addf %325, %326 : vector<4x32xf32>
    %328 = arith.truncf %327 : vector<4x32xf32> to vector<4x32xbf16>
    %329 = arith.truncf %296 : vector<4x32xf32> to vector<4x32xbf16>
    %330 = tpu.concatenate %328, %329 in 1 : vector<4x32xbf16>, vector<4x32xbf16> -> vector<4x64xbf16>
    %cst_64 = arith.constant dense<0.000000e+00> : vector<4x128xf32>
    %331 = tpu.matmul %330, %5, %cst_64 {dimension_numbers = #tpu.dot_dimension_numbers<[1], [0], [0], [1], [0, 0, 1, 1], [], []>} : vector<4x64xbf16>, vector<64x128xbf16>, vector<4x128xf32> -> vector<4x128xf32>
    %332 = arith.addf %331, %12 : vector<4x128xf32>
    %333 = vector.extract_strided_slice %332 {offsets = [0, 0], sizes = [4, 32], strides = [1, 1]} : vector<4x128xf32> to vector<4x32xf32>
    %334 = arith.negf %333 : vector<4x32xf32>
    %335 = math.exp %334 : vector<4x32xf32>
    %cst_65 = arith.constant 1.000000e+00 : f32
    %336 = vector.broadcast %cst_65 : f32 to vector<4x32xf32>
    %337 = arith.addf %336, %335 : vector<4x32xf32>
    %338 = arith.divf %336, %337 : vector<4x32xf32>
    %339 = vector.extract_strided_slice %332 {offsets = [0, 32], sizes = [4, 32], strides = [1, 1]} : vector<4x128xf32> to vector<4x32xf32>
    %340 = arith.negf %339 : vector<4x32xf32>
    %341 = math.exp %340 : vector<4x32xf32>
    %cst_66 = arith.constant 1.000000e+00 : f32
    %342 = vector.broadcast %cst_66 : f32 to vector<4x32xf32>
    %343 = arith.addf %342, %341 : vector<4x32xf32>
    %344 = arith.divf %342, %343 : vector<4x32xf32>
    %345 = vector.extract_strided_slice %332 {offsets = [0, 64], sizes = [4, 32], strides = [1, 1]} : vector<4x128xf32> to vector<4x32xf32>
    %346 = vector.extract_strided_slice %332 {offsets = [0, 96], sizes = [4, 32], strides = [1, 1]} : vector<4x128xf32> to vector<4x32xf32>
    %347 = arith.mulf %338, %346 : vector<4x32xf32>
    %348 = arith.addf %345, %347 : vector<4x32xf32>
    %349 = math.tanh %348 : vector<4x32xf32>
    %cst_67 = arith.constant 1.000000e+00 : f32
    %350 = vector.broadcast %cst_67 : f32 to vector<4x32xf32>
    %351 = arith.subf %350, %344 : vector<4x32xf32>
    %352 = arith.mulf %351, %349 : vector<4x32xf32>
    %353 = arith.mulf %344, %296 : vector<4x32xf32>
    %354 = arith.addf %352, %353 : vector<4x32xf32>
    %cst_68 = arith.constant dense<0.000000e+00> : vector<4x16xf32>
    %355 = tpu.matmul %354, %6, %cst_68 {dimension_numbers = #tpu.dot_dimension_numbers<[1], [0], [0], [1], [0, 0, 1, 1], [], []>} : vector<4x32xf32>, vector<32x16xf32>, vector<4x16xf32> -> vector<4x16xf32>
    %356 = arith.addf %355, %15 : vector<4x16xf32>
    %357 = arith.truncf %327 : vector<4x32xf32> to vector<4x32xbf16>
    %cst_69 = arith.constant dense<0.000000e+00> : vector<4x96xf32>
    %358 = tpu.matmul %357, %3, %cst_69 {dimension_numbers = #tpu.dot_dimension_numbers<[1], [0], [0], [1], [0, 0, 1, 1], [], []>} : vector<4x32xbf16>, vector<32x96xbf16>, vector<4x96xf32> -> vector<4x96xf32>
    %359 = arith.addf %358, %9 : vector<4x96xf32>
    %360 = vector.extract_strided_slice %52 {offsets = [0, 0], sizes = [4, 32], strides = [1, 1]} : vector<4x96xf32> to vector<4x32xf32>
    %361 = vector.extract_strided_slice %359 {offsets = [0, 0], sizes = [4, 32], strides = [1, 1]} : vector<4x96xf32> to vector<4x32xf32>
    %362 = arith.addf %360, %361 : vector<4x32xf32>
    %363 = arith.negf %362 : vector<4x32xf32>
    %364 = math.exp %363 : vector<4x32xf32>
    %cst_70 = arith.constant 1.000000e+00 : f32
    %365 = vector.broadcast %cst_70 : f32 to vector<4x32xf32>
    %366 = arith.addf %365, %364 : vector<4x32xf32>
    %367 = arith.divf %365, %366 : vector<4x32xf32>
    %368 = vector.extract_strided_slice %52 {offsets = [0, 32], sizes = [4, 32], strides = [1, 1]} : vector<4x96xf32> to vector<4x32xf32>
    %369 = vector.extract_strided_slice %359 {offsets = [0, 32], sizes = [4, 32], strides = [1, 1]} : vector<4x96xf32> to vector<4x32xf32>
    %370 = arith.addf %368, %369 : vector<4x32xf32>
    %371 = arith.negf %370 : vector<4x32xf32>
    %372 = math.exp %371 : vector<4x32xf32>
    %cst_71 = arith.constant 1.000000e+00 : f32
    %373 = vector.broadcast %cst_71 : f32 to vector<4x32xf32>
    %374 = arith.addf %373, %372 : vector<4x32xf32>
    %375 = arith.divf %373, %374 : vector<4x32xf32>
    %376 = vector.extract_strided_slice %52 {offsets = [0, 64], sizes = [4, 32], strides = [1, 1]} : vector<4x96xf32> to vector<4x32xf32>
    %377 = vector.extract_strided_slice %359 {offsets = [0, 64], sizes = [4, 32], strides = [1, 1]} : vector<4x96xf32> to vector<4x32xf32>
    %378 = arith.mulf %367, %377 : vector<4x32xf32>
    %379 = arith.addf %376, %378 : vector<4x32xf32>
    %380 = math.tanh %379 : vector<4x32xf32>
    %cst_72 = arith.constant 1.000000e+00 : f32
    %381 = vector.broadcast %cst_72 : f32 to vector<4x32xf32>
    %382 = arith.subf %381, %375 : vector<4x32xf32>
    %383 = arith.mulf %382, %380 : vector<4x32xf32>
    %384 = arith.mulf %375, %327 : vector<4x32xf32>
    %385 = arith.addf %383, %384 : vector<4x32xf32>
    %386 = arith.truncf %385 : vector<4x32xf32> to vector<4x32xbf16>
    %387 = arith.truncf %354 : vector<4x32xf32> to vector<4x32xbf16>
    %388 = tpu.concatenate %386, %387 in 1 : vector<4x32xbf16>, vector<4x32xbf16> -> vector<4x64xbf16>
    %cst_73 = arith.constant dense<0.000000e+00> : vector<4x128xf32>
    %389 = tpu.matmul %388, %5, %cst_73 {dimension_numbers = #tpu.dot_dimension_numbers<[1], [0], [0], [1], [0, 0, 1, 1], [], []>} : vector<4x64xbf16>, vector<64x128xbf16>, vector<4x128xf32> -> vector<4x128xf32>
    %390 = arith.addf %389, %12 : vector<4x128xf32>
    %391 = vector.extract_strided_slice %390 {offsets = [0, 0], sizes = [4, 32], strides = [1, 1]} : vector<4x128xf32> to vector<4x32xf32>
    %392 = arith.negf %391 : vector<4x32xf32>
    %393 = math.exp %392 : vector<4x32xf32>
    %cst_74 = arith.constant 1.000000e+00 : f32
    %394 = vector.broadcast %cst_74 : f32 to vector<4x32xf32>
    %395 = arith.addf %394, %393 : vector<4x32xf32>
    %396 = arith.divf %394, %395 : vector<4x32xf32>
    %397 = vector.extract_strided_slice %390 {offsets = [0, 32], sizes = [4, 32], strides = [1, 1]} : vector<4x128xf32> to vector<4x32xf32>
    %398 = arith.negf %397 : vector<4x32xf32>
    %399 = math.exp %398 : vector<4x32xf32>
    %cst_75 = arith.constant 1.000000e+00 : f32
    %400 = vector.broadcast %cst_75 : f32 to vector<4x32xf32>
    %401 = arith.addf %400, %399 : vector<4x32xf32>
    %402 = arith.divf %400, %401 : vector<4x32xf32>
    %403 = vector.extract_strided_slice %390 {offsets = [0, 64], sizes = [4, 32], strides = [1, 1]} : vector<4x128xf32> to vector<4x32xf32>
    %404 = vector.extract_strided_slice %390 {offsets = [0, 96], sizes = [4, 32], strides = [1, 1]} : vector<4x128xf32> to vector<4x32xf32>
    %405 = arith.mulf %396, %404 : vector<4x32xf32>
    %406 = arith.addf %403, %405 : vector<4x32xf32>
    %407 = math.tanh %406 : vector<4x32xf32>
    %cst_76 = arith.constant 1.000000e+00 : f32
    %408 = vector.broadcast %cst_76 : f32 to vector<4x32xf32>
    %409 = arith.subf %408, %402 : vector<4x32xf32>
    %410 = arith.mulf %409, %407 : vector<4x32xf32>
    %411 = arith.mulf %402, %354 : vector<4x32xf32>
    %412 = arith.addf %410, %411 : vector<4x32xf32>
    %cst_77 = arith.constant dense<0.000000e+00> : vector<4x16xf32>
    %413 = tpu.matmul %412, %6, %cst_77 {dimension_numbers = #tpu.dot_dimension_numbers<[1], [0], [0], [1], [0, 0, 1, 1], [], []>} : vector<4x32xf32>, vector<32x16xf32>, vector<4x16xf32> -> vector<4x16xf32>
    %414 = arith.addf %413, %15 : vector<4x16xf32>
    %415 = arith.truncf %385 : vector<4x32xf32> to vector<4x32xbf16>
    %cst_78 = arith.constant dense<0.000000e+00> : vector<4x96xf32>
    %416 = tpu.matmul %415, %3, %cst_78 {dimension_numbers = #tpu.dot_dimension_numbers<[1], [0], [0], [1], [0, 0, 1, 1], [], []>} : vector<4x32xbf16>, vector<32x96xbf16>, vector<4x96xf32> -> vector<4x96xf32>
    %417 = arith.addf %416, %9 : vector<4x96xf32>
    %418 = vector.extract_strided_slice %58 {offsets = [0, 0], sizes = [4, 32], strides = [1, 1]} : vector<4x96xf32> to vector<4x32xf32>
    %419 = vector.extract_strided_slice %417 {offsets = [0, 0], sizes = [4, 32], strides = [1, 1]} : vector<4x96xf32> to vector<4x32xf32>
    %420 = arith.addf %418, %419 : vector<4x32xf32>
    %421 = arith.negf %420 : vector<4x32xf32>
    %422 = math.exp %421 : vector<4x32xf32>
    %cst_79 = arith.constant 1.000000e+00 : f32
    %423 = vector.broadcast %cst_79 : f32 to vector<4x32xf32>
    %424 = arith.addf %423, %422 : vector<4x32xf32>
    %425 = arith.divf %423, %424 : vector<4x32xf32>
    %426 = vector.extract_strided_slice %58 {offsets = [0, 32], sizes = [4, 32], strides = [1, 1]} : vector<4x96xf32> to vector<4x32xf32>
    %427 = vector.extract_strided_slice %417 {offsets = [0, 32], sizes = [4, 32], strides = [1, 1]} : vector<4x96xf32> to vector<4x32xf32>
    %428 = arith.addf %426, %427 : vector<4x32xf32>
    %429 = arith.negf %428 : vector<4x32xf32>
    %430 = math.exp %429 : vector<4x32xf32>
    %cst_80 = arith.constant 1.000000e+00 : f32
    %431 = vector.broadcast %cst_80 : f32 to vector<4x32xf32>
    %432 = arith.addf %431, %430 : vector<4x32xf32>
    %433 = arith.divf %431, %432 : vector<4x32xf32>
    %434 = vector.extract_strided_slice %58 {offsets = [0, 64], sizes = [4, 32], strides = [1, 1]} : vector<4x96xf32> to vector<4x32xf32>
    %435 = vector.extract_strided_slice %417 {offsets = [0, 64], sizes = [4, 32], strides = [1, 1]} : vector<4x96xf32> to vector<4x32xf32>
    %436 = arith.mulf %425, %435 : vector<4x32xf32>
    %437 = arith.addf %434, %436 : vector<4x32xf32>
    %438 = math.tanh %437 : vector<4x32xf32>
    %cst_81 = arith.constant 1.000000e+00 : f32
    %439 = vector.broadcast %cst_81 : f32 to vector<4x32xf32>
    %440 = arith.subf %439, %433 : vector<4x32xf32>
    %441 = arith.mulf %440, %438 : vector<4x32xf32>
    %442 = arith.mulf %433, %385 : vector<4x32xf32>
    %443 = arith.addf %441, %442 : vector<4x32xf32>
    %444 = arith.truncf %443 : vector<4x32xf32> to vector<4x32xbf16>
    %445 = arith.truncf %412 : vector<4x32xf32> to vector<4x32xbf16>
    %446 = tpu.concatenate %444, %445 in 1 : vector<4x32xbf16>, vector<4x32xbf16> -> vector<4x64xbf16>
    %cst_82 = arith.constant dense<0.000000e+00> : vector<4x128xf32>
    %447 = tpu.matmul %446, %5, %cst_82 {dimension_numbers = #tpu.dot_dimension_numbers<[1], [0], [0], [1], [0, 0, 1, 1], [], []>} : vector<4x64xbf16>, vector<64x128xbf16>, vector<4x128xf32> -> vector<4x128xf32>
    %448 = arith.addf %447, %12 : vector<4x128xf32>
    %449 = vector.extract_strided_slice %448 {offsets = [0, 0], sizes = [4, 32], strides = [1, 1]} : vector<4x128xf32> to vector<4x32xf32>
    %450 = arith.negf %449 : vector<4x32xf32>
    %451 = math.exp %450 : vector<4x32xf32>
    %cst_83 = arith.constant 1.000000e+00 : f32
    %452 = vector.broadcast %cst_83 : f32 to vector<4x32xf32>
    %453 = arith.addf %452, %451 : vector<4x32xf32>
    %454 = arith.divf %452, %453 : vector<4x32xf32>
    %455 = vector.extract_strided_slice %448 {offsets = [0, 32], sizes = [4, 32], strides = [1, 1]} : vector<4x128xf32> to vector<4x32xf32>
    %456 = arith.negf %455 : vector<4x32xf32>
    %457 = math.exp %456 : vector<4x32xf32>
    %cst_84 = arith.constant 1.000000e+00 : f32
    %458 = vector.broadcast %cst_84 : f32 to vector<4x32xf32>
    %459 = arith.addf %458, %457 : vector<4x32xf32>
    %460 = arith.divf %458, %459 : vector<4x32xf32>
    %461 = vector.extract_strided_slice %448 {offsets = [0, 64], sizes = [4, 32], strides = [1, 1]} : vector<4x128xf32> to vector<4x32xf32>
    %462 = vector.extract_strided_slice %448 {offsets = [0, 96], sizes = [4, 32], strides = [1, 1]} : vector<4x128xf32> to vector<4x32xf32>
    %463 = arith.mulf %454, %462 : vector<4x32xf32>
    %464 = arith.addf %461, %463 : vector<4x32xf32>
    %465 = math.tanh %464 : vector<4x32xf32>
    %cst_85 = arith.constant 1.000000e+00 : f32
    %466 = vector.broadcast %cst_85 : f32 to vector<4x32xf32>
    %467 = arith.subf %466, %460 : vector<4x32xf32>
    %468 = arith.mulf %467, %465 : vector<4x32xf32>
    %469 = arith.mulf %460, %412 : vector<4x32xf32>
    %470 = arith.addf %468, %469 : vector<4x32xf32>
    %cst_86 = arith.constant dense<0.000000e+00> : vector<4x16xf32>
    %471 = tpu.matmul %470, %6, %cst_86 {dimension_numbers = #tpu.dot_dimension_numbers<[1], [0], [0], [1], [0, 0, 1, 1], [], []>} : vector<4x32xf32>, vector<32x16xf32>, vector<4x16xf32> -> vector<4x16xf32>
    %472 = arith.addf %471, %15 : vector<4x16xf32>
    %473 = arith.truncf %443 : vector<4x32xf32> to vector<4x32xbf16>
    %cst_87 = arith.constant dense<0.000000e+00> : vector<4x96xf32>
    %474 = tpu.matmul %473, %3, %cst_87 {dimension_numbers = #tpu.dot_dimension_numbers<[1], [0], [0], [1], [0, 0, 1, 1], [], []>} : vector<4x32xbf16>, vector<32x96xbf16>, vector<4x96xf32> -> vector<4x96xf32>
    %475 = arith.addf %474, %9 : vector<4x96xf32>
    %476 = vector.extract_strided_slice %64 {offsets = [0, 0], sizes = [4, 32], strides = [1, 1]} : vector<4x96xf32> to vector<4x32xf32>
    %477 = vector.extract_strided_slice %475 {offsets = [0, 0], sizes = [4, 32], strides = [1, 1]} : vector<4x96xf32> to vector<4x32xf32>
    %478 = arith.addf %476, %477 : vector<4x32xf32>
    %479 = arith.negf %478 : vector<4x32xf32>
    %480 = math.exp %479 : vector<4x32xf32>
    %cst_88 = arith.constant 1.000000e+00 : f32
    %481 = vector.broadcast %cst_88 : f32 to vector<4x32xf32>
    %482 = arith.addf %481, %480 : vector<4x32xf32>
    %483 = arith.divf %481, %482 : vector<4x32xf32>
    %484 = vector.extract_strided_slice %64 {offsets = [0, 32], sizes = [4, 32], strides = [1, 1]} : vector<4x96xf32> to vector<4x32xf32>
    %485 = vector.extract_strided_slice %475 {offsets = [0, 32], sizes = [4, 32], strides = [1, 1]} : vector<4x96xf32> to vector<4x32xf32>
    %486 = arith.addf %484, %485 : vector<4x32xf32>
    %487 = arith.negf %486 : vector<4x32xf32>
    %488 = math.exp %487 : vector<4x32xf32>
    %cst_89 = arith.constant 1.000000e+00 : f32
    %489 = vector.broadcast %cst_89 : f32 to vector<4x32xf32>
    %490 = arith.addf %489, %488 : vector<4x32xf32>
    %491 = arith.divf %489, %490 : vector<4x32xf32>
    %492 = vector.extract_strided_slice %64 {offsets = [0, 64], sizes = [4, 32], strides = [1, 1]} : vector<4x96xf32> to vector<4x32xf32>
    %493 = vector.extract_strided_slice %475 {offsets = [0, 64], sizes = [4, 32], strides = [1, 1]} : vector<4x96xf32> to vector<4x32xf32>
    %494 = arith.mulf %483, %493 : vector<4x32xf32>
    %495 = arith.addf %492, %494 : vector<4x32xf32>
    %496 = math.tanh %495 : vector<4x32xf32>
    %cst_90 = arith.constant 1.000000e+00 : f32
    %497 = vector.broadcast %cst_90 : f32 to vector<4x32xf32>
    %498 = arith.subf %497, %491 : vector<4x32xf32>
    %499 = arith.mulf %498, %496 : vector<4x32xf32>
    %500 = arith.mulf %491, %443 : vector<4x32xf32>
    %501 = arith.addf %499, %500 : vector<4x32xf32>
    %502 = arith.truncf %501 : vector<4x32xf32> to vector<4x32xbf16>
    %503 = arith.truncf %470 : vector<4x32xf32> to vector<4x32xbf16>
    %504 = tpu.concatenate %502, %503 in 1 : vector<4x32xbf16>, vector<4x32xbf16> -> vector<4x64xbf16>
    %cst_91 = arith.constant dense<0.000000e+00> : vector<4x128xf32>
    %505 = tpu.matmul %504, %5, %cst_91 {dimension_numbers = #tpu.dot_dimension_numbers<[1], [0], [0], [1], [0, 0, 1, 1], [], []>} : vector<4x64xbf16>, vector<64x128xbf16>, vector<4x128xf32> -> vector<4x128xf32>
    %506 = arith.addf %505, %12 : vector<4x128xf32>
    %507 = vector.extract_strided_slice %506 {offsets = [0, 0], sizes = [4, 32], strides = [1, 1]} : vector<4x128xf32> to vector<4x32xf32>
    %508 = arith.negf %507 : vector<4x32xf32>
    %509 = math.exp %508 : vector<4x32xf32>
    %cst_92 = arith.constant 1.000000e+00 : f32
    %510 = vector.broadcast %cst_92 : f32 to vector<4x32xf32>
    %511 = arith.addf %510, %509 : vector<4x32xf32>
    %512 = arith.divf %510, %511 : vector<4x32xf32>
    %513 = vector.extract_strided_slice %506 {offsets = [0, 32], sizes = [4, 32], strides = [1, 1]} : vector<4x128xf32> to vector<4x32xf32>
    %514 = arith.negf %513 : vector<4x32xf32>
    %515 = math.exp %514 : vector<4x32xf32>
    %cst_93 = arith.constant 1.000000e+00 : f32
    %516 = vector.broadcast %cst_93 : f32 to vector<4x32xf32>
    %517 = arith.addf %516, %515 : vector<4x32xf32>
    %518 = arith.divf %516, %517 : vector<4x32xf32>
    %519 = vector.extract_strided_slice %506 {offsets = [0, 64], sizes = [4, 32], strides = [1, 1]} : vector<4x128xf32> to vector<4x32xf32>
    %520 = vector.extract_strided_slice %506 {offsets = [0, 96], sizes = [4, 32], strides = [1, 1]} : vector<4x128xf32> to vector<4x32xf32>
    %521 = arith.mulf %512, %520 : vector<4x32xf32>
    %522 = arith.addf %519, %521 : vector<4x32xf32>
    %523 = math.tanh %522 : vector<4x32xf32>
    %cst_94 = arith.constant 1.000000e+00 : f32
    %524 = vector.broadcast %cst_94 : f32 to vector<4x32xf32>
    %525 = arith.subf %524, %518 : vector<4x32xf32>
    %526 = arith.mulf %525, %523 : vector<4x32xf32>
    %527 = arith.mulf %518, %470 : vector<4x32xf32>
    %528 = arith.addf %526, %527 : vector<4x32xf32>
    %cst_95 = arith.constant dense<0.000000e+00> : vector<4x16xf32>
    %529 = tpu.matmul %528, %6, %cst_95 {dimension_numbers = #tpu.dot_dimension_numbers<[1], [0], [0], [1], [0, 0, 1, 1], [], []>} : vector<4x32xf32>, vector<32x16xf32>, vector<4x16xf32> -> vector<4x16xf32>
    %530 = arith.addf %529, %15 : vector<4x16xf32>
    %531 = tpu.concatenate %124, %182, %240, %298, %356, %414, %472, %530 in 1 : vector<4x16xf32>, vector<4x16xf32>, vector<4x16xf32>, vector<4x16xf32>, vector<4x16xf32>, vector<4x16xf32>, vector<4x16xf32>, vector<4x16xf32> -> vector<4x128xf32>
    %c0_96 = arith.constant 0 : index
    %c0_97 = arith.constant 0 : index
    %532 = vector.load %arg9[%c0_96, %c0_97] : memref<4x128xf32, #tpu.memory_space<vmem>>, vector<4x128xf32>
    tpu.vector_store %arg9[%c0_96, %c0_97], %531 {strides = array<i32>} : memref<4x128xf32, #tpu.memory_space<vmem>>, vector<4x128xf32>,
    %c0_98 = arith.constant 0 : index
    %c0_99 = arith.constant 0 : index
    %c0_100 = arith.constant 0 : index
    %533 = vector.load %arg10[%c0_98, %c0_99, %c0_100] : memref<2x4x32xf32, #tpu.memory_space<vmem>>, vector<1x4x32xf32>
    %534 = vector.shape_cast %533 : vector<1x4x32xf32> to vector<4x32xf32>
    %535 = vector.shape_cast %501 : vector<4x32xf32> to vector<1x4x32xf32>
    tpu.vector_store %arg10[%c0_98, %c0_99, %c0_100], %535 {strides = array<i32>} : memref<2x4x32xf32, #tpu.memory_space<vmem>>, vector<1x4x32xf32>,
    %c1 = arith.constant 1 : index
    %c0_101 = arith.constant 0 : index
    %c0_102 = arith.constant 0 : index
    %536 = vector.load %arg10[%c1, %c0_101, %c0_102] : memref<2x4x32xf32, #tpu.memory_space<vmem>>, vector<1x4x32xf32>
    %537 = vector.shape_cast %536 : vector<1x4x32xf32> to vector<4x32xf32>
    %538 = vector.shape_cast %528 : vector<4x32xf32> to vector<1x4x32xf32>
    tpu.vector_store %arg10[%c1, %c0_101, %c0_102], %538 {strides = array<i32>} : memref<2x4x32xf32, #tpu.memory_space<vmem>>, vector<1x4x32xf32>,
    return
  }
  func.func @transform_0(%arg0: i32) -> (i32, i32) {
    %c0_i32 = arith.constant 0 : i32
    %c0_i32_0 = arith.constant 0 : i32
    %c0_i32_1 = arith.constant 0 : i32
    return %c0_i32, %c0_i32_0 : i32, i32
  }
  func.func @transform_1(%arg0: i32) -> (i32, i32) {
    %c0_i32 = arith.constant 0 : i32
    %c0_i32_0 = arith.constant 0 : i32
    %c0_i32_1 = arith.constant 0 : i32
    return %c0_i32, %c0_i32_0 : i32, i32
  }
  func.func @transform_2(%arg0: i32) -> (i32, i32) {
    %c0_i32 = arith.constant 0 : i32
    %c0_i32_0 = arith.constant 0 : i32
    %c0_i32_1 = arith.constant 0 : i32
    return %c0_i32, %c0_i32_0 : i32, i32
  }
  func.func @transform_3(%arg0: i32) -> (i32, i32) {
    %c0_i32 = arith.constant 0 : i32
    %c0_i32_0 = arith.constant 0 : i32
    %c0_i32_1 = arith.constant 0 : i32
    return %c0_i32, %c0_i32_0 : i32, i32
  }
  func.func @transform_4(%arg0: i32) -> (i32, i32) {
    %c0_i32 = arith.constant 0 : i32
    %c0_i32_0 = arith.constant 0 : i32
    %c0_i32_1 = arith.constant 0 : i32
    return %c0_i32, %c0_i32_0 : i32, i32
  }
  func.func @transform_5(%arg0: i32) -> (i32, i32) {
    %c0_i32 = arith.constant 0 : i32
    %c0_i32_0 = arith.constant 0 : i32
    %c0_i32_1 = arith.constant 0 : i32
    return %c0_i32, %c0_i32_0 : i32, i32
  }
  func.func @transform_6(%arg0: i32) -> (i32, i32) {
    %c0_i32 = arith.constant 0 : i32
    %c0_i32_0 = arith.constant 0 : i32
    %c0_i32_1 = arith.constant 0 : i32
    return %c0_i32, %c0_i32_0 : i32, i32
  }
  func.func @transform_7(%arg0: i32) -> (i32, i32) {
    %c0_i32 = arith.constant 0 : i32
    %c0_i32_0 = arith.constant 0 : i32
    %c0_i32_1 = arith.constant 0 : i32
    return %c0_i32, %c0_i32_0 : i32, i32
  }
  func.func @transform_8(%arg0: i32) -> (i32, i32) {
    %c0_i32 = arith.constant 0 : i32
    %c0_i32_0 = arith.constant 0 : i32
    %c0_i32_1 = arith.constant 0 : i32
    return %c0_i32, %c0_i32_0 : i32, i32
  }
  func.func @transform_9(%arg0: i32) -> (i32, i32, i32) {
    %c0_i32 = arith.constant 0 : i32
    %c0_i32_0 = arith.constant 0 : i32
    %c0_i32_1 = arith.constant 0 : i32
    %c0_i32_2 = arith.constant 0 : i32
    return %c0_i32, %c0_i32_0, %c0_i32_1 : i32, i32, i32
  }
}

</mosaic_0001>

<llo_original>
// kernel: rnn_forward.1
$region0: #{rnn_forward.1}
  #allocation0 [shape = 'u32[]', space=smem, size = 0x4, offset = 0x4, fixed_abs, tag = 'smem constant byte address 0x4 - core index']
  #allocation1 [shape = 'u32[144,128]{1,0:T(1,128)}', space=vmem, size = 0x12000, scoped, tag = 'internal scratch']
  %s0 = inlined_call_operand.vmem [shape: s32[4,8], index: 0, kind: input, shape index: {}]
  %s1 = inlined_call_operand.vmem [shape: f32[16,96], index: 1, kind: input, shape index: {}]
  %s2 = inlined_call_operand.vmem [shape: f32[32,96], index: 2, kind: input, shape index: {}]
  %s3 = inlined_call_operand.vmem [shape: f32[1,96], index: 3, kind: input, shape index: {}]
  %s4 = inlined_call_operand.hbm [shape: f32[64,128], index: 4, kind: input, shape index: {}]
  %s5 = inlined_call_operand.vmem [shape: f32[1,128], index: 5, kind: input, shape index: {}]
  %s6 = inlined_call_operand.vmem [shape: f32[32,16], index: 6, kind: input, shape index: {}]
  %s7 = inlined_call_operand.hbm [shape: f32[1,16], index: 7, kind: input, shape index: {}]
  %s8 = inlined_call_operand.vmem [shape: f32[4,128], index: 8, kind: output, shape index: {0}]
  %s9 = inlined_call_operand.hbm [shape: f32[2,4,32], index: 9, kind: output, shape index: {1}]
  %10 = xla_tuple %s8, %s9
  %s11 = sld [smem:[#allocation0]]
  $region58: #{rnn_forward.1} parent=0
    _
  %s13 = ssub.s32 1, %s11
  %s14 = scalar_select 0, %s13, %s11
  $region1: #{rnn_forward.1} parent=0
    #allocation2 [shape = 'u8[32768]{0}', space=vmem, size = 0x8000, scoped, tag = 'input window, operand 4, single buffered']
    #allocation3 [shape = 's32[1]{0}', space=sflag, size = 0x4, scoped, tag = 'scoped memory for rnn_forward.1']
    #allocation4 [shape = 's32[1]{0}', space=sflag, size = 0x4, scoped, tag = 'scoped memory for rnn_forward.1']
    #allocation5 [shape = 'u8[512]{0}', space=vmem, size = 0x400, scoped, tag = 'input window, operand 7, single buffered']
    #allocation6 [shape = 's32[1]{0}', space=sflag, size = 0x4, scoped, tag = 'scoped memory for rnn_forward.1']
    #allocation7 [shape = 'u8[4096]{0}', space=vmem, size = 0x1000, scoped, tag = 'output window, operand 1, single buffered']
    %15 = vsyncpa [#allocation3], 0
    %16 = vsyncpa [#allocation6], 0
    %17 = vsyncpa [#allocation4], 0
    // Predicated region
    $region2: #{rnn_forward.1} parent=1 // pred_check
      _
    $region3: #{rnn_forward.1} parent=1 // pred_check_branch
      %19 = sbr.rel (0) target = $region5
    $region4: #{rnn_forward.1} parent=1 // pred_region
      _
    $region5: #{rnn_forward.1} parent=1 // pred_fallthru
      _
    // Predicated region
    $region6: #{rnn_forward.1} parent=1 // pred_check
      _
    $region7: #{rnn_forward.1} parent=1 // pred_check_branch
      %21 = sbr.rel (0) target = $region9
    $region8: #{rnn_forward.1} parent=1 // pred_region
      _
    $region9: #{rnn_forward.1} parent=1 // pred_fallthru
      _
    // Predicated region
    $region10: #{rnn_forward.1} parent=1 // pred_check
      _
    $region11: #{rnn_forward.1} parent=1 // pred_check_branch
      %23 = sbr.rel (0) target = $region13
    $region12: #{rnn_forward.1} parent=1 // pred_region
      _
    $region13: #{rnn_forward.1} parent=1 // pred_fallthru
      _
    // Predicated region
    $region14: #{rnn_forward.1} parent=1 // pred_check
      _
    $region15: #{rnn_forward.1} parent=1 // pred_check_branch
      %25 = sbr.rel (0) target = $region17
    $region16: #{rnn_forward.1} parent=1 // pred_region
      _
    $region17: #{rnn_forward.1} parent=1 // pred_fallthru
      _
    // Predicated region
    $region18: #{rnn_forward.1} parent=1 // pred_check
      _
    $region19: #{rnn_forward.1} parent=1 // pred_check_branch
      %27 = sbr.rel (0) target = $region21
    $region20: #{rnn_forward.1} parent=1 // pred_region
      %s29 = ssub.s32 1024, 1024
      %30 = vsyncadd [#allocation3], %s29
      %s31 = sshll.u32 [#allocation2], 4
      %s32 = int_to_ptr.vmem [resolvable:$true] %s31
      %37 = dma.hbm_to_vmem [thread:$0]  %s4, 1024, %s32, [#allocation3], 128, 128, 8
    $region21: #{rnn_forward.1} parent=1 // pred_fallthru
      _
    // Predicated region
    $region22: #{rnn_forward.1} parent=1 // pred_check
      _
    $region23: #{rnn_forward.1} parent=1 // pred_check_branch
      %39 = sbr.rel (0) target = $region25
    $region24: #{rnn_forward.1} parent=1 // pred_region
      _
    $region25: #{rnn_forward.1} parent=1 // pred_fallthru
      _
    // Predicated region
    $region26: #{rnn_forward.1} parent=1 // pred_check
      _
    $region27: #{rnn_forward.1} parent=1 // pred_check_branch
      %41 = sbr.rel (0) target = $region29
    $region28: #{rnn_forward.1} parent=1 // pred_region
      _
    $region29: #{rnn_forward.1} parent=1 // pred_fallthru
      _
    // Predicated region
    $region30: #{rnn_forward.1} parent=1 // pred_check
      _
    $region31: #{rnn_forward.1} parent=1 // pred_check_branch
      %43 = sbr.rel (0) target = $region33
    $region32: #{rnn_forward.1} parent=1 // pred_region
      %s45 = ssub.s32 16, 16
      %46 = vsyncadd [#allocation6], %s45
      %s48 = sshll.u32 [#allocation5], 4
      %s49 = int_to_ptr.vmem [resolvable:$true] %s48
      %51 = dma.hbm_to_vmem [thread:$0]  %s7, 16, %s49, [#allocation6]
    $region33: #{rnn_forward.1} parent=1 // pred_fallthru
      _
    // Predicated region
    $region34: #{rnn_forward.1} parent=1 // pred_check
      _
    $region35: #{rnn_forward.1} parent=1 // pred_check_branch
      %53 = sbr.rel (0) target = $region37
    $region36: #{rnn_forward.1} parent=1 // pred_region
      %54 = dma.done [#allocation3], 1024
    $region37: #{rnn_forward.1} parent=1 // pred_fallthru
      _
    // Predicated region
    $region38: #{rnn_forward.1} parent=1 // pred_check
      _
    $region39: #{rnn_forward.1} parent=1 // pred_check_branch
      %56 = sbr.rel (0) target = $region41
    $region40: #{rnn_forward.1} parent=1 // pred_region
      %57 = dma.done [#allocation6], 16
    $region41: #{rnn_forward.1} parent=1 // pred_fallthru
      _
    %v59 = vld [vmem:[%s0] sm:$0xf]
    %v60 = vld [vmem:[%s1] sm:$0xff]
    %v61 = vld [vmem:[%s1 + $0x8] sm:$0xff]
    %v62 = vld [vmem:[%s2] sm:$0xff]
    %v63 = vld [vmem:[%s2 + $0x8] sm:$0xff]
    %v64 = vld [vmem:[%s2 + $0x10] sm:$0xff]
    %v65 = vld [vmem:[%s2 + $0x18] sm:$0xff]
    %v66 = vpack.c.bf16 %v63, %v62
    %v67 = vpack.c.bf16 %v65, %v64
    %v68 = vld [vmem:[#allocation2] sm:$0xff]
    %v69 = vld [vmem:[#allocation2 + $0x8] sm:$0xff]
    %v70 = vld [vmem:[#allocation2 + $0x10] sm:$0xff]
    %v71 = vld [vmem:[#allocation2 + $0x18] sm:$0xff]
    %v72 = vld [vmem:[#allocation2 + $0x20] sm:$0xff]
    %v73 = vld [vmem:[#allocation2 + $0x28] sm:$0xff]
    %v74 = vld [vmem:[#allocation2 + $0x30] sm:$0xff]
    %v75 = vld [vmem:[#allocation2 + $0x38] sm:$0xff]
    %v76 = vpack.c.bf16 %v69, %v68
    %v77 = vpack.c.bf16 %v71, %v70
    %v78 = vpack.c.bf16 %v73, %v72
    %v79 = vpack.c.bf16 %v75, %v74
    %v80 = vld [vmem:[%s6] sm:$0xff]
    %v81 = vld [vmem:[%s6 + $0x8] sm:$0xff]
    %v82 = vld [vmem:[%s6 + $0x10] sm:$0xff]
    %v83 = vld [vmem:[%s6 + $0x18] sm:$0xff]
    %v84 = vld [vmem:[%s3] sm:$0x1]
    %v86 = vlaneseq
    %v87 = vshrl.u32 %v86, 7
    %v88 = vsub.s32 0, %v87
    %v89 = vrot.slane %v84, %v88
    %v91 = vld [vmem:[%s5] sm:$0x1]
    %v93 = vlaneseq
    %v94 = vshrl.u32 %v93, 7
    %v95 = vsub.s32 0, %v94
    %v96 = vrot.slane %v91, %v95
    %v98 = vld [vmem:[#allocation5] sm:$0x1]
    %v100 = vlaneseq
    %v101 = vshrl.u32 %v100, 7
    %v102 = vsub.s32 0, %v101
    %v103 = vrot.slane %v98, %v102
    %v105 = vlaneseq
    %v106 = vand.u32 %v105, 127
    %107 = vset.pattern.permute.xlu0 0
    %108 = vperm.xlu0 %107, %v59
    %v109 = vpop.permute.xlu0 %108
    %vm110 = vcmp.eq.s32.totalorder %v109, %v106
    %v111 = vsel %vm110, 1, 0
    %v112 = vcvt.s32.f32 %v111
    %vm113 = vcmask 130048
    %v115 = vsel %vm113, %v112, 0
    %117 = vmatprep.subr.mxu0 0.0
    %118 = vmatpush1.msra.mxu0 %v60
    %119 = vmatprep.subr.mxu0 0.0
    %120 = vmatpush1.msra.mxu0 %v61
    %121 = vmatprep.subr.mxu0 0.0
    %122 = vmatpush1.msra.mxu0 0.0
    %123 = vmatprep.subr.mxu0 0.0
    %124 = vmatpush1.msra.mxu0 0.0
    %125 = vmatprep.subr.mxu0 0.0
    %126 = vmatpush1.msra.mxu0 0.0
    %127 = vmatprep.subr.mxu0 0.0
    %128 = vmatpush1.msra.mxu0 0.0
    %129 = vmatprep.subr.mxu0 0.0
    %130 = vmatpush1.msra.mxu0 0.0
    %131 = vmatprep.subr.mxu0 0.0
    %132 = vmatpush1.msra.mxu0 0.0
    %133 = vmatprep.subr.mxu0 0.0
    %134 = vmatpush1.msra.mxu0 0.0
    %135 = vmatprep.subr.mxu0 0.0
    %136 = vmatpush1.msra.mxu0 0.0
    %137 = vmatprep.subr.mxu0 0.0
    %138 = vmatpush1.msra.mxu0 0.0
    %139 = vmatprep.subr.mxu0 0.0
    %140 = vmatpush1.msra.mxu0 0.0
    %141 = vmatprep.subr.mxu0 0.0
    %142 = vmatpush1.msra.mxu0 0.0
    %143 = vmatprep.subr.mxu0 0.0
    %144 = vmatpush1.msra.mxu0 0.0
    %145 = vmatprep.subr.mxu0 0.0
    %146 = vmatpush1.msra.mxu0 0.0
    %147 = vmatprep.subr.mxu0 0.0
    %148 = vmatpush1.msra.mxu0 0.0
    %149 = vmatprep.subr.mxu0 0.0
    %150 = vmatpush1.msra.mxu0 0.0
    %151 = vmatprep.subr.mxu0 0.0
    %152 = vmatpush1.msra.mxu0 0.0
    %153 = vmatprep.subr.mxu0 0.0
    %154 = vmatpush1.msra.mxu0 0.0
    %155 = vmatprep.subr.mxu0 0.0
    %156 = vmatpush1.msra.mxu0 0.0
    %157 = vmatprep.subr.mxu0 0.0
    %158 = vmatpush1.msra.mxu0 0.0
    %159 = vmatprep.subr.mxu0 0.0
    %160 = vmatpush1.msra.mxu0 0.0
    %161 = vmatprep.subr.mxu0 0.0
    %162 = vmatpush1.msra.mxu0 0.0
    %163 = vmatprep.subr.mxu0 0.0
    %164 = vmatpush1.msra.mxu0 0.0
    %165 = vmatprep.subr.mxu0 0.0
    %166 = vmatpush1.msra.mxu0 0.0
    %167 = vmatprep.subr.mxu0 0.0
    %168 = vmatpush1.msra.mxu0 0.0
    %169 = vmatprep.subr.mxu0 0.0
    %170 = vmatpush1.msra.mxu0 0.0
    %171 = vmatprep.subr.mxu0 0.0
    %172 = vmatpush1.msra.mxu0 0.0
    %173 = vmatprep.subr.mxu0 0.0
    %174 = vmatpush1.msra.mxu0 0.0
    %175 = vmatprep.subr.mxu0 0.0
    %176 = vmatpush1.msra.mxu0 0.0
    %177 = vmatprep.subr.mxu0 0.0
    %178 = vmatpush1.msra.mxu0 0.0
    %179 = vmatprep.subr.mxu0 0.0
    %180 = vmatpush1.msra.mxu0 0.0
    %181 = vmatprep.mubr.f32.mxu0 0.0
    %182 = vmatmul.mubr.f32.gmra.mrb[0].mxu0 %v115
    %v183 = vpop.f32.mrb[0].mxu0
    %v184 = vadd.f32 0.0, %v183
    %v185 = vpop.f32.mrb[0].mxu0
    %186 = vdwg.mxu0
    %187 = vset.pattern.permute.xlu0 1
    %188 = vperm.xlu0 %187, %v59
    %v189 = vpop.permute.xlu0 %188
    %vm190 = vcmp.eq.s32.totalorder %v189, %v106
    %v191 = vsel %vm190, 1, 0
    %v192 = vcvt.s32.f32 %v191
    %v194 = vsel %vm113, %v192, 0
    %196 = vmatprep.subr.mxu0 0.0
    %197 = vmatpush1.msra.mxu0 %v60
    %198 = vmatprep.subr.mxu0 0.0
    %199 = vmatpush1.msra.mxu0 %v61
    %200 = vmatprep.subr.mxu0 0.0
    %201 = vmatpush1.msra.mxu0 0.0
    %202 = vmatprep.subr.mxu0 0.0
    %203 = vmatpush1.msra.mxu0 0.0
    %204 = vmatprep.subr.mxu0 0.0
    %205 = vmatpush1.msra.mxu0 0.0
    %206 = vmatprep.subr.mxu0 0.0
    %207 = vmatpush1.msra.mxu0 0.0
    %208 = vmatprep.subr.mxu0 0.0
    %209 = vmatpush1.msra.mxu0 0.0
    %210 = vmatprep.subr.mxu0 0.0
    %211 = vmatpush1.msra.mxu0 0.0
    %212 = vmatprep.subr.mxu0 0.0
    %213 = vmatpush1.msra.mxu0 0.0
    %214 = vmatprep.subr.mxu0 0.0
    %215 = vmatpush1.msra.mxu0 0.0
    %216 = vmatprep.subr.mxu0 0.0
    %217 = vmatpush1.msra.mxu0 0.0
    %218 = vmatprep.subr.mxu0 0.0
    %219 = vmatpush1.msra.mxu0 0.0
    %220 = vmatprep.subr.mxu0 0.0
    %221 = vmatpush1.msra.mxu0 0.0
    %222 = vmatprep.subr.mxu0 0.0
    %223 = vmatpush1.msra.mxu0 0.0
    %224 = vmatprep.subr.mxu0 0.0
    %225 = vmatpush1.msra.mxu0 0.0
    %226 = vmatprep.subr.mxu0 0.0
    %227 = vmatpush1.msra.mxu0 0.0
    %228 = vmatprep.subr.mxu0 0.0
    %229 = vmatpush1.msra.mxu0 0.0
    %230 = vmatprep.subr.mxu0 0.0
    %231 = vmatpush1.msra.mxu0 0.0
    %232 = vmatprep.subr.mxu0 0.0
    %233 = vmatpush1.msra.mxu0 0.0
    %234 = vmatprep.subr.mxu0 0.0
    %235 = vmatpush1.msra.mxu0 0.0
    %236 = vmatprep.subr.mxu0 0.0
    %237 = vmatpush1.msra.mxu0 0.0
    %238 = vmatprep.subr.mxu0 0.0
    %239 = vmatpush1.msra.mxu0 0.0
    %240 = vmatprep.subr.mxu0 0.0
    %241 = vmatpush1.msra.mxu0 0.0
    %242 = vmatprep.subr.mxu0 0.0
    %243 = vmatpush1.msra.mxu0 0.0
    %244 = vmatprep.subr.mxu0 0.0
    %245 = vmatpush1.msra.mxu0 0.0
    %246 = vmatprep.subr.mxu0 0.0
    %247 = vmatpush1.msra.mxu0 0.0
    %248 = vmatprep.subr.mxu0 0.0
    %249 = vmatpush1.msra.mxu0 0.0
    %250 = vmatprep.subr.mxu0 0.0
    %251 = vmatpush1.msra.mxu0 0.0
    %252 = vmatprep.subr.mxu0 0.0
    %253 = vmatpush1.msra.mxu0 0.0
    %254 = vmatprep.subr.mxu0 0.0
    %255 = vmatpush1.msra.mxu0 0.0
    %256 = vmatprep.subr.mxu0 0.0
    %257 = vmatpush1.msra.mxu0 0.0
    %258 = vmatprep.subr.mxu0 0.0
    %259 = vmatpush1.msra.mxu0 0.0
    %260 = vmatprep.mubr.f32.mxu0 0.0
    %261 = vmatmul.mubr.f32.gmra.mrb[0].mxu0 %v194
    %v262 = vpop.f32.mrb[0].mxu0
    %v263 = vadd.f32 0.0, %v262
    %v264 = vpop.f32.mrb[0].mxu0
    %265 = vdwg.mxu0
    %266 = vset.pattern.permute.xlu0 2
    %267 = vperm.xlu0 %266, %v59
    %v268 = vpop.permute.xlu0 %267
    %vm269 = vcmp.eq.s32.totalorder %v268, %v106
    %v270 = vsel %vm269, 1, 0
    %v271 = vcvt.s32.f32 %v270
    %v273 = vsel %vm113, %v271, 0
    %275 = vmatprep.subr.mxu0 0.0
    %276 = vmatpush1.msra.mxu0 %v60
    %277 = vmatprep.subr.mxu0 0.0
    %278 = vmatpush1.msra.mxu0 %v61
    %279 = vmatprep.subr.mxu0 0.0
    %280 = vmatpush1.msra.mxu0 0.0
    %281 = vmatprep.subr.mxu0 0.0
    %282 = vmatpush1.msra.mxu0 0.0
    %283 = vmatprep.subr.mxu0 0.0
    %284 = vmatpush1.msra.mxu0 0.0
    %285 = vmatprep.subr.mxu0 0.0
    %286 = vmatpush1.msra.mxu0 0.0
    %287 = vmatprep.subr.mxu0 0.0
    %288 = vmatpush1.msra.mxu0 0.0
    %289 = vmatprep.subr.mxu0 0.0
    %290 = vmatpush1.msra.mxu0 0.0
    %291 = vmatprep.subr.mxu0 0.0
    %292 = vmatpush1.msra.mxu0 0.0
    %293 = vmatprep.subr.mxu0 0.0
    %294 = vmatpush1.msra.mxu0 0.0
    %295 = vmatprep.subr.mxu0 0.0
    %296 = vmatpush1.msra.mxu0 0.0
    %297 = vmatprep.subr.mxu0 0.0
    %298 = vmatpush1.msra.mxu0 0.0
    %299 = vmatprep.subr.mxu0 0.0
    %300 = vmatpush1.msra.mxu0 0.0
    %301 = vmatprep.subr.mxu0 0.0
    %302 = vmatpush1.msra.mxu0 0.0
    %303 = vmatprep.subr.mxu0 0.0
    %304 = vmatpush1.msra.mxu0 0.0
    %305 = vmatprep.subr.mxu0 0.0
    %306 = vmatpush1.msra.mxu0 0.0
    %307 = vmatprep.subr.mxu0 0.0
    %308 = vmatpush1.msra.mxu0 0.0
    %309 = vmatprep.subr.mxu0 0.0
    %310 = vmatpush1.msra.mxu0 0.0
    %311 = vmatprep.subr.mxu0 0.0
    %312 = vmatpush1.msra.mxu0 0.0
    %313 = vmatprep.subr.mxu0 0.0
    %314 = vmatpush1.msra.mxu0 0.0
    %315 = vmatprep.subr.mxu0 0.0
    %316 = vmatpush1.msra.mxu0 0.0
    %317 = vmatprep.subr.mxu0 0.0
    %318 = vmatpush1.msra.mxu0 0.0
    %319 = vmatprep.subr.mxu0 0.0
    %320 = vmatpush1.msra.mxu0 0.0
    %321 = vmatprep.subr.mxu0 0.0
    %322 = vmatpush1.msra.mxu0 0.0
    %323 = vmatprep.subr.mxu0 0.0
    %324 = vmatpush1.msra.mxu0 0.0
    %325 = vmatprep.subr.mxu0 0.0
    %326 = vmatpush1.msra.mxu0 0.0
    %327 = vmatprep.subr.mxu0 0.0
    %328 = vmatpush1.msra.mxu0 0.0
    %329 = vmatprep.subr.mxu0 0.0
    %330 = vmatpush1.msra.mxu0 0.0
    %331 = vmatprep.subr.mxu0 0.0
    %332 = vmatpush1.msra.mxu0 0.0
    %333 = vmatprep.subr.mxu0 0.0
    %334 = vmatpush1.msra.mxu0 0.0
    %335 = vmatprep.subr.mxu0 0.0
    %336 = vmatpush1.msra.mxu0 0.0
    %337 = vmatprep.subr.mxu0 0.0
    %338 = vmatpush1.msra.mxu0 0.0
    %339 = vmatprep.mubr.f32.mxu0 0.0
    %340 = vmatmul.mubr.f32.gmra.mrb[0].mxu0 %v273
    %v341 = vpop.f32.mrb[0].mxu0
    %v342 = vadd.f32 0.0, %v341
    %v343 = vpop.f32.mrb[0].mxu0
    %344 = vdwg.mxu0
    %345 = vset.pattern.permute.xlu0 3
    %346 = vperm.xlu0 %345, %v59
    %v347 = vpop.permute.xlu0 %346
    %vm348 = vcmp.eq.s32.totalorder %v347, %v106
    %v349 = vsel %vm348, 1, 0
    %v350 = vcvt.s32.f32 %v349
    %v352 = vsel %vm113, %v350, 0
    %354 = vmatprep.subr.mxu0 0.0
    %355 = vmatpush1.msra.mxu0 %v60
    %356 = vmatprep.subr.mxu0 0.0
    %357 = vmatpush1.msra.mxu0 %v61
    %358 = vmatprep.subr.mxu0 0.0
    %359 = vmatpush1.msra.mxu0 0.0
    %360 = vmatprep.subr.mxu0 0.0
    %361 = vmatpush1.msra.mxu0 0.0
    %362 = vmatprep.subr.mxu0 0.0
    %363 = vmatpush1.msra.mxu0 0.0
    %364 = vmatprep.subr.mxu0 0.0
    %365 = vmatpush1.msra.mxu0 0.0
    %366 = vmatprep.subr.mxu0 0.0
    %367 = vmatpush1.msra.mxu0 0.0
    %368 = vmatprep.subr.mxu0 0.0
    %369 = vmatpush1.msra.mxu0 0.0
    %370 = vmatprep.subr.mxu0 0.0
    %371 = vmatpush1.msra.mxu0 0.0
    %372 = vmatprep.subr.mxu0 0.0
    %373 = vmatpush1.msra.mxu0 0.0
    %374 = vmatprep.subr.mxu0 0.0
    %375 = vmatpush1.msra.mxu0 0.0
    %376 = vmatprep.subr.mxu0 0.0
    %377 = vmatpush1.msra.mxu0 0.0
    %378 = vmatprep.subr.mxu0 0.0
    %379 = vmatpush1.msra.mxu0 0.0
    %380 = vmatprep.subr.mxu0 0.0
    %381 = vmatpush1.msra.mxu0 0.0
    %382 = vmatprep.subr.mxu0 0.0
    %383 = vmatpush1.msra.mxu0 0.0
    %384 = vmatprep.subr.mxu0 0.0
    %385 = vmatpush1.msra.mxu0 0.0
    %386 = vmatprep.subr.mxu0 0.0
    %387 = vmatpush1.msra.mxu0 0.0
    %388 = vmatprep.subr.mxu0 0.0
    %389 = vmatpush1.msra.mxu0 0.0
    %390 = vmatprep.subr.mxu0 0.0
    %391 = vmatpush1.msra.mxu0 0.0
    %392 = vmatprep.subr.mxu0 0.0
    %393 = vmatpush1.msra.mxu0 0.0
    %394 = vmatprep.subr.mxu0 0.0
    %395 = vmatpush1.msra.mxu0 0.0
    %396 = vmatprep.subr.mxu0 0.0
    %397 = vmatpush1.msra.mxu0 0.0
    %398 = vmatprep.subr.mxu0 0.0
    %399 = vmatpush1.msra.mxu0 0.0
    %400 = vmatprep.subr.mxu0 0.0
    %401 = vmatpush1.msra.mxu0 0.0
    %402 = vmatprep.subr.mxu0 0.0
    %403 = vmatpush1.msra.mxu0 0.0
    %404 = vmatprep.subr.mxu0 0.0
    %405 = vmatpush1.msra.mxu0 0.0
    %406 = vmatprep.subr.mxu0 0.0
    %407 = vmatpush1.msra.mxu0 0.0
    %408 = vmatprep.subr.mxu0 0.0
    %409 = vmatpush1.msra.mxu0 0.0
    %410 = vmatprep.subr.mxu0 0.0
    %411 = vmatpush1.msra.mxu0 0.0
    %412 = vmatprep.subr.mxu0 0.0
    %413 = vmatpush1.msra.mxu0 0.0
    %414 = vmatprep.subr.mxu0 0.0
    %415 = vmatpush1.msra.mxu0 0.0
    %416 = vmatprep.subr.mxu0 0.0
    %417 = vmatpush1.msra.mxu0 0.0
    %418 = vmatprep.mubr.f32.mxu0 0.0
    %419 = vmatmul.mubr.f32.gmra.mrb[0].mxu0 %v352
    %v420 = vpop.f32.mrb[0].mxu0
    %v421 = vadd.f32 0.0, %v420
    %v422 = vpop.f32.mrb[0].mxu0
    %423 = vdwg.mxu0
    %424 = vset.pattern.permute.xlu0 4
    %425 = vperm.xlu0 %424, %v59
    %v426 = vpop.permute.xlu0 %425
    %vm427 = vcmp.eq.s32.totalorder %v426, %v106
    %v428 = vsel %vm427, 1, 0
    %v429 = vcvt.s32.f32 %v428
    %v431 = vsel %vm113, %v429, 0
    %433 = vmatprep.subr.mxu0 0.0
    %434 = vmatpush1.msra.mxu0 %v60
    %435 = vmatprep.subr.mxu0 0.0
    %436 = vmatpush1.msra.mxu0 %v61
    %437 = vmatprep.subr.mxu0 0.0
    %438 = vmatpush1.msra.mxu0 0.0
    %439 = vmatprep.subr.mxu0 0.0
    %440 = vmatpush1.msra.mxu0 0.0
    %441 = vmatprep.subr.mxu0 0.0
    %442 = vmatpush1.msra.mxu0 0.0
    %443 = vmatprep.subr.mxu0 0.0
    %444 = vmatpush1.msra.mxu0 0.0
    %445 = vmatprep.subr.mxu0 0.0
    %446 = vmatpush1.msra.mxu0 0.0
    %447 = vmatprep.subr.mxu0 0.0
    %448 = vmatpush1.msra.mxu0 0.0
    %449 = vmatprep.subr.mxu0 0.0
    %450 = vmatpush1.msra.mxu0 0.0
    %451 = vmatprep.subr.mxu0 0.0
    %452 = vmatpush1.msra.mxu0 0.0
    %453 = vmatprep.subr.mxu0 0.0
    %454 = vmatpush1.msra.mxu0 0.0
    %455 = vmatprep.subr.mxu0 0.0
    %456 = vmatpush1.msra.mxu0 0.0
    %457 = vmatprep.subr.mxu0 0.0
    %458 = vmatpush1.msra.mxu0 0.0
    %459 = vmatprep.subr.mxu0 0.0
    %460 = vmatpush1.msra.mxu0 0.0
    %461 = vmatprep.subr.mxu0 0.0
    %462 = vmatpush1.msra.mxu0 0.0
    %463 = vmatprep.subr.mxu0 0.0
    %464 = vmatpush1.msra.mxu0 0.0
    %465 = vmatprep.subr.mxu0 0.0
    %466 = vmatpush1.msra.mxu0 0.0
    %467 = vmatprep.subr.mxu0 0.0
    %468 = vmatpush1.msra.mxu0 0.0
    %469 = vmatprep.subr.mxu0 0.0
    %470 = vmatpush1.msra.mxu0 0.0
    %471 = vmatprep.subr.mxu0 0.0
    %472 = vmatpush1.msra.mxu0 0.0
    %473 = vmatprep.subr.mxu0 0.0
    %474 = vmatpush1.msra.mxu0 0.0
    %475 = vmatprep.subr.mxu0 0.0
    %476 = vmatpush1.msra.mxu0 0.0
    %477 = vmatprep.subr.mxu0 0.0
    %478 = vmatpush1.msra.mxu0 0.0
    %479 = vmatprep.subr.mxu0 0.0
    %480 = vmatpush1.msra.mxu0 0.0
    %481 = vmatprep.subr.mxu0 0.0
    %482 = vmatpush1.msra.mxu0 0.0
    %483 = vmatprep.subr.mxu0 0.0
    %484 = vmatpush1.msra.mxu0 0.0
    %485 = vmatprep.subr.mxu0 0.0
    %486 = vmatpush1.msra.mxu0 0.0
    %487 = vmatprep.subr.mxu0 0.0
    %488 = vmatpush1.msra.mxu0 0.0
    %489 = vmatprep.subr.mxu0 0.0
    %490 = vmatpush1.msra.mxu0 0.0
    %491 = vmatprep.subr.mxu0 0.0
    %492 = vmatpush1.msra.mxu0 0.0
    %493 = vmatprep.subr.mxu0 0.0
    %494 = vmatpush1.msra.mxu0 0.0
    %495 = vmatprep.subr.mxu0 0.0
    %496 = vmatpush1.msra.mxu0 0.0
    %497 = vmatprep.mubr.f32.mxu0 0.0
    %498 = vmatmul.mubr.f32.gmra.mrb[0].mxu0 %v431
    %v499 = vpop.f32.mrb[0].mxu0
    %v500 = vadd.f32 0.0, %v499
    %v501 = vpop.f32.mrb[0].mxu0
    %502 = vdwg.mxu0
    %503 = vset.pattern.permute.xlu0 5
    %504 = vperm.xlu0 %503, %v59
    %v505 = vpop.permute.xlu0 %504
    %vm506 = vcmp.eq.s32.totalorder %v505, %v106
    %v507 = vsel %vm506, 1, 0
    %v508 = vcvt.s32.f32 %v507
    %v510 = vsel %vm113, %v508, 0
    %512 = vmatprep.subr.mxu0 0.0
    %513 = vmatpush1.msra.mxu0 %v60
    %514 = vmatprep.subr.mxu0 0.0
    %515 = vmatpush1.msra.mxu0 %v61
    %516 = vmatprep.subr.mxu0 0.0
    %517 = vmatpush1.msra.mxu0 0.0
    %518 = vmatprep.subr.mxu0 0.0
    %519 = vmatpush1.msra.mxu0 0.0
    %520 = vmatprep.subr.mxu0 0.0
    %521 = vmatpush1.msra.mxu0 0.0
    %522 = vmatprep.subr.mxu0 0.0
    %523 = vmatpush1.msra.mxu0 0.0
    %524 = vmatprep.subr.mxu0 0.0
    %525 = vmatpush1.msra.mxu0 0.0
    %526 = vmatprep.subr.mxu0 0.0
    %527 = vmatpush1.msra.mxu0 0.0
    %528 = vmatprep.subr.mxu0 0.0
    %529 = vmatpush1.msra.mxu0 0.0
    %530 = vmatprep.subr.mxu0 0.0
    %531 = vmatpush1.msra.mxu0 0.0
    %532 = vmatprep.subr.mxu0 0.0
    %533 = vmatpush1.msra.mxu0 0.0
    %534 = vmatprep.subr.mxu0 0.0
    %535 = vmatpush1.msra.mxu0 0.0
    %536 = vmatprep.subr.mxu0 0.0
    %537 = vmatpush1.msra.mxu0 0.0
    %538 = vmatprep.subr.mxu0 0.0
    %539 = vmatpush1.msra.mxu0 0.0
    %540 = vmatprep.subr.mxu0 0.0
    %541 = vmatpush1.msra.mxu0 0.0
    %542 = vmatprep.subr.mxu0 0.0
    %543 = vmatpush1.msra.mxu0 0.0
    %544 = vmatprep.subr.mxu0 0.0
    %545 = vmatpush1.msra.mxu0 0.0
    %546 = vmatprep.subr.mxu0 0.0
    %547 = vmatpush1.msra.mxu0 0.0
    %548 = vmatprep.subr.mxu0 0.0
    %549 = vmatpush1.msra.mxu0 0.0
    %550 = vmatprep.subr.mxu0 0.0
    %551 = vmatpush1.msra.mxu0 0.0
    %552 = vmatprep.subr.mxu0 0.0
    %553 = vmatpush1.msra.mxu0 0.0
    %554 = vmatprep.subr.mxu0 0.0
    %555 = vmatpush1.msra.mxu0 0.0
    %556 = vmatprep.subr.mxu0 0.0
    %557 = vmatpush1.msra.mxu0 0.0
    %558 = vmatprep.subr.mxu0 0.0
    %559 = vmatpush1.msra.mxu0 0.0
    %560 = vmatprep.subr.mxu0 0.0
    %561 = vmatpush1.msra.mxu0 0.0
    %562 = vmatprep.subr.mxu0 0.0
    %563 = vmatpush1.msra.mxu0 0.0
    %564 = vmatprep.subr.mxu0 0.0
    %565 = vmatpush1.msra.mxu0 0.0
    %566 = vmatprep.subr.mxu0 0.0
    %567 = vmatpush1.msra.mxu0 0.0
    %568 = vmatprep.subr.mxu0 0.0
    %569 = vmatpush1.msra.mxu0 0.0
    %570 = vmatprep.subr.mxu0 0.0
    %571 = vmatpush1.msra.mxu0 0.0
    %572 = vmatprep.subr.mxu0 0.0
    %573 = vmatpush1.msra.mxu0 0.0
    %574 = vmatprep.subr.mxu0 0.0
    %575 = vmatpush1.msra.mxu0 0.0
    %576 = vmatprep.mubr.f32.mxu0 0.0
    %577 = vmatmul.mubr.f32.gmra.mrb[0].mxu0 %v510
    %v578 = vpop.f32.mrb[0].mxu0
    %v579 = vadd.f32 0.0, %v578
    %v580 = vpop.f32.mrb[0].mxu0
    %581 = vdwg.mxu0
    %582 = vset.pattern.permute.xlu0 6
    %583 = vperm.xlu0 %582, %v59
    %v584 = vpop.permute.xlu0 %583
    %vm585 = vcmp.eq.s32.totalorder %v584, %v106
    %v586 = vsel %vm585, 1, 0
    %v587 = vcvt.s32.f32 %v586
    %v589 = vsel %vm113, %v587, 0
    %591 = vmatprep.subr.mxu0 0.0
    %592 = vmatpush1.msra.mxu0 %v60
    %593 = vmatprep.subr.mxu0 0.0
    %594 = vmatpush1.msra.mxu0 %v61
    %595 = vmatprep.subr.mxu0 0.0
    %596 = vmatpush1.msra.mxu0 0.0
    %597 = vmatprep.subr.mxu0 0.0
    %598 = vmatpush1.msra.mxu0 0.0
    %599 = vmatprep.subr.mxu0 0.0
    %600 = vmatpush1.msra.mxu0 0.0
    %601 = vmatprep.subr.mxu0 0.0
    %602 = vmatpush1.msra.mxu0 0.0
    %603 = vmatprep.subr.mxu0 0.0
    %604 = vmatpush1.msra.mxu0 0.0
    %605 = vmatprep.subr.mxu0 0.0
    %606 = vmatpush1.msra.mxu0 0.0
    %607 = vmatprep.subr.mxu0 0.0
    %608 = vmatpush1.msra.mxu0 0.0
    %609 = vmatprep.subr.mxu0 0.0
    %610 = vmatpush1.msra.mxu0 0.0
    %611 = vmatprep.subr.mxu0 0.0
    %612 = vmatpush1.msra.mxu0 0.0
    %613 = vmatprep.subr.mxu0 0.0
    %614 = vmatpush1.msra.mxu0 0.0
    %615 = vmatprep.subr.mxu0 0.0
    %616 = vmatpush1.msra.mxu0 0.0
    %617 = vmatprep.subr.mxu0 0.0
    %618 = vmatpush1.msra.mxu0 0.0
    %619 = vmatprep.subr.mxu0 0.0
    %620 = vmatpush1.msra.mxu0 0.0
    %621 = vmatprep.subr.mxu0 0.0
    %622 = vmatpush1.msra.mxu0 0.0
    %623 = vmatprep.subr.mxu0 0.0
    %624 = vmatpush1.msra.mxu0 0.0
    %625 = vmatprep.subr.mxu0 0.0
    %626 = vmatpush1.msra.mxu0 0.0
    %627 = vmatprep.subr.mxu0 0.0
    %628 = vmatpush1.msra.mxu0 0.0
    %629 = vmatprep.subr.mxu0 0.0
    %630 = vmatpush1.msra.mxu0 0.0
    %631 = vmatprep.subr.mxu0 0.0
    %632 = vmatpush1.msra.mxu0 0.0
    %633 = vmatprep.subr.mxu0 0.0
    %634 = vmatpush1.msra.mxu0 0.0
    %635 = vmatprep.subr.mxu0 0.0
    %636 = vmatpush1.msra.mxu0 0.0
    %637 = vmatprep.subr.mxu0 0.0
    %638 = vmatpush1.msra.mxu0 0.0
    %639 = vmatprep.subr.mxu0 0.0
    %640 = vmatpush1.msra.mxu0 0.0
    %641 = vmatprep.subr.mxu0 0.0
    %642 = vmatpush1.msra.mxu0 0.0
    %643 = vmatprep.subr.mxu0 0.0
    %644 = vmatpush1.msra.mxu0 0.0
    %645 = vmatprep.subr.mxu0 0.0
    %646 = vmatpush1.msra.mxu0 0.0
    %647 = vmatprep.subr.mxu0 0.0
    %648 = vmatpush1.msra.mxu0 0.0
    %649 = vmatprep.subr.mxu0 0.0
    %650 = vmatpush1.msra.mxu0 0.0
    %651 = vmatprep.subr.mxu0 0.0
    %652 = vmatpush1.msra.mxu0 0.0
    %653 = vmatprep.subr.mxu0 0.0
    %654 = vmatpush1.msra.mxu0 0.0
    %655 = vmatprep.mubr.f32.mxu0 0.0
    %656 = vmatmul.mubr.f32.gmra.mrb[0].mxu0 %v589
    %v657 = vpop.f32.mrb[0].mxu0
    %v658 = vadd.f32 0.0, %v657
    %v659 = vpop.f32.mrb[0].mxu0
    %660 = vdwg.mxu0
    %661 = vset.pattern.permute.xlu0 7
    %662 = vperm.xlu0 %661, %v59
    %v663 = vpop.permute.xlu0 %662
    %vm664 = vcmp.eq.s32.totalorder %v663, %v106
    %v665 = vsel %vm664, 1, 0
    %v666 = vcvt.s32.f32 %v665
    %v668 = vsel %vm113, %v666, 0
    %670 = vmatprep.subr.mxu0 0.0
    %671 = vmatpush1.msra.mxu0 %v60
    %672 = vmatprep.subr.mxu0 0.0
    %673 = vmatpush1.msra.mxu0 %v61
    %674 = vmatprep.subr.mxu0 0.0
    %675 = vmatpush1.msra.mxu0 0.0
    %676 = vmatprep.subr.mxu0 0.0
    %677 = vmatpush1.msra.mxu0 0.0
    %678 = vmatprep.subr.mxu0 0.0
    %679 = vmatpush1.msra.mxu0 0.0
    %680 = vmatprep.subr.mxu0 0.0
    %681 = vmatpush1.msra.mxu0 0.0
    %682 = vmatprep.subr.mxu0 0.0
    %683 = vmatpush1.msra.mxu0 0.0
    %684 = vmatprep.subr.mxu0 0.0
    %685 = vmatpush1.msra.mxu0 0.0
    %686 = vmatprep.subr.mxu0 0.0
    %687 = vmatpush1.msra.mxu0 0.0
    %688 = vmatprep.subr.mxu0 0.0
    %689 = vmatpush1.msra.mxu0 0.0
    %690 = vmatprep.subr.mxu0 0.0
    %691 = vmatpush1.msra.mxu0 0.0
    %692 = vmatprep.subr.mxu0 0.0
    %693 = vmatpush1.msra.mxu0 0.0
    %694 = vmatprep.subr.mxu0 0.0
    %695 = vmatpush1.msra.mxu0 0.0
    %696 = vmatprep.subr.mxu0 0.0
    %697 = vmatpush1.msra.mxu0 0.0
    %698 = vmatprep.subr.mxu0 0.0
    %699 = vmatpush1.msra.mxu0 0.0
    %700 = vmatprep.subr.mxu0 0.0
    %701 = vmatpush1.msra.mxu0 0.0
    %702 = vmatprep.subr.mxu0 0.0
    %703 = vmatpush1.msra.mxu0 0.0
    %704 = vmatprep.subr.mxu0 0.0
    %705 = vmatpush1.msra.mxu0 0.0
    %706 = vmatprep.subr.mxu0 0.0
    %707 = vmatpush1.msra.mxu0 0.0
    %708 = vmatprep.subr.mxu0 0.0
    %709 = vmatpush1.msra.mxu0 0.0
    %710 = vmatprep.subr.mxu0 0.0
    %711 = vmatpush1.msra.mxu0 0.0
    %712 = vmatprep.subr.mxu0 0.0
    %713 = vmatpush1.msra.mxu0 0.0
    %714 = vmatprep.subr.mxu0 0.0
    %715 = vmatpush1.msra.mxu0 0.0
    %716 = vmatprep.subr.mxu0 0.0
    %717 = vmatpush1.msra.mxu0 0.0
    %718 = vmatprep.subr.mxu0 0.0
    %719 = vmatpush1.msra.mxu0 0.0
    %720 = vmatprep.subr.mxu0 0.0
    %721 = vmatpush1.msra.mxu0 0.0
    %722 = vmatprep.subr.mxu0 0.0
    %723 = vmatpush1.msra.mxu0 0.0
    %724 = vmatprep.subr.mxu0 0.0
    %725 = vmatpush1.msra.mxu0 0.0
    %726 = vmatprep.subr.mxu0 0.0
    %727 = vmatpush1.msra.mxu0 0.0
    %728 = vmatprep.subr.mxu0 0.0
    %729 = vmatpush1.msra.mxu0 0.0
    %730 = vmatprep.subr.mxu0 0.0
    %731 = vmatpush1.msra.mxu0 0.0
    %732 = vmatprep.subr.mxu0 0.0
    %733 = vmatpush1.msra.mxu0 0.0
    %734 = vmatprep.mubr.f32.mxu0 0.0
    %735 = vmatmul.mubr.f32.gmra.mrb[0].mxu0 %v668
    %v736 = vpop.f32.mrb[0].mxu0
    %v737 = vadd.f32 0.0, %v736
    %v738 = vpop.f32.mrb[0].mxu0
    %739 = vdwg.mxu0
    %vm740 = vcmask 261120
    %v742 = vsel %vm740, 0, 0
    %744 = vmatprep.subr.bf16.mxu0 0
    %745 = vmatpush1.bf16.msra.mxu0 %v66
    %746 = vmatprep.subr.bf16.mxu0 0
    %747 = vmatpush1.bf16.msra.mxu0 %v67
    %748 = vmatprep.subr.bf16.mxu0 0
    %749 = vmatpush1.bf16.msra.mxu0 0
    %750 = vmatprep.subr.bf16.mxu0 0
    %751 = vmatpush1.bf16.msra.mxu0 0
    %752 = vmatprep.subr.bf16.mxu0 0
    %753 = vmatpush1.bf16.msra.mxu0 0
    %754 = vmatprep.subr.bf16.mxu0 0
    %755 = vmatpush1.bf16.msra.mxu0 0
    %756 = vmatprep.subr.bf16.mxu0 0
    %757 = vmatpush1.bf16.msra.mxu0 0
    %758 = vmatprep.subr.bf16.mxu0 0
    %759 = vmatpush1.bf16.msra.mxu0 0
    %760 = vmatprep.subr.bf16.mxu0 0
    %761 = vmatpush1.bf16.msra.mxu0 0
    %762 = vmatprep.subr.bf16.mxu0 0
    %763 = vmatpush1.bf16.msra.mxu0 0
    %764 = vmatprep.subr.bf16.mxu0 0
    %765 = vmatpush1.bf16.msra.mxu0 0
    %766 = vmatprep.subr.bf16.mxu0 0
    %767 = vmatpush1.bf16.msra.mxu0 0
    %768 = vmatprep.subr.bf16.mxu0 0
    %769 = vmatpush1.bf16.msra.mxu0 0
    %770 = vmatprep.subr.bf16.mxu0 0
    %771 = vmatpush1.bf16.msra.mxu0 0
    %772 = vmatprep.subr.bf16.mxu0 0
    %773 = vmatpush1.bf16.msra.mxu0 0
    %774 = vmatprep.subr.bf16.mxu0 0
    %775 = vmatpush1.bf16.msra.mxu0 0
    %776 = vmatprep.mubr.bf16.mxu0 0
    %777 = vmatmul.mubr.bf16.gmra.mrb[0].mxu0 %v742
    %v778 = vpop.f32.mrb[0].mxu0
    %v779 = vadd.f32 %v89, %v778
    %v780 = vpop.f32.mrb[0].mxu0
    %v781 = vpop.f32.mrb[0].mxu0
    %v782 = vpop.f32.mrb[0].mxu0
    %783 = vdwg.mxu0
    %v784 = vadd.f32 %v184, %v779
    %v785 = vxor.u32 %v784, 2147483648
    %v786 = vmul.f32 %v785, 1.442695
    %v787 = vpow.pop %v786
    %v788 = vadd.f32 %v787, 1.0
    %v789 = vrcp.pop %v788
    %v790 = vmul.f32 1.0, %v789
    %792 = vrot.lane.b32.xlu0 %v779, 64
    %v793 = vpop.permute.xlu0 %792
    %v795 = vmul.f32 %v790, %v793
    %797 = vrot.lane.b32.xlu0 %v795, 64
    %v798 = vpop.permute.xlu0 %797
    %v800 = vadd.f32 %v184, %v798
    %v801 = vtanh.pop %v800
    %v802 = vsub.f32 1.0, %v790
    %804 = vrot.lane.b32.xlu0 %v801, 96
    %v805 = vpop.permute.xlu0 %804
    %v807 = vmul.f32 %v802, %v805
    %v808 = vmul.f32 %v790, 0.0
    %v809 = vadd.f32 %v807, %v808
    %v810 = vpack.c.bf16 %v809, %v809
    %812 = vrot.lane.b32.xlu0 %v810, 96
    %v813 = vpop.permute.xlu0 %812
    %v815 = vsel %vm740, %v813, 0
    %vm816 = vcmask 523264
    %v817 = vsel %vm816, %v815, 0
    %819 = vmatprep.subr.bf16.mxu0 0
    %820 = vmatpush1.bf16.msra.mxu0 %v76
    %821 = vmatprep.subr.bf16.mxu0 0
    %822 = vmatpush1.bf16.msra.mxu0 %v77
    %823 = vmatprep.subr.bf16.mxu0 0
    %824 = vmatpush1.bf16.msra.mxu0 %v78
    %825 = vmatprep.subr.bf16.mxu0 0
    %826 = vmatpush1.bf16.msra.mxu0 %v79
    %827 = vmatprep.subr.bf16.mxu0 0
    %828 = vmatpush1.bf16.msra.mxu0 0
    %829 = vmatprep.subr.bf16.mxu0 0
    %830 = vmatpush1.bf16.msra.mxu0 0
    %831 = vmatprep.subr.bf16.mxu0 0
    %832 = vmatpush1.bf16.msra.mxu0 0
    %833 = vmatprep.subr.bf16.mxu0 0
    %834 = vmatpush1.bf16.msra.mxu0 0
    %835 = vmatprep.subr.bf16.mxu0 0
    %836 = vmatpush1.bf16.msra.mxu0 0
    %837 = vmatprep.subr.bf16.mxu0 0
    %838 = vmatpush1.bf16.msra.mxu0 0
    %839 = vmatprep.subr.bf16.mxu0 0
    %840 = vmatpush1.bf16.msra.mxu0 0
    %841 = vmatprep.subr.bf16.mxu0 0
    %842 = vmatpush1.bf16.msra.mxu0 0
    %843 = vmatprep.subr.bf16.mxu0 0
    %844 = vmatpush1.bf16.msra.mxu0 0
    %845 = vmatprep.subr.bf16.mxu0 0
    %846 = vmatpush1.bf16.msra.mxu0 0
    %847 = vmatprep.subr.bf16.mxu0 0
    %848 = vmatpush1.bf16.msra.mxu0 0
    %849 = vmatprep.subr.bf16.mxu0 0
    %850 = vmatpush1.bf16.msra.mxu0 0
    %851 = vmatprep.mubr.bf16.mxu0 0
    %852 = vmatmul.mubr.bf16.gmra.mrb[0].mxu0 %v817
    %v853 = vpop.f32.mrb[0].mxu0
    %v854 = vadd.f32 %v96, %v853
    %v855 = vpop.f32.mrb[0].mxu0
    %v856 = vpop.f32.mrb[0].mxu0
    %v857 = vpop.f32.mrb[0].mxu0
    %858 = vdwg.mxu0
    %v859 = vxor.u32 %v854, 2147483648
    %v860 = vmul.f32 %v859, 1.442695
    %v861 = vpow.pop %v860
    %v862 = vadd.f32 %v861, 1.0
    %v863 = vrcp.pop %v862
    %v864 = vmul.f32 1.0, %v863
    %866 = vrot.lane.b32.xlu0 %v854, 32
    %v867 = vpop.permute.xlu0 %866
    %v869 = vmul.f32 %v864, %v867
    %871 = vrot.lane.b32.xlu0 %v869, 64
    %v872 = vpop.permute.xlu0 %871
    %v874 = vadd.f32 %v854, %v872
    %v875 = vtanh.pop %v874
    %v876 = vsub.f32 1.0, %v864
    %878 = vrot.lane.b32.xlu0 %v875, 96
    %v879 = vpop.permute.xlu0 %878
    %v881 = vmul.f32 %v876, %v879
    %v882 = vmul.f32 %v864, 0.0
    %v883 = vadd.f32 %v881, %v882
    %885 = vrot.lane.b32.xlu0 %v883, 96
    %v886 = vpop.permute.xlu0 %885
    %v887 = vsel %vm740, %v886, 0
    %889 = vmatprep.subr.mxu0 0.0
    %890 = vmatpush1.msra.mxu0 %v80
    %891 = vmatprep.subr.mxu0 0.0
    %892 = vmatpush1.msra.mxu0 %v81
    %893 = vmatprep.subr.mxu0 0.0
    %894 = vmatpush1.msra.mxu0 %v82
    %895 = vmatprep.subr.mxu0 0.0
    %896 = vmatpush1.msra.mxu0 %v83
    %897 = vmatprep.subr.mxu0 0.0
    %898 = vmatpush1.msra.mxu0 0.0
    %899 = vmatprep.subr.mxu0 0.0
    %900 = vmatpush1.msra.mxu0 0.0
    %901 = vmatprep.subr.mxu0 0.0
    %902 = vmatpush1.msra.mxu0 0.0
    %903 = vmatprep.subr.mxu0 0.0
    %904 = vmatpush1.msra.mxu0 0.0
    %905 = vmatprep.subr.mxu0 0.0
    %906 = vmatpush1.msra.mxu0 0.0
    %907 = vmatprep.subr.mxu0 0.0
    %908 = vmatpush1.msra.mxu0 0.0
    %909 = vmatprep.subr.mxu0 0.0
    %910 = vmatpush1.msra.mxu0 0.0
    %911 = vmatprep.subr.mxu0 0.0
    %912 = vmatpush1.msra.mxu0 0.0
    %913 = vmatprep.subr.mxu0 0.0
    %914 = vmatpush1.msra.mxu0 0.0
    %915 = vmatprep.subr.mxu0 0.0
    %916 = vmatpush1.msra.mxu0 0.0
    %917 = vmatprep.subr.mxu0 0.0
    %918 = vmatpush1.msra.mxu0 0.0
    %919 = vmatprep.subr.mxu0 0.0
    %920 = vmatpush1.msra.mxu0 0.0
    %921 = vmatprep.subr.mxu0 0.0
    %922 = vmatpush1.msra.mxu0 0.0
    %923 = vmatprep.subr.mxu0 0.0
    %924 = vmatpush1.msra.mxu0 0.0
    %925 = vmatprep.subr.mxu0 0.0
    %926 = vmatpush1.msra.mxu0 0.0
    %927 = vmatprep.subr.mxu0 0.0
    %928 = vmatpush1.msra.mxu0 0.0
    %929 = vmatprep.subr.mxu0 0.0
    %930 = vmatpush1.msra.mxu0 0.0
    %931 = vmatprep.subr.mxu0 0.0
    %932 = vmatpush1.msra.mxu0 0.0
    %933 = vmatprep.subr.mxu0 0.0
    %934 = vmatpush1.msra.mxu0 0.0
    %935 = vmatprep.subr.mxu0 0.0
    %936 = vmatpush1.msra.mxu0 0.0
    %937 = vmatprep.subr.mxu0 0.0
    %938 = vmatpush1.msra.mxu0 0.0
    %939 = vmatprep.subr.mxu0 0.0
    %940 = vmatpush1.msra.mxu0 0.0
    %941 = vmatprep.subr.mxu0 0.0
    %942 = vmatpush1.msra.mxu0 0.0
    %943 = vmatprep.subr.mxu0 0.0
    %944 = vmatpush1.msra.mxu0 0.0
    %945 = vmatprep.subr.mxu0 0.0
    %946 = vmatpush1.msra.mxu0 0.0
    %947 = vmatprep.subr.mxu0 0.0
    %948 = vmatpush1.msra.mxu0 0.0
    %949 = vmatprep.subr.mxu0 0.0
    %950 = vmatpush1.msra.mxu0 0.0
    %951 = vmatprep.subr.mxu0 0.0
    %952 = vmatpush1.msra.mxu0 0.0
    %953 = vmatprep.mubr.f32.mxu0 0.0
    %954 = vmatmul.mubr.f32.gmra.mrb[0].mxu0 %v887
    %v955 = vpop.f32.mrb[0].mxu0
    %v956 = vadd.f32 %v103, %v955
    %v957 = vpop.f32.mrb[0].mxu0
    %958 = vdwg.mxu0
    %v959 = vsel %vm740, %v813, 0
    %961 = vmatprep.subr.bf16.mxu0 0
    %962 = vmatpush1.bf16.msra.mxu0 %v66
    %963 = vmatprep.subr.bf16.mxu0 0
    %964 = vmatpush1.bf16.msra.mxu0 %v67
    %965 = vmatprep.subr.bf16.mxu0 0
    %966 = vmatpush1.bf16.msra.mxu0 0
    %967 = vmatprep.subr.bf16.mxu0 0
    %968 = vmatpush1.bf16.msra.mxu0 0
    %969 = vmatprep.subr.bf16.mxu0 0
    %970 = vmatpush1.bf16.msra.mxu0 0
    %971 = vmatprep.subr.bf16.mxu0 0
    %972 = vmatpush1.bf16.msra.mxu0 0
    %973 = vmatprep.subr.bf16.mxu0 0
    %974 = vmatpush1.bf16.msra.mxu0 0
    %975 = vmatprep.subr.bf16.mxu0 0
    %976 = vmatpush1.bf16.msra.mxu0 0
    %977 = vmatprep.subr.bf16.mxu0 0
    %978 = vmatpush1.bf16.msra.mxu0 0
    %979 = vmatprep.subr.bf16.mxu0 0
    %980 = vmatpush1.bf16.msra.mxu0 0
    %981 = vmatprep.subr.bf16.mxu0 0
    %982 = vmatpush1.bf16.msra.mxu0 0
    %983 = vmatprep.subr.bf16.mxu0 0
    %984 = vmatpush1.bf16.msra.mxu0 0
    %985 = vmatprep.subr.bf16.mxu0 0
    %986 = vmatpush1.bf16.msra.mxu0 0
    %987 = vmatprep.subr.bf16.mxu0 0
    %988 = vmatpush1.bf16.msra.mxu0 0
    %989 = vmatprep.subr.bf16.mxu0 0
    %990 = vmatpush1.bf16.msra.mxu0 0
    %991 = vmatprep.subr.bf16.mxu0 0
    %992 = vmatpush1.bf16.msra.mxu0 0
    %993 = vmatprep.mubr.bf16.mxu0 0
    %994 = vmatmul.mubr.bf16.gmra.mrb[0].mxu0 %v959
    %v995 = vpop.f32.mrb[0].mxu0
    %v996 = vadd.f32 %v89, %v995
    %v997 = vpop.f32.mrb[0].mxu0
    %v998 = vpop.f32.mrb[0].mxu0
    %v999 = vpop.f32.mrb[0].mxu0
    %1000 = vdwg.mxu0
    %v1001 = vadd.f32 %v263, %v996
    %v1002 = vxor.u32 %v1001, 2147483648
    %v1003 = vmul.f32 %v1002, 1.442695
    %v1004 = vpow.pop %v1003
    %v1005 = vadd.f32 %v1004, 1.0
    %v1006 = vrcp.pop %v1005
    %v1007 = vmul.f32 1.0, %v1006
    %1009 = vrot.lane.b32.xlu0 %v996, 64
    %v1010 = vpop.permute.xlu0 %1009
    %v1012 = vmul.f32 %v1007, %v1010
    %1014 = vrot.lane.b32.xlu0 %v1012, 64
    %v1015 = vpop.permute.xlu0 %1014
    %v1017 = vadd.f32 %v263, %v1015
    %v1018 = vtanh.pop %v1017
    %v1019 = vsub.f32 1.0, %v1007
    %1021 = vrot.lane.b32.xlu0 %v1018, 96
    %v1022 = vpop.permute.xlu0 %1021
    %v1024 = vmul.f32 %v1019, %v1022
    %v1025 = vmul.f32 %v1007, %v809
    %v1026 = vadd.f32 %v1024, %v1025
    %v1027 = vpack.c.bf16 %v1026, %v1026
    %v1028 = vpack.c.bf16 %v883, %v883
    %1030 = vrot.lane.b32.xlu0 %v1027, 96
    %v1031 = vpop.permute.xlu0 %1030
    %v1034 = vsel %vm740, %v1031, %v1028
    %v1035 = vsel %vm816, %v1034, 0
    %1037 = vmatprep.subr.bf16.mxu0 0
    %1038 = vmatpush1.bf16.msra.mxu0 %v76
    %1039 = vmatprep.subr.bf16.mxu0 0
    %1040 = vmatpush1.bf16.msra.mxu0 %v77
    %1041 = vmatprep.subr.bf16.mxu0 0
    %1042 = vmatpush1.bf16.msra.mxu0 %v78
    %1043 = vmatprep.subr.bf16.mxu0 0
    %1044 = vmatpush1.bf16.msra.mxu0 %v79
    %1045 = vmatprep.subr.bf16.mxu0 0
    %1046 = vmatpush1.bf16.msra.mxu0 0
    %1047 = vmatprep.subr.bf16.mxu0 0
    %1048 = vmatpush1.bf16.msra.mxu0 0
    %1049 = vmatprep.subr.bf16.mxu0 0
    %1050 = vmatpush1.bf16.msra.mxu0 0
    %1051 = vmatprep.subr.bf16.mxu0 0
    %1052 = vmatpush1.bf16.msra.mxu0 0
    %1053 = vmatprep.subr.bf16.mxu0 0
    %1054 = vmatpush1.bf16.msra.mxu0 0
    %1055 = vmatprep.subr.bf16.mxu0 0
    %1056 = vmatpush1.bf16.msra.mxu0 0
    %1057 = vmatprep.subr.bf16.mxu0 0
    %1058 = vmatpush1.bf16.msra.mxu0 0
    %1059 = vmatprep.subr.bf16.mxu0 0
    %1060 = vmatpush1.bf16.msra.mxu0 0
    %1061 = vmatprep.subr.bf16.mxu0 0
    %1062 = vmatpush1.bf16.msra.mxu0 0
    %1063 = vmatprep.subr.bf16.mxu0 0
    %1064 = vmatpush1.bf16.msra.mxu0 0
    %1065 = vmatprep.subr.bf16.mxu0 0
    %1066 = vmatpush1.bf16.msra.mxu0 0
    %1067 = vmatprep.subr.bf16.mxu0 0
    %1068 = vmatpush1.bf16.msra.mxu0 0
    %1069 = vmatprep.mubr.bf16.mxu0 0
    %1070 = vmatmul.mubr.bf16.gmra.mrb[0].mxu0 %v1035
    %v1071 = vpop.f32.mrb[0].mxu0
    %v1072 = vadd.f32 %v96, %v1071
    %v1073 = vpop.f32.mrb[0].mxu0
    %v1074 = vpop.f32.mrb[0].mxu0
    %v1075 = vpop.f32.mrb[0].mxu0
    %1076 = vdwg.mxu0
    %v1077 = vxor.u32 %v1072, 2147483648
    %v1078 = vmul.f32 %v1077, 1.442695
    %v1079 = vpow.pop %v1078
    %v1080 = vadd.f32 %v1079, 1.0
    %v1081 = vrcp.pop %v1080
    %v1082 = vmul.f32 1.0, %v1081
    %1084 = vrot.lane.b32.xlu0 %v1072, 32
    %v1085 = vpop.permute.xlu0 %1084
    %v1087 = vmul.f32 %v1082, %v1085
    %1089 = vrot.lane.b32.xlu0 %v1087, 64
    %v1090 = vpop.permute.xlu0 %1089
    %v1092 = vadd.f32 %v1072, %v1090
    %v1093 = vtanh.pop %v1092
    %v1094 = vsub.f32 1.0, %v1082
    %1096 = vrot.lane.b32.xlu0 %v1093, 96
    %v1097 = vpop.permute.xlu0 %1096
    %v1099 = vmul.f32 %v1094, %v1097
    %v1100 = vmul.f32 %v1082, %v883
    %v1101 = vadd.f32 %v1099, %v1100
    %1103 = vrot.lane.b32.xlu0 %v1101, 96
    %v1104 = vpop.permute.xlu0 %1103
    %v1105 = vsel %vm740, %v1104, 0
    %1107 = vmatprep.subr.mxu0 0.0
    %1108 = vmatpush1.msra.mxu0 %v80
    %1109 = vmatprep.subr.mxu0 0.0
    %1110 = vmatpush1.msra.mxu0 %v81
    %1111 = vmatprep.subr.mxu0 0.0
    %1112 = vmatpush1.msra.mxu0 %v82
    %1113 = vmatprep.subr.mxu0 0.0
    %1114 = vmatpush1.msra.mxu0 %v83
    %1115 = vmatprep.subr.mxu0 0.0
    %1116 = vmatpush1.msra.mxu0 0.0
    %1117 = vmatprep.subr.mxu0 0.0
    %1118 = vmatpush1.msra.mxu0 0.0
    %1119 = vmatprep.subr.mxu0 0.0
    %1120 = vmatpush1.msra.mxu0 0.0
    %1121 = vmatprep.subr.mxu0 0.0
    %1122 = vmatpush1.msra.mxu0 0.0
    %1123 = vmatprep.subr.mxu0 0.0
    %1124 = vmatpush1.msra.mxu0 0.0
    %1125 = vmatprep.subr.mxu0 0.0
    %1126 = vmatpush1.msra.mxu0 0.0
    %1127 = vmatprep.subr.mxu0 0.0
    %1128 = vmatpush1.msra.mxu0 0.0
    %1129 = vmatprep.subr.mxu0 0.0
    %1130 = vmatpush1.msra.mxu0 0.0
    %1131 = vmatprep.subr.mxu0 0.0
    %1132 = vmatpush1.msra.mxu0 0.0
    %1133 = vmatprep.subr.mxu0 0.0
    %1134 = vmatpush1.msra.mxu0 0.0
    %1135 = vmatprep.subr.mxu0 0.0
    %1136 = vmatpush1.msra.mxu0 0.0
    %1137 = vmatprep.subr.mxu0 0.0
    %1138 = vmatpush1.msra.mxu0 0.0
    %1139 = vmatprep.subr.mxu0 0.0
    %1140 = vmatpush1.msra.mxu0 0.0
    %1141 = vmatprep.subr.mxu0 0.0
    %1142 = vmatpush1.msra.mxu0 0.0
    %1143 = vmatprep.subr.mxu0 0.0
    %1144 = vmatpush1.msra.mxu0 0.0
    %1145 = vmatprep.subr.mxu0 0.0
    %1146 = vmatpush1.msra.mxu0 0.0
    %1147 = vmatprep.subr.mxu0 0.0
    %1148 = vmatpush1.msra.mxu0 0.0
    %1149 = vmatprep.subr.mxu0 0.0
    %1150 = vmatpush1.msra.mxu0 0.0
    %1151 = vmatprep.subr.mxu0 0.0
    %1152 = vmatpush1.msra.mxu0 0.0
    %1153 = vmatprep.subr.mxu0 0.0
    %1154 = vmatpush1.msra.mxu0 0.0
    %1155 = vmatprep.subr.mxu0 0.0
    %1156 = vmatpush1.msra.mxu0 0.0
    %1157 = vmatprep.subr.mxu0 0.0
    %1158 = vmatpush1.msra.mxu0 0.0
    %1159 = vmatprep.subr.mxu0 0.0
    %1160 = vmatpush1.msra.mxu0 0.0
    %1161 = vmatprep.subr.mxu0 0.0
    %1162 = vmatpush1.msra.mxu0 0.0
    %1163 = vmatprep.subr.mxu0 0.0
    %1164 = vmatpush1.msra.mxu0 0.0
    %1165 = vmatprep.subr.mxu0 0.0
    %1166 = vmatpush1.msra.mxu0 0.0
    %1167 = vmatprep.subr.mxu0 0.0
    %1168 = vmatpush1.msra.mxu0 0.0
    %1169 = vmatprep.subr.mxu0 0.0
    %1170 = vmatpush1.msra.mxu0 0.0
    %1171 = vmatprep.mubr.f32.mxu0 0.0
    %1172 = vmatmul.mubr.f32.gmra.mrb[0].mxu0 %v1105
    %v1173 = vpop.f32.mrb[0].mxu0
    %v1174 = vadd.f32 %v103, %v1173
    %v1175 = vpop.f32.mrb[0].mxu0
    %1176 = vdwg.mxu0
    %v1177 = vsel %vm740, %v1031, 0
    %1179 = vmatprep.subr.bf16.mxu0 0
    %1180 = vmatpush1.bf16.msra.mxu0 %v66
    %1181 = vmatprep.subr.bf16.mxu0 0
    %1182 = vmatpush1.bf16.msra.mxu0 %v67
    %1183 = vmatprep.subr.bf16.mxu0 0
    %1184 = vmatpush1.bf16.msra.mxu0 0
    %1185 = vmatprep.subr.bf16.mxu0 0
    %1186 = vmatpush1.bf16.msra.mxu0 0
    %1187 = vmatprep.subr.bf16.mxu0 0
    %1188 = vmatpush1.bf16.msra.mxu0 0
    %1189 = vmatprep.subr.bf16.mxu0 0
    %1190 = vmatpush1.bf16.msra.mxu0 0
    %1191 = vmatprep.subr.bf16.mxu0 0
    %1192 = vmatpush1.bf16.msra.mxu0 0
    %1193 = vmatprep.subr.bf16.mxu0 0
    %1194 = vmatpush1.bf16.msra.mxu0 0
    %1195 = vmatprep.subr.bf16.mxu0 0
    %1196 = vmatpush1.bf16.msra.mxu0 0
    %1197 = vmatprep.subr.bf16.mxu0 0
    %1198 = vmatpush1.bf16.msra.mxu0 0
    %1199 = vmatprep.subr.bf16.mxu0 0
    %1200 = vmatpush1.bf16.msra.mxu0 0
    %1201 = vmatprep.subr.bf16.mxu0 0
    %1202 = vmatpush1.bf16.msra.mxu0 0
    %1203 = vmatprep.subr.bf16.mxu0 0
    %1204 = vmatpush1.bf16.msra.mxu0 0
    %1205 = vmatprep.subr.bf16.mxu0 0
    %1206 = vmatpush1.bf16.msra.mxu0 0
    %1207 = vmatprep.subr.bf16.mxu0 0
    %1208 = vmatpush1.bf16.msra.mxu0 0
    %1209 = vmatprep.subr.bf16.mxu0 0
    %1210 = vmatpush1.bf16.msra.mxu0 0
    %1211 = vmatprep.mubr.bf16.mxu0 0
    %1212 = vmatmul.mubr.bf16.gmra.mrb[0].mxu0 %v1177
    %v1213 = vpop.f32.mrb[0].mxu0
    %v1214 = vadd.f32 %v89, %v1213
    %v1215 = vpop.f32.mrb[0].mxu0
    %v1216 = vpop.f32.mrb[0].mxu0
    %v1217 = vpop.f32.mrb[0].mxu0
    %1218 = vdwg.mxu0
    %v1219 = vadd.f32 %v342, %v1214
    %v1220 = vxor.u32 %v1219, 2147483648
    %v1221 = vmul.f32 %v1220, 1.442695
    %v1222 = vpow.pop %v1221
    %v1223 = vadd.f32 %v1222, 1.0
    %v1224 = vrcp.pop %v1223
    %v1225 = vmul.f32 1.0, %v1224
    %1227 = vrot.lane.b32.xlu0 %v1214, 64
    %v1228 = vpop.permute.xlu0 %1227
    %v1230 = vmul.f32 %v1225, %v1228
    %1232 = vrot.lane.b32.xlu0 %v1230, 64
    %v1233 = vpop.permute.xlu0 %1232
    %v1235 = vadd.f32 %v342, %v1233
    %v1236 = vtanh.pop %v1235
    %v1237 = vsub.f32 1.0, %v1225
    %1239 = vrot.lane.b32.xlu0 %v1236, 96
    %v1240 = vpop.permute.xlu0 %1239
    %v1242 = vmul.f32 %v1237, %v1240
    %v1243 = vmul.f32 %v1225, %v1026
    %v1244 = vadd.f32 %v1242, %v1243
    %v1245 = vpack.c.bf16 %v1244, %v1244
    %v1246 = vpack.c.bf16 %v1101, %v1101
    %1248 = vrot.lane.b32.xlu0 %v1245, 96
    %v1249 = vpop.permute.xlu0 %1248
    %v1252 = vsel %vm740, %v1249, %v1246
    %v1253 = vsel %vm816, %v1252, 0
    %1255 = vmatprep.subr.bf16.mxu0 0
    %1256 = vmatpush1.bf16.msra.mxu0 %v76
    %1257 = vmatprep.subr.bf16.mxu0 0
    %1258 = vmatpush1.bf16.msra.mxu0 %v77
    %1259 = vmatprep.subr.bf16.mxu0 0
    %1260 = vmatpush1.bf16.msra.mxu0 %v78
    %1261 = vmatprep.subr.bf16.mxu0 0
    %1262 = vmatpush1.bf16.msra.mxu0 %v79
    %1263 = vmatprep.subr.bf16.mxu0 0
    %1264 = vmatpush1.bf16.msra.mxu0 0
    %1265 = vmatprep.subr.bf16.mxu0 0
    %1266 = vmatpush1.bf16.msra.mxu0 0
    %1267 = vmatprep.subr.bf16.mxu0 0
    %1268 = vmatpush1.bf16.msra.mxu0 0
    %1269 = vmatprep.subr.bf16.mxu0 0
    %1270 = vmatpush1.bf16.msra.mxu0 0
    %1271 = vmatprep.subr.bf16.mxu0 0
    %1272 = vmatpush1.bf16.msra.mxu0 0
    %1273 = vmatprep.subr.bf16.mxu0 0
    %1274 = vmatpush1.bf16.msra.mxu0 0
    %1275 = vmatprep.subr.bf16.mxu0 0
    %1276 = vmatpush1.bf16.msra.mxu0 0
    %1277 = vmatprep.subr.bf16.mxu0 0
    %1278 = vmatpush1.bf16.msra.mxu0 0
    %1279 = vmatprep.subr.bf16.mxu0 0
    %1280 = vmatpush1.bf16.msra.mxu0 0
    %1281 = vmatprep.subr.bf16.mxu0 0
    %1282 = vmatpush1.bf16.msra.mxu0 0
    %1283 = vmatprep.subr.bf16.mxu0 0
    %1284 = vmatpush1.bf16.msra.mxu0 0
    %1285 = vmatprep.subr.bf16.mxu0 0
    %1286 = vmatpush1.bf16.msra.mxu0 0
    %1287 = vmatprep.mubr.bf16.mxu0 0
    %1288 = vmatmul.mubr.bf16.gmra.mrb[0].mxu0 %v1253
    %v1289 = vpop.f32.mrb[0].mxu0
    %v1290 = vadd.f32 %v96, %v1289
    %v1291 = vpop.f32.mrb[0].mxu0
    %v1292 = vpop.f32.mrb[0].mxu0
    %v1293 = vpop.f32.mrb[0].mxu0
    %1294 = vdwg.mxu0
    %v1295 = vxor.u32 %v1290, 2147483648
    %v1296 = vmul.f32 %v1295, 1.442695
    %v1297 = vpow.pop %v1296
    %v1298 = vadd.f32 %v1297, 1.0
    %v1299 = vrcp.pop %v1298
    %v1300 = vmul.f32 1.0, %v1299
    %1302 = vrot.lane.b32.xlu0 %v1290, 32
    %v1303 = vpop.permute.xlu0 %1302
    %v1305 = vmul.f32 %v1300, %v1303
    %1307 = vrot.lane.b32.xlu0 %v1305, 64
    %v1308 = vpop.permute.xlu0 %1307
    %v1310 = vadd.f32 %v1290, %v1308
    %v1311 = vtanh.pop %v1310
    %v1312 = vsub.f32 1.0, %v1300
    %1314 = vrot.lane.b32.xlu0 %v1311, 96
    %v1315 = vpop.permute.xlu0 %1314
    %v1317 = vmul.f32 %v1312, %v1315
    %v1318 = vmul.f32 %v1300, %v1101
    %v1319 = vadd.f32 %v1317, %v1318
    %1321 = vrot.lane.b32.xlu0 %v1319, 96
    %v1322 = vpop.permute.xlu0 %1321
    %v1323 = vsel %vm740, %v1322, 0
    %1325 = vmatprep.subr.mxu0 0.0
    %1326 = vmatpush1.msra.mxu0 %v80
    %1327 = vmatprep.subr.mxu0 0.0
    %1328 = vmatpush1.msra.mxu0 %v81
    %1329 = vmatprep.subr.mxu0 0.0
    %1330 = vmatpush1.msra.mxu0 %v82
    %1331 = vmatprep.subr.mxu0 0.0
    %1332 = vmatpush1.msra.mxu0 %v83
    %1333 = vmatprep.subr.mxu0 0.0
    %1334 = vmatpush1.msra.mxu0 0.0
    %1335 = vmatprep.subr.mxu0 0.0
    %1336 = vmatpush1.msra.mxu0 0.0
    %1337 = vmatprep.subr.mxu0 0.0
    %1338 = vmatpush1.msra.mxu0 0.0
    %1339 = vmatprep.subr.mxu0 0.0
    %1340 = vmatpush1.msra.mxu0 0.0
    %1341 = vmatprep.subr.mxu0 0.0
    %1342 = vmatpush1.msra.mxu0 0.0
    %1343 = vmatprep.subr.mxu0 0.0
    %1344 = vmatpush1.msra.mxu0 0.0
    %1345 = vmatprep.subr.mxu0 0.0
    %1346 = vmatpush1.msra.mxu0 0.0
    %1347 = vmatprep.subr.mxu0 0.0
    %1348 = vmatpush1.msra.mxu0 0.0
    %1349 = vmatprep.subr.mxu0 0.0
    %1350 = vmatpush1.msra.mxu0 0.0
    %1351 = vmatprep.subr.mxu0 0.0
    %1352 = vmatpush1.msra.mxu0 0.0
    %1353 = vmatprep.subr.mxu0 0.0
    %1354 = vmatpush1.msra.mxu0 0.0
    %1355 = vmatprep.subr.mxu0 0.0
    %1356 = vmatpush1.msra.mxu0 0.0
    %1357 = vmatprep.subr.mxu0 0.0
    %1358 = vmatpush1.msra.mxu0 0.0
    %1359 = vmatprep.subr.mxu0 0.0
    %1360 = vmatpush1.msra.mxu0 0.0
    %1361 = vmatprep.subr.mxu0 0.0
    %1362 = vmatpush1.msra.mxu0 0.0
    %1363 = vmatprep.subr.mxu0 0.0
    %1364 = vmatpush1.msra.mxu0 0.0
    %1365 = vmatprep.subr.mxu0 0.0
    %1366 = vmatpush1.msra.mxu0 0.0
    %1367 = vmatprep.subr.mxu0 0.0
    %1368 = vmatpush1.msra.mxu0 0.0
    %1369 = vmatprep.subr.mxu0 0.0
    %1370 = vmatpush1.msra.mxu0 0.0
    %1371 = vmatprep.subr.mxu0 0.0
    %1372 = vmatpush1.msra.mxu0 0.0
    %1373 = vmatprep.subr.mxu0 0.0
    %1374 = vmatpush1.msra.mxu0 0.0
    %1375 = vmatprep.subr.mxu0 0.0
    %1376 = vmatpush1.msra.mxu0 0.0
    %1377 = vmatprep.subr.mxu0 0.0
    %1378 = vmatpush1.msra.mxu0 0.0
    %1379 = vmatprep.subr.mxu0 0.0
    %1380 = vmatpush1.msra.mxu0 0.0
    %1381 = vmatprep.subr.mxu0 0.0
    %1382 = vmatpush1.msra.mxu0 0.0
    %1383 = vmatprep.subr.mxu0 0.0
    %1384 = vmatpush1.msra.mxu0 0.0
    %1385 = vmatprep.subr.mxu0 0.0
    %1386 = vmatpush1.msra.mxu0 0.0
    %1387 = vmatprep.subr.mxu0 0.0
    %1388 = vmatpush1.msra.mxu0 0.0
    %1389 = vmatprep.mubr.f32.mxu0 0.0
    %1390 = vmatmul.mubr.f32.gmra.mrb[0].mxu0 %v1323
    %v1391 = vpop.f32.mrb[0].mxu0
    %v1392 = vadd.f32 %v103, %v1391
    %v1393 = vpop.f32.mrb[0].mxu0
    %1394 = vdwg.mxu0
    %v1395 = vsel %vm740, %v1249, 0
    %1397 = vmatprep.subr.bf16.mxu0 0
    %1398 = vmatpush1.bf16.msra.mxu0 %v66
    %1399 = vmatprep.subr.bf16.mxu0 0
    %1400 = vmatpush1.bf16.msra.mxu0 %v67
    %1401 = vmatprep.subr.bf16.mxu0 0
    %1402 = vmatpush1.bf16.msra.mxu0 0
    %1403 = vmatprep.subr.bf16.mxu0 0
    %1404 = vmatpush1.bf16.msra.mxu0 0
    %1405 = vmatprep.subr.bf16.mxu0 0
    %1406 = vmatpush1.bf16.msra.mxu0 0
    %1407 = vmatprep.subr.bf16.mxu0 0
    %1408 = vmatpush1.bf16.msra.mxu0 0
    %1409 = vmatprep.subr.bf16.mxu0 0
    %1410 = vmatpush1.bf16.msra.mxu0 0
    %1411 = vmatprep.subr.bf16.mxu0 0
    %1412 = vmatpush1.bf16.msra.mxu0 0
    %1413 = vmatprep.subr.bf16.mxu0 0
    %1414 = vmatpush1.bf16.msra.mxu0 0
    %1415 = vmatprep.subr.bf16.mxu0 0
    %1416 = vmatpush1.bf16.msra.mxu0 0
    %1417 = vmatprep.subr.bf16.mxu0 0
    %1418 = vmatpush1.bf16.msra.mxu0 0
    %1419 = vmatprep.subr.bf16.mxu0 0
    %1420 = vmatpush1.bf16.msra.mxu0 0
    %1421 = vmatprep.subr.bf16.mxu0 0
    %1422 = vmatpush1.bf16.msra.mxu0 0
    %1423 = vmatprep.subr.bf16.mxu0 0
    %1424 = vmatpush1.bf16.msra.mxu0 0
    %1425 = vmatprep.subr.bf16.mxu0 0
    %1426 = vmatpush1.bf16.msra.mxu0 0
    %1427 = vmatprep.subr.bf16.mxu0 0
    %1428 = vmatpush1.bf16.msra.mxu0 0
    %1429 = vmatprep.mubr.bf16.mxu0 0
    %1430 = vmatmul.mubr.bf16.gmra.mrb[0].mxu0 %v1395
    %v1431 = vpop.f32.mrb[0].mxu0
    %v1432 = vadd.f32 %v89, %v1431
    %v1433 = vpop.f32.mrb[0].mxu0
    %v1434 = vpop.f32.mrb[0].mxu0
    %v1435 = vpop.f32.mrb[0].mxu0
    %1436 = vdwg.mxu0
    %v1437 = vadd.f32 %v421, %v1432
    %v1438 = vxor.u32 %v1437, 2147483648
    %v1439 = vmul.f32 %v1438, 1.442695
    %v1440 = vpow.pop %v1439
    %v1441 = vadd.f32 %v1440, 1.0
    %v1442 = vrcp.pop %v1441
    %v1443 = vmul.f32 1.0, %v1442
    %1445 = vrot.lane.b32.xlu0 %v1432, 64
    %v1446 = vpop.permute.xlu0 %1445
    %v1448 = vmul.f32 %v1443, %v1446
    %1450 = vrot.lane.b32.xlu0 %v1448, 64
    %v1451 = vpop.permute.xlu0 %1450
    %v1453 = vadd.f32 %v421, %v1451
    %v1454 = vtanh.pop %v1453
    %v1455 = vsub.f32 1.0, %v1443
    %1457 = vrot.lane.b32.xlu0 %v1454, 96
    %v1458 = vpop.permute.xlu0 %1457
    %v1460 = vmul.f32 %v1455, %v1458
    %v1461 = vmul.f32 %v1443, %v1244
    %v1462 = vadd.f32 %v1460, %v1461
    %v1463 = vpack.c.bf16 %v1462, %v1462
    %v1464 = vpack.c.bf16 %v1319, %v1319
    %1466 = vrot.lane.b32.xlu0 %v1463, 96
    %v1467 = vpop.permute.xlu0 %1466
    %v1470 = vsel %vm740, %v1467, %v1464
    %v1471 = vsel %vm816, %v1470, 0
    %1473 = vmatprep.subr.bf16.mxu0 0
    %1474 = vmatpush1.bf16.msra.mxu0 %v76
    %1475 = vmatprep.subr.bf16.mxu0 0
    %1476 = vmatpush1.bf16.msra.mxu0 %v77
    %1477 = vmatprep.subr.bf16.mxu0 0
    %1478 = vmatpush1.bf16.msra.mxu0 %v78
    %1479 = vmatprep.subr.bf16.mxu0 0
    %1480 = vmatpush1.bf16.msra.mxu0 %v79
    %1481 = vmatprep.subr.bf16.mxu0 0
    %1482 = vmatpush1.bf16.msra.mxu0 0
    %1483 = vmatprep.subr.bf16.mxu0 0
    %1484 = vmatpush1.bf16.msra.mxu0 0
    %1485 = vmatprep.subr.bf16.mxu0 0
    %1486 = vmatpush1.bf16.msra.mxu0 0
    %1487 = vmatprep.subr.bf16.mxu0 0
    %1488 = vmatpush1.bf16.msra.mxu0 0
    %1489 = vmatprep.subr.bf16.mxu0 0
    %1490 = vmatpush1.bf16.msra.mxu0 0
    %1491 = vmatprep.subr.bf16.mxu0 0
    %1492 = vmatpush1.bf16.msra.mxu0 0
    %1493 = vmatprep.subr.bf16.mxu0 0
    %1494 = vmatpush1.bf16.msra.mxu0 0
    %1495 = vmatprep.subr.bf16.mxu0 0
    %1496 = vmatpush1.bf16.msra.mxu0 0
    %1497 = vmatprep.subr.bf16.mxu0 0
    %1498 = vmatpush1.bf16.msra.mxu0 0
    %1499 = vmatprep.subr.bf16.mxu0 0
    %1500 = vmatpush1.bf16.msra.mxu0 0
    %1501 = vmatprep.subr.bf16.mxu0 0
    %1502 = vmatpush1.bf16.msra.mxu0 0
    %1503 = vmatprep.subr.bf16.mxu0 0
    %1504 = vmatpush1.bf16.msra.mxu0 0
    %1505 = vmatprep.mubr.bf16.mxu0 0
    %1506 = vmatmul.mubr.bf16.gmra.mrb[0].mxu0 %v1471
    %v1507 = vpop.f32.mrb[0].mxu0
    %v1508 = vadd.f32 %v96, %v1507
    %v1509 = vpop.f32.mrb[0].mxu0
    %v1510 = vpop.f32.mrb[0].mxu0
    %v1511 = vpop.f32.mrb[0].mxu0
    %1512 = vdwg.mxu0
    %v1513 = vxor.u32 %v1508, 2147483648
    %v1514 = vmul.f32 %v1513, 1.442695
    %v1515 = vpow.pop %v1514
    %v1516 = vadd.f32 %v1515, 1.0
    %v1517 = vrcp.pop %v1516
    %v1518 = vmul.f32 1.0, %v1517
    %1520 = vrot.lane.b32.xlu0 %v1508, 32
    %v1521 = vpop.permute.xlu0 %1520
    %v1523 = vmul.f32 %v1518, %v1521
    %1525 = vrot.lane.b32.xlu0 %v1523, 64
    %v1526 = vpop.permute.xlu0 %1525
    %v1528 = vadd.f32 %v1508, %v1526
    %v1529 = vtanh.pop %v1528
    %v1530 = vsub.f32 1.0, %v1518
    %1532 = vrot.lane.b32.xlu0 %v1529, 96
    %v1533 = vpop.permute.xlu0 %1532
    %v1535 = vmul.f32 %v1530, %v1533
    %v1536 = vmul.f32 %v1518, %v1319
    %v1537 = vadd.f32 %v1535, %v1536
    %1539 = vrot.lane.b32.xlu0 %v1537, 96
    %v1540 = vpop.permute.xlu0 %1539
    %v1541 = vsel %vm740, %v1540, 0
    %1543 = vmatprep.subr.mxu0 0.0
    %1544 = vmatpush1.msra.mxu0 %v80
    %1545 = vmatprep.subr.mxu0 0.0
    %1546 = vmatpush1.msra.mxu0 %v81
    %1547 = vmatprep.subr.mxu0 0.0
    %1548 = vmatpush1.msra.mxu0 %v82
    %1549 = vmatprep.subr.mxu0 0.0
    %1550 = vmatpush1.msra.mxu0 %v83
    %1551 = vmatprep.subr.mxu0 0.0
    %1552 = vmatpush1.msra.mxu0 0.0
    %1553 = vmatprep.subr.mxu0 0.0
    %1554 = vmatpush1.msra.mxu0 0.0
    %1555 = vmatprep.subr.mxu0 0.0
    %1556 = vmatpush1.msra.mxu0 0.0
    %1557 = vmatprep.subr.mxu0 0.0
    %1558 = vmatpush1.msra.mxu0 0.0
    %1559 = vmatprep.subr.mxu0 0.0
    %1560 = vmatpush1.msra.mxu0 0.0
    %1561 = vmatprep.subr.mxu0 0.0
    %1562 = vmatpush1.msra.mxu0 0.0
    %1563 = vmatprep.subr.mxu0 0.0
    %1564 = vmatpush1.msra.mxu0 0.0
    %1565 = vmatprep.subr.mxu0 0.0
    %1566 = vmatpush1.msra.mxu0 0.0
    %1567 = vmatprep.subr.mxu0 0.0
    %1568 = vmatpush1.msra.mxu0 0.0
    %1569 = vmatprep.subr.mxu0 0.0
    %1570 = vmatpush1.msra.mxu0 0.0
    %1571 = vmatprep.subr.mxu0 0.0
    %1572 = vmatpush1.msra.mxu0 0.0
    %1573 = vmatprep.subr.mxu0 0.0
    %1574 = vmatpush1.msra.mxu0 0.0
    %1575 = vmatprep.subr.mxu0 0.0
    %1576 = vmatpush1.msra.mxu0 0.0
    %1577 = vmatprep.subr.mxu0 0.0
    %1578 = vmatpush1.msra.mxu0 0.0
    %1579 = vmatprep.subr.mxu0 0.0
    %1580 = vmatpush1.msra.mxu0 0.0
    %1581 = vmatprep.subr.mxu0 0.0
    %1582 = vmatpush1.msra.mxu0 0.0
    %1583 = vmatprep.subr.mxu0 0.0
    %1584 = vmatpush1.msra.mxu0 0.0
    %1585 = vmatprep.subr.mxu0 0.0
    %1586 = vmatpush1.msra.mxu0 0.0
    %1587 = vmatprep.subr.mxu0 0.0
    %1588 = vmatpush1.msra.mxu0 0.0
    %1589 = vmatprep.subr.mxu0 0.0
    %1590 = vmatpush1.msra.mxu0 0.0
    %1591 = vmatprep.subr.mxu0 0.0
    %1592 = vmatpush1.msra.mxu0 0.0
    %1593 = vmatprep.subr.mxu0 0.0
    %1594 = vmatpush1.msra.mxu0 0.0
    %1595 = vmatprep.subr.mxu0 0.0
    %1596 = vmatpush1.msra.mxu0 0.0
    %1597 = vmatprep.subr.mxu0 0.0
    %1598 = vmatpush1.msra.mxu0 0.0
    %1599 = vmatprep.subr.mxu0 0.0
    %1600 = vmatpush1.msra.mxu0 0.0
    %1601 = vmatprep.subr.mxu0 0.0
    %1602 = vmatpush1.msra.mxu0 0.0
    %1603 = vmatprep.subr.mxu0 0.0
    %1604 = vmatpush1.msra.mxu0 0.0
    %1605 = vmatprep.subr.mxu0 0.0
    %1606 = vmatpush1.msra.mxu0 0.0
    %1607 = vmatprep.mubr.f32.mxu0 0.0
    %1608 = vmatmul.mubr.f32.gmra.mrb[0].mxu0 %v1541
    %v1609 = vpop.f32.mrb[0].mxu0
    %v1610 = vadd.f32 %v103, %v1609
    %v1611 = vpop.f32.mrb[0].mxu0
    %1612 = vdwg.mxu0
    %v1613 = vsel %vm740, %v1467, 0
    %1615 = vmatprep.subr.bf16.mxu0 0
    %1616 = vmatpush1.bf16.msra.mxu0 %v66
    %1617 = vmatprep.subr.bf16.mxu0 0
    %1618 = vmatpush1.bf16.msra.mxu0 %v67
    %1619 = vmatprep.subr.bf16.mxu0 0
    %1620 = vmatpush1.bf16.msra.mxu0 0
    %1621 = vmatprep.subr.bf16.mxu0 0
    %1622 = vmatpush1.bf16.msra.mxu0 0
    %1623 = vmatprep.subr.bf16.mxu0 0
    %1624 = vmatpush1.bf16.msra.mxu0 0
    %1625 = vmatprep.subr.bf16.mxu0 0
    %1626 = vmatpush1.bf16.msra.mxu0 0
    %1627 = vmatprep.subr.bf16.mxu0 0
    %1628 = vmatpush1.bf16.msra.mxu0 0
    %1629 = vmatprep.subr.bf16.mxu0 0
    %1630 = vmatpush1.bf16.msra.mxu0 0
    %1631 = vmatprep.subr.bf16.mxu0 0
    %1632 = vmatpush1.bf16.msra.mxu0 0
    %1633 = vmatprep.subr.bf16.mxu0 0
    %1634 = vmatpush1.bf16.msra.mxu0 0
    %1635 = vmatprep.subr.bf16.mxu0 0
    %1636 = vmatpush1.bf16.msra.mxu0 0
    %1637 = vmatprep.subr.bf16.mxu0 0
    %1638 = vmatpush1.bf16.msra.mxu0 0
    %1639 = vmatprep.subr.bf16.mxu0 0
    %1640 = vmatpush1.bf16.msra.mxu0 0
    %1641 = vmatprep.subr.bf16.mxu0 0
    %1642 = vmatpush1.bf16.msra.mxu0 0
    %1643 = vmatprep.subr.bf16.mxu0 0
    %1644 = vmatpush1.bf16.msra.mxu0 0
    %1645 = vmatprep.subr.bf16.mxu0 0
    %1646 = vmatpush1.bf16.msra.mxu0 0
    %1647 = vmatprep.mubr.bf16.mxu0 0
    %1648 = vmatmul.mubr.bf16.gmra.mrb[0].mxu0 %v1613
    %v1649 = vpop.f32.mrb[0].mxu0
    %v1650 = vadd.f32 %v89, %v1649
    %v1651 = vpop.f32.mrb[0].mxu0
    %v1652 = vpop.f32.mrb[0].mxu0
    %v1653 = vpop.f32.mrb[0].mxu0
    %1654 = vdwg.mxu0
    %v1655 = vadd.f32 %v500, %v1650
    %v1656 = vxor.u32 %v1655, 2147483648
    %v1657 = vmul.f32 %v1656, 1.442695
    %v1658 = vpow.pop %v1657
    %v1659 = vadd.f32 %v1658, 1.0
    %v1660 = vrcp.pop %v1659
    %v1661 = vmul.f32 1.0, %v1660
    %1663 = vrot.lane.b32.xlu0 %v1650, 64
    %v1664 = vpop.permute.xlu0 %1663
    %v1666 = vmul.f32 %v1661, %v1664
    %1668 = vrot.lane.b32.xlu0 %v1666, 64
    %v1669 = vpop.permute.xlu0 %1668
    %v1671 = vadd.f32 %v500, %v1669
    %v1672 = vtanh.pop %v1671
    %v1673 = vsub.f32 1.0, %v1661
    %1675 = vrot.lane.b32.xlu0 %v1672, 96
    %v1676 = vpop.permute.xlu0 %1675
    %v1678 = vmul.f32 %v1673, %v1676
    %v1679 = vmul.f32 %v1661, %v1462
    %v1680 = vadd.f32 %v1678, %v1679
    %v1681 = vpack.c.bf16 %v1680, %v1680
    %v1682 = vpack.c.bf16 %v1537, %v1537
    %1684 = vrot.lane.b32.xlu0 %v1681, 96
    %v1685 = vpop.permute.xlu0 %1684
    %v1688 = vsel %vm740, %v1685, %v1682
    %v1689 = vsel %vm816, %v1688, 0
    %1691 = vmatprep.subr.bf16.mxu0 0
    %1692 = vmatpush1.bf16.msra.mxu0 %v76
    %1693 = vmatprep.subr.bf16.mxu0 0
    %1694 = vmatpush1.bf16.msra.mxu0 %v77
    %1695 = vmatprep.subr.bf16.mxu0 0
    %1696 = vmatpush1.bf16.msra.mxu0 %v78
    %1697 = vmatprep.subr.bf16.mxu0 0
    %1698 = vmatpush1.bf16.msra.mxu0 %v79
    %1699 = vmatprep.subr.bf16.mxu0 0
    %1700 = vmatpush1.bf16.msra.mxu0 0
    %1701 = vmatprep.subr.bf16.mxu0 0
    %1702 = vmatpush1.bf16.msra.mxu0 0
    %1703 = vmatprep.subr.bf16.mxu0 0
    %1704 = vmatpush1.bf16.msra.mxu0 0
    %1705 = vmatprep.subr.bf16.mxu0 0
    %1706 = vmatpush1.bf16.msra.mxu0 0
    %1707 = vmatprep.subr.bf16.mxu0 0
    %1708 = vmatpush1.bf16.msra.mxu0 0
    %1709 = vmatprep.subr.bf16.mxu0 0
    %1710 = vmatpush1.bf16.msra.mxu0 0
    %1711 = vmatprep.subr.bf16.mxu0 0
    %1712 = vmatpush1.bf16.msra.mxu0 0
    %1713 = vmatprep.subr.bf16.mxu0 0
    %1714 = vmatpush1.bf16.msra.mxu0 0
    %1715 = vmatprep.subr.bf16.mxu0 0
    %1716 = vmatpush1.bf16.msra.mxu0 0
    %1717 = vmatprep.subr.bf16.mxu0 0
    %1718 = vmatpush1.bf16.msra.mxu0 0
    %1719 = vmatprep.subr.bf16.mxu0 0
    %1720 = vmatpush1.bf16.msra.mxu0 0
    %1721 = vmatprep.subr.bf16.mxu0 0
    %1722 = vmatpush1.bf16.msra.mxu0 0
    %1723 = vmatprep.mubr.bf16.mxu0 0
    %1724 = vmatmul.mubr.bf16.gmra.mrb[0].mxu0 %v1689
    %v1725 = vpop.f32.mrb[0].mxu0
    %v1726 = vadd.f32 %v96, %v1725
    %v1727 = vpop.f32.mrb[0].mxu0
    %v1728 = vpop.f32.mrb[0].mxu0
    %v1729 = vpop.f32.mrb[0].mxu0
    %1730 = vdwg.mxu0
    %v1731 = vxor.u32 %v1726, 2147483648
    %v1732 = vmul.f32 %v1731, 1.442695
    %v1733 = vpow.pop %v1732
    %v1734 = vadd.f32 %v1733, 1.0
    %v1735 = vrcp.pop %v1734
    %v1736 = vmul.f32 1.0, %v1735
    %1738 = vrot.lane.b32.xlu0 %v1726, 32
    %v1739 = vpop.permute.xlu0 %1738
    %v1741 = vmul.f32 %v1736, %v1739
    %1743 = vrot.lane.b32.xlu0 %v1741, 64
    %v1744 = vpop.permute.xlu0 %1743
    %v1746 = vadd.f32 %v1726, %v1744
    %v1747 = vtanh.pop %v1746
    %v1748 = vsub.f32 1.0, %v1736
    %1750 = vrot.lane.b32.xlu0 %v1747, 96
    %v1751 = vpop.permute.xlu0 %1750
    %v1753 = vmul.f32 %v1748, %v1751
    %v1754 = vmul.f32 %v1736, %v1537
    %v1755 = vadd.f32 %v1753, %v1754
    %1757 = vrot.lane.b32.xlu0 %v1755, 96
    %v1758 = vpop.permute.xlu0 %1757
    %v1759 = vsel %vm740, %v1758, 0
    %1761 = vmatprep.subr.mxu0 0.0
    %1762 = vmatpush1.msra.mxu0 %v80
    %1763 = vmatprep.subr.mxu0 0.0
    %1764 = vmatpush1.msra.mxu0 %v81
    %1765 = vmatprep.subr.mxu0 0.0
    %1766 = vmatpush1.msra.mxu0 %v82
    %1767 = vmatprep.subr.mxu0 0.0
    %1768 = vmatpush1.msra.mxu0 %v83
    %1769 = vmatprep.subr.mxu0 0.0
    %1770 = vmatpush1.msra.mxu0 0.0
    %1771 = vmatprep.subr.mxu0 0.0
    %1772 = vmatpush1.msra.mxu0 0.0
    %1773 = vmatprep.subr.mxu0 0.0
    %1774 = vmatpush1.msra.mxu0 0.0
    %1775 = vmatprep.subr.mxu0 0.0
    %1776 = vmatpush1.msra.mxu0 0.0
    %1777 = vmatprep.subr.mxu0 0.0
    %1778 = vmatpush1.msra.mxu0 0.0
    %1779 = vmatprep.subr.mxu0 0.0
    %1780 = vmatpush1.msra.mxu0 0.0
    %1781 = vmatprep.subr.mxu0 0.0
    %1782 = vmatpush1.msra.mxu0 0.0
    %1783 = vmatprep.subr.mxu0 0.0
    %1784 = vmatpush1.msra.mxu0 0.0
    %1785 = vmatprep.subr.mxu0 0.0
    %1786 = vmatpush1.msra.mxu0 0.0
    %1787 = vmatprep.subr.mxu0 0.0
    %1788 = vmatpush1.msra.mxu0 0.0
    %1789 = vmatprep.subr.mxu0 0.0
    %1790 = vmatpush1.msra.mxu0 0.0
    %1791 = vmatprep.subr.mxu0 0.0
    %1792 = vmatpush1.msra.mxu0 0.0
    %1793 = vmatprep.subr.mxu0 0.0
    %1794 = vmatpush1.msra.mxu0 0.0
    %1795 = vmatprep.subr.mxu0 0.0
    %1796 = vmatpush1.msra.mxu0 0.0
    %1797 = vmatprep.subr.mxu0 0.0
    %1798 = vmatpush1.msra.mxu0 0.0
    %1799 = vmatprep.subr.mxu0 0.0
    %1800 = vmatpush1.msra.mxu0 0.0
    %1801 = vmatprep.subr.mxu0 0.0
    %1802 = vmatpush1.msra.mxu0 0.0
    %1803 = vmatprep.subr.mxu0 0.0
    %1804 = vmatpush1.msra.mxu0 0.0
    %1805 = vmatprep.subr.mxu0 0.0
    %1806 = vmatpush1.msra.mxu0 0.0
    %1807 = vmatprep.subr.mxu0 0.0
    %1808 = vmatpush1.msra.mxu0 0.0
    %1809 = vmatprep.subr.mxu0 0.0
    %1810 = vmatpush1.msra.mxu0 0.0
    %1811 = vmatprep.subr.mxu0 0.0
    %1812 = vmatpush1.msra.mxu0 0.0
    %1813 = vmatprep.subr.mxu0 0.0
    %1814 = vmatpush1.msra.mxu0 0.0
    %1815 = vmatprep.subr.mxu0 0.0
    %1816 = vmatpush1.msra.mxu0 0.0
    %1817 = vmatprep.subr.mxu0 0.0
    %1818 = vmatpush1.msra.mxu0 0.0
    %1819 = vmatprep.subr.mxu0 0.0
    %1820 = vmatpush1.msra.mxu0 0.0
    %1821 = vmatprep.subr.mxu0 0.0
    %1822 = vmatpush1.msra.mxu0 0.0
    %1823 = vmatprep.subr.mxu0 0.0
    %1824 = vmatpush1.msra.mxu0 0.0
    %1825 = vmatprep.mubr.f32.mxu0 0.0
    %1826 = vmatmul.mubr.f32.gmra.mrb[0].mxu0 %v1759
    %v1827 = vpop.f32.mrb[0].mxu0
    %v1828 = vadd.f32 %v103, %v1827
    %v1829 = vpop.f32.mrb[0].mxu0
    %1830 = vdwg.mxu0
    %v1831 = vsel %vm740, %v1685, 0
    %1833 = vmatprep.subr.bf16.mxu0 0
    %1834 = vmatpush1.bf16.msra.mxu0 %v66
    %1835 = vmatprep.subr.bf16.mxu0 0
    %1836 = vmatpush1.bf16.msra.mxu0 %v67
    %1837 = vmatprep.subr.bf16.mxu0 0
    %1838 = vmatpush1.bf16.msra.mxu0 0
    %1839 = vmatprep.subr.bf16.mxu0 0
    %1840 = vmatpush1.bf16.msra.mxu0 0
    %1841 = vmatprep.subr.bf16.mxu0 0
    %1842 = vmatpush1.bf16.msra.mxu0 0
    %1843 = vmatprep.subr.bf16.mxu0 0
    %1844 = vmatpush1.bf16.msra.mxu0 0
    %1845 = vmatprep.subr.bf16.mxu0 0
    %1846 = vmatpush1.bf16.msra.mxu0 0
    %1847 = vmatprep.subr.bf16.mxu0 0
    %1848 = vmatpush1.bf16.msra.mxu0 0
    %1849 = vmatprep.subr.bf16.mxu0 0
    %1850 = vmatpush1.bf16.msra.mxu0 0
    %1851 = vmatprep.subr.bf16.mxu0 0
    %1852 = vmatpush1.bf16.msra.mxu0 0
    %1853 = vmatprep.subr.bf16.mxu0 0
    %1854 = vmatpush1.bf16.msra.mxu0 0
    %1855 = vmatprep.subr.bf16.mxu0 0
    %1856 = vmatpush1.bf16.msra.mxu0 0
    %1857 = vmatprep.subr.bf16.mxu0 0
    %1858 = vmatpush1.bf16.msra.mxu0 0
    %1859 = vmatprep.subr.bf16.mxu0 0
    %1860 = vmatpush1.bf16.msra.mxu0 0
    %1861 = vmatprep.subr.bf16.mxu0 0
    %1862 = vmatpush1.bf16.msra.mxu0 0
    %1863 = vmatprep.subr.bf16.mxu0 0
    %1864 = vmatpush1.bf16.msra.mxu0 0
    %1865 = vmatprep.mubr.bf16.mxu0 0
    %1866 = vmatmul.mubr.bf16.gmra.mrb[0].mxu0 %v1831
    %v1867 = vpop.f32.mrb[0].mxu0
    %v1868 = vadd.f32 %v89, %v1867
    %v1869 = vpop.f32.mrb[0].mxu0
    %v1870 = vpop.f32.mrb[0].mxu0
    %v1871 = vpop.f32.mrb[0].mxu0
    %1872 = vdwg.mxu0
    %v1873 = vadd.f32 %v579, %v1868
    %v1874 = vxor.u32 %v1873, 2147483648
    %v1875 = vmul.f32 %v1874, 1.442695
    %v1876 = vpow.pop %v1875
    %v1877 = vadd.f32 %v1876, 1.0
    %v1878 = vrcp.pop %v1877
    %v1879 = vmul.f32 1.0, %v1878
    %1881 = vrot.lane.b32.xlu0 %v1868, 64
    %v1882 = vpop.permute.xlu0 %1881
    %v1884 = vmul.f32 %v1879, %v1882
    %1886 = vrot.lane.b32.xlu0 %v1884, 64
    %v1887 = vpop.permute.xlu0 %1886
    %v1889 = vadd.f32 %v579, %v1887
    %v1890 = vtanh.pop %v1889
    %v1891 = vsub.f32 1.0, %v1879
    %1893 = vrot.lane.b32.xlu0 %v1890, 96
    %v1894 = vpop.permute.xlu0 %1893
    %v1896 = vmul.f32 %v1891, %v1894
    %v1897 = vmul.f32 %v1879, %v1680
    %v1898 = vadd.f32 %v1896, %v1897
    %v1899 = vpack.c.bf16 %v1898, %v1898
    %v1900 = vpack.c.bf16 %v1755, %v1755
    %1902 = vrot.lane.b32.xlu0 %v1899, 96
    %v1903 = vpop.permute.xlu0 %1902
    %v1906 = vsel %vm740, %v1903, %v1900
    %v1907 = vsel %vm816, %v1906, 0
    %1909 = vmatprep.subr.bf16.mxu0 0
    %1910 = vmatpush1.bf16.msra.mxu0 %v76
    %1911 = vmatprep.subr.bf16.mxu0 0
    %1912 = vmatpush1.bf16.msra.mxu0 %v77
    %1913 = vmatprep.subr.bf16.mxu0 0
    %1914 = vmatpush1.bf16.msra.mxu0 %v78
    %1915 = vmatprep.subr.bf16.mxu0 0
    %1916 = vmatpush1.bf16.msra.mxu0 %v79
    %1917 = vmatprep.subr.bf16.mxu0 0
    %1918 = vmatpush1.bf16.msra.mxu0 0
    %1919 = vmatprep.subr.bf16.mxu0 0
    %1920 = vmatpush1.bf16.msra.mxu0 0
    %1921 = vmatprep.subr.bf16.mxu0 0
    %1922 = vmatpush1.bf16.msra.mxu0 0
    %1923 = vmatprep.subr.bf16.mxu0 0
    %1924 = vmatpush1.bf16.msra.mxu0 0
    %1925 = vmatprep.subr.bf16.mxu0 0
    %1926 = vmatpush1.bf16.msra.mxu0 0
    %1927 = vmatprep.subr.bf16.mxu0 0
    %1928 = vmatpush1.bf16.msra.mxu0 0
    %1929 = vmatprep.subr.bf16.mxu0 0
    %1930 = vmatpush1.bf16.msra.mxu0 0
    %1931 = vmatprep.subr.bf16.mxu0 0
    %1932 = vmatpush1.bf16.msra.mxu0 0
    %1933 = vmatprep.subr.bf16.mxu0 0
    %1934 = vmatpush1.bf16.msra.mxu0 0
    %1935 = vmatprep.subr.bf16.mxu0 0
    %1936 = vmatpush1.bf16.msra.mxu0 0
    %1937 = vmatprep.subr.bf16.mxu0 0
    %1938 = vmatpush1.bf16.msra.mxu0 0
    %1939 = vmatprep.subr.bf16.mxu0 0
    %1940 = vmatpush1.bf16.msra.mxu0 0
    %1941 = vmatprep.mubr.bf16.mxu0 0
    %1942 = vmatmul.mubr.bf16.gmra.mrb[0].mxu0 %v1907
    %v1943 = vpop.f32.mrb[0].mxu0
    %v1944 = vadd.f32 %v96, %v1943
    %v1945 = vpop.f32.mrb[0].mxu0
    %v1946 = vpop.f32.mrb[0].mxu0
    %v1947 = vpop.f32.mrb[0].mxu0
    %1948 = vdwg.mxu0
    %v1949 = vxor.u32 %v1944, 2147483648
    %v1950 = vmul.f32 %v1949, 1.442695
    %v1951 = vpow.pop %v1950
    %v1952 = vadd.f32 %v1951, 1.0
    %v1953 = vrcp.pop %v1952
    %v1954 = vmul.f32 1.0, %v1953
    %1956 = vrot.lane.b32.xlu0 %v1944, 32
    %v1957 = vpop.permute.xlu0 %1956
    %v1959 = vmul.f32 %v1954, %v1957
    %1961 = vrot.lane.b32.xlu0 %v1959, 64
    %v1962 = vpop.permute.xlu0 %1961
    %v1964 = vadd.f32 %v1944, %v1962
    %v1965 = vtanh.pop %v1964
    %v1966 = vsub.f32 1.0, %v1954
    %1968 = vrot.lane.b32.xlu0 %v1965, 96
    %v1969 = vpop.permute.xlu0 %1968
    %v1971 = vmul.f32 %v1966, %v1969
    %v1972 = vmul.f32 %v1954, %v1755
    %v1973 = vadd.f32 %v1971, %v1972
    %1975 = vrot.lane.b32.xlu0 %v1973, 96
    %v1976 = vpop.permute.xlu0 %1975
    %v1977 = vsel %vm740, %v1976, 0
    %1979 = vmatprep.subr.mxu0 0.0
    %1980 = vmatpush1.msra.mxu0 %v80
    %1981 = vmatprep.subr.mxu0 0.0
    %1982 = vmatpush1.msra.mxu0 %v81
    %1983 = vmatprep.subr.mxu0 0.0
    %1984 = vmatpush1.msra.mxu0 %v82
    %1985 = vmatprep.subr.mxu0 0.0
    %1986 = vmatpush1.msra.mxu0 %v83
    %1987 = vmatprep.subr.mxu0 0.0
    %1988 = vmatpush1.msra.mxu0 0.0
    %1989 = vmatprep.subr.mxu0 0.0
    %1990 = vmatpush1.msra.mxu0 0.0
    %1991 = vmatprep.subr.mxu0 0.0
    %1992 = vmatpush1.msra.mxu0 0.0
    %1993 = vmatprep.subr.mxu0 0.0
    %1994 = vmatpush1.msra.mxu0 0.0
    %1995 = vmatprep.subr.mxu0 0.0
    %1996 = vmatpush1.msra.mxu0 0.0
    %1997 = vmatprep.subr.mxu0 0.0
    %1998 = vmatpush1.msra.mxu0 0.0
    %1999 = vmatprep.subr.mxu0 0.0
    %2000 = vmatpush1.msra.mxu0 0.0
    %2001 = vmatprep.subr.mxu0 0.0
    %2002 = vmatpush1.msra.mxu0 0.0
    %2003 = vmatprep.subr.mxu0 0.0
    %2004 = vmatpush1.msra.mxu0 0.0
    %2005 = vmatprep.subr.mxu0 0.0
    %2006 = vmatpush1.msra.mxu0 0.0
    %2007 = vmatprep.subr.mxu0 0.0
    %2008 = vmatpush1.msra.mxu0 0.0
    %2009 = vmatprep.subr.mxu0 0.0
    %2010 = vmatpush1.msra.mxu0 0.0
    %2011 = vmatprep.subr.mxu0 0.0
    %2012 = vmatpush1.msra.mxu0 0.0
    %2013 = vmatprep.subr.mxu0 0.0
    %2014 = vmatpush1.msra.mxu0 0.0
    %2015 = vmatprep.subr.mxu0 0.0
    %2016 = vmatpush1.msra.mxu0 0.0
    %2017 = vmatprep.subr.mxu0 0.0
    %2018 = vmatpush1.msra.mxu0 0.0
    %2019 = vmatprep.subr.mxu0 0.0
    %2020 = vmatpush1.msra.mxu0 0.0
    %2021 = vmatprep.subr.mxu0 0.0
    %2022 = vmatpush1.msra.mxu0 0.0
    %2023 = vmatprep.subr.mxu0 0.0
    %2024 = vmatpush1.msra.mxu0 0.0
    %2025 = vmatprep.subr.mxu0 0.0
    %2026 = vmatpush1.msra.mxu0 0.0
    %2027 = vmatprep.subr.mxu0 0.0
    %2028 = vmatpush1.msra.mxu0 0.0
    %2029 = vmatprep.subr.mxu0 0.0
    %2030 = vmatpush1.msra.mxu0 0.0
    %2031 = vmatprep.subr.mxu0 0.0
    %2032 = vmatpush1.msra.mxu0 0.0
    %2033 = vmatprep.subr.mxu0 0.0
    %2034 = vmatpush1.msra.mxu0 0.0
    %2035 = vmatprep.subr.mxu0 0.0
    %2036 = vmatpush1.msra.mxu0 0.0
    %2037 = vmatprep.subr.mxu0 0.0
    %2038 = vmatpush1.msra.mxu0 0.0
    %2039 = vmatprep.subr.mxu0 0.0
    %2040 = vmatpush1.msra.mxu0 0.0
    %2041 = vmatprep.subr.mxu0 0.0
    %2042 = vmatpush1.msra.mxu0 0.0
    %2043 = vmatprep.mubr.f32.mxu0 0.0
    %2044 = vmatmul.mubr.f32.gmra.mrb[0].mxu0 %v1977
    %v2045 = vpop.f32.mrb[0].mxu0
    %v2046 = vadd.f32 %v103, %v2045
    %v2047 = vpop.f32.mrb[0].mxu0
    %2048 = vdwg.mxu0
    %v2049 = vsel %vm740, %v1903, 0
    %2051 = vmatprep.subr.bf16.mxu0 0
    %2052 = vmatpush1.bf16.msra.mxu0 %v66
    %2053 = vmatprep.subr.bf16.mxu0 0
    %2054 = vmatpush1.bf16.msra.mxu0 %v67
    %2055 = vmatprep.subr.bf16.mxu0 0
    %2056 = vmatpush1.bf16.msra.mxu0 0
    %2057 = vmatprep.subr.bf16.mxu0 0
    %2058 = vmatpush1.bf16.msra.mxu0 0
    %2059 = vmatprep.subr.bf16.mxu0 0
    %2060 = vmatpush1.bf16.msra.mxu0 0
    %2061 = vmatprep.subr.bf16.mxu0 0
    %2062 = vmatpush1.bf16.msra.mxu0 0
    %2063 = vmatprep.subr.bf16.mxu0 0
    %2064 = vmatpush1.bf16.msra.mxu0 0
    %2065 = vmatprep.subr.bf16.mxu0 0
    %2066 = vmatpush1.bf16.msra.mxu0 0
    %2067 = vmatprep.subr.bf16.mxu0 0
    %2068 = vmatpush1.bf16.msra.mxu0 0
    %2069 = vmatprep.subr.bf16.mxu0 0
    %2070 = vmatpush1.bf16.msra.mxu0 0
    %2071 = vmatprep.subr.bf16.mxu0 0
    %2072 = vmatpush1.bf16.msra.mxu0 0
    %2073 = vmatprep.subr.bf16.mxu0 0
    %2074 = vmatpush1.bf16.msra.mxu0 0
    %2075 = vmatprep.subr.bf16.mxu0 0
    %2076 = vmatpush1.bf16.msra.mxu0 0
    %2077 = vmatprep.subr.bf16.mxu0 0
    %2078 = vmatpush1.bf16.msra.mxu0 0
    %2079 = vmatprep.subr.bf16.mxu0 0
    %2080 = vmatpush1.bf16.msra.mxu0 0
    %2081 = vmatprep.subr.bf16.mxu0 0
    %2082 = vmatpush1.bf16.msra.mxu0 0
    %2083 = vmatprep.mubr.bf16.mxu0 0
    %2084 = vmatmul.mubr.bf16.gmra.mrb[0].mxu0 %v2049
    %v2085 = vpop.f32.mrb[0].mxu0
    %v2086 = vadd.f32 %v89, %v2085
    %v2087 = vpop.f32.mrb[0].mxu0
    %v2088 = vpop.f32.mrb[0].mxu0
    %v2089 = vpop.f32.mrb[0].mxu0
    %2090 = vdwg.mxu0
    %v2091 = vadd.f32 %v658, %v2086
    %v2092 = vxor.u32 %v2091, 2147483648
    %v2093 = vmul.f32 %v2092, 1.442695
    %v2094 = vpow.pop %v2093
    %v2095 = vadd.f32 %v2094, 1.0
    %v2096 = vrcp.pop %v2095
    %v2097 = vmul.f32 1.0, %v2096
    %2099 = vrot.lane.b32.xlu0 %v2086, 64
    %v2100 = vpop.permute.xlu0 %2099
    %v2102 = vmul.f32 %v2097, %v2100
    %2104 = vrot.lane.b32.xlu0 %v2102, 64
    %v2105 = vpop.permute.xlu0 %2104
    %v2107 = vadd.f32 %v658, %v2105
    %v2108 = vtanh.pop %v2107
    %v2109 = vsub.f32 1.0, %v2097
    %2111 = vrot.lane.b32.xlu0 %v2108, 96
    %v2112 = vpop.permute.xlu0 %2111
    %v2114 = vmul.f32 %v2109, %v2112
    %v2115 = vmul.f32 %v2097, %v1898
    %v2116 = vadd.f32 %v2114, %v2115
    %v2117 = vpack.c.bf16 %v2116, %v2116
    %v2118 = vpack.c.bf16 %v1973, %v1973
    %2120 = vrot.lane.b32.xlu0 %v2117, 96
    %v2121 = vpop.permute.xlu0 %2120
    %v2124 = vsel %vm740, %v2121, %v2118
    %v2125 = vsel %vm816, %v2124, 0
    %2127 = vmatprep.subr.bf16.mxu0 0
    %2128 = vmatpush1.bf16.msra.mxu0 %v76
    %2129 = vmatprep.subr.bf16.mxu0 0
    %2130 = vmatpush1.bf16.msra.mxu0 %v77
    %2131 = vmatprep.subr.bf16.mxu0 0
    %2132 = vmatpush1.bf16.msra.mxu0 %v78
    %2133 = vmatprep.subr.bf16.mxu0 0
    %2134 = vmatpush1.bf16.msra.mxu0 %v79
    %2135 = vmatprep.subr.bf16.mxu0 0
    %2136 = vmatpush1.bf16.msra.mxu0 0
    %2137 = vmatprep.subr.bf16.mxu0 0
    %2138 = vmatpush1.bf16.msra.mxu0 0
    %2139 = vmatprep.subr.bf16.mxu0 0
    %2140 = vmatpush1.bf16.msra.mxu0 0
    %2141 = vmatprep.subr.bf16.mxu0 0
    %2142 = vmatpush1.bf16.msra.mxu0 0
    %2143 = vmatprep.subr.bf16.mxu0 0
    %2144 = vmatpush1.bf16.msra.mxu0 0
    %2145 = vmatprep.subr.bf16.mxu0 0
    %2146 = vmatpush1.bf16.msra.mxu0 0
    %2147 = vmatprep.subr.bf16.mxu0 0
    %2148 = vmatpush1.bf16.msra.mxu0 0
    %2149 = vmatprep.subr.bf16.mxu0 0
    %2150 = vmatpush1.bf16.msra.mxu0 0
    %2151 = vmatprep.subr.bf16.mxu0 0
    %2152 = vmatpush1.bf16.msra.mxu0 0
    %2153 = vmatprep.subr.bf16.mxu0 0
    %2154 = vmatpush1.bf16.msra.mxu0 0
    %2155 = vmatprep.subr.bf16.mxu0 0
    %2156 = vmatpush1.bf16.msra.mxu0 0
    %2157 = vmatprep.subr.bf16.mxu0 0
    %2158 = vmatpush1.bf16.msra.mxu0 0
    %2159 = vmatprep.mubr.bf16.mxu0 0
    %2160 = vmatmul.mubr.bf16.gmra.mrb[0].mxu0 %v2125
    %v2161 = vpop.f32.mrb[0].mxu0
    %v2162 = vadd.f32 %v96, %v2161
    %v2163 = vpop.f32.mrb[0].mxu0
    %v2164 = vpop.f32.mrb[0].mxu0
    %v2165 = vpop.f32.mrb[0].mxu0
    %2166 = vdwg.mxu0
    %v2167 = vxor.u32 %v2162, 2147483648
    %v2168 = vmul.f32 %v2167, 1.442695
    %v2169 = vpow.pop %v2168
    %v2170 = vadd.f32 %v2169, 1.0
    %v2171 = vrcp.pop %v2170
    %v2172 = vmul.f32 1.0, %v2171
    %2174 = vrot.lane.b32.xlu0 %v2162, 32
    %v2175 = vpop.permute.xlu0 %2174
    %v2177 = vmul.f32 %v2172, %v2175
    %2179 = vrot.lane.b32.xlu0 %v2177, 64
    %v2180 = vpop.permute.xlu0 %2179
    %v2182 = vadd.f32 %v2162, %v2180
    %v2183 = vtanh.pop %v2182
    %v2184 = vsub.f32 1.0, %v2172
    %2186 = vrot.lane.b32.xlu0 %v2183, 96
    %v2187 = vpop.permute.xlu0 %2186
    %v2189 = vmul.f32 %v2184, %v2187
    %v2190 = vmul.f32 %v2172, %v1973
    %v2191 = vadd.f32 %v2189, %v2190
    %2193 = vrot.lane.b32.xlu0 %v2191, 96
    %v2194 = vpop.permute.xlu0 %2193
    %v2195 = vsel %vm740, %v2194, 0
    %2197 = vmatprep.subr.mxu0 0.0
    %2198 = vmatpush1.msra.mxu0 %v80
    %2199 = vmatprep.subr.mxu0 0.0
    %2200 = vmatpush1.msra.mxu0 %v81
    %2201 = vmatprep.subr.mxu0 0.0
    %2202 = vmatpush1.msra.mxu0 %v82
    %2203 = vmatprep.subr.mxu0 0.0
    %2204 = vmatpush1.msra.mxu0 %v83
    %2205 = vmatprep.subr.mxu0 0.0
    %2206 = vmatpush1.msra.mxu0 0.0
    %2207 = vmatprep.subr.mxu0 0.0
    %2208 = vmatpush1.msra.mxu0 0.0
    %2209 = vmatprep.subr.mxu0 0.0
    %2210 = vmatpush1.msra.mxu0 0.0
    %2211 = vmatprep.subr.mxu0 0.0
    %2212 = vmatpush1.msra.mxu0 0.0
    %2213 = vmatprep.subr.mxu0 0.0
    %2214 = vmatpush1.msra.mxu0 0.0
    %2215 = vmatprep.subr.mxu0 0.0
    %2216 = vmatpush1.msra.mxu0 0.0
    %2217 = vmatprep.subr.mxu0 0.0
    %2218 = vmatpush1.msra.mxu0 0.0
    %2219 = vmatprep.subr.mxu0 0.0
    %2220 = vmatpush1.msra.mxu0 0.0
    %2221 = vmatprep.subr.mxu0 0.0
    %2222 = vmatpush1.msra.mxu0 0.0
    %2223 = vmatprep.subr.mxu0 0.0
    %2224 = vmatpush1.msra.mxu0 0.0
    %2225 = vmatprep.subr.mxu0 0.0
    %2226 = vmatpush1.msra.mxu0 0.0
    %2227 = vmatprep.subr.mxu0 0.0
    %2228 = vmatpush1.msra.mxu0 0.0
    %2229 = vmatprep.subr.mxu0 0.0
    %2230 = vmatpush1.msra.mxu0 0.0
    %2231 = vmatprep.subr.mxu0 0.0
    %2232 = vmatpush1.msra.mxu0 0.0
    %2233 = vmatprep.subr.mxu0 0.0
    %2234 = vmatpush1.msra.mxu0 0.0
    %2235 = vmatprep.subr.mxu0 0.0
    %2236 = vmatpush1.msra.mxu0 0.0
    %2237 = vmatprep.subr.mxu0 0.0
    %2238 = vmatpush1.msra.mxu0 0.0
    %2239 = vmatprep.subr.mxu0 0.0
    %2240 = vmatpush1.msra.mxu0 0.0
    %2241 = vmatprep.subr.mxu0 0.0
    %2242 = vmatpush1.msra.mxu0 0.0
    %2243 = vmatprep.subr.mxu0 0.0
    %2244 = vmatpush1.msra.mxu0 0.0
    %2245 = vmatprep.subr.mxu0 0.0
    %2246 = vmatpush1.msra.mxu0 0.0
    %2247 = vmatprep.subr.mxu0 0.0
    %2248 = vmatpush1.msra.mxu0 0.0
    %2249 = vmatprep.subr.mxu0 0.0
    %2250 = vmatpush1.msra.mxu0 0.0
    %2251 = vmatprep.subr.mxu0 0.0
    %2252 = vmatpush1.msra.mxu0 0.0
    %2253 = vmatprep.subr.mxu0 0.0
    %2254 = vmatpush1.msra.mxu0 0.0
    %2255 = vmatprep.subr.mxu0 0.0
    %2256 = vmatpush1.msra.mxu0 0.0
    %2257 = vmatprep.subr.mxu0 0.0
    %2258 = vmatpush1.msra.mxu0 0.0
    %2259 = vmatprep.subr.mxu0 0.0
    %2260 = vmatpush1.msra.mxu0 0.0
    %2261 = vmatprep.mubr.f32.mxu0 0.0
    %2262 = vmatmul.mubr.f32.gmra.mrb[0].mxu0 %v2195
    %v2263 = vpop.f32.mrb[0].mxu0
    %v2264 = vadd.f32 %v103, %v2263
    %v2265 = vpop.f32.mrb[0].mxu0
    %2266 = vdwg.mxu0
    %v2267 = vsel %vm740, %v2121, 0
    %2269 = vmatprep.subr.bf16.mxu0 0
    %2270 = vmatpush1.bf16.msra.mxu0 %v66
    %2271 = vmatprep.subr.bf16.mxu0 0
    %2272 = vmatpush1.bf16.msra.mxu0 %v67
    %2273 = vmatprep.subr.bf16.mxu0 0
    %2274 = vmatpush1.bf16.msra.mxu0 0
    %2275 = vmatprep.subr.bf16.mxu0 0
    %2276 = vmatpush1.bf16.msra.mxu0 0
    %2277 = vmatprep.subr.bf16.mxu0 0
    %2278 = vmatpush1.bf16.msra.mxu0 0
    %2279 = vmatprep.subr.bf16.mxu0 0
    %2280 = vmatpush1.bf16.msra.mxu0 0
    %2281 = vmatprep.subr.bf16.mxu0 0
    %2282 = vmatpush1.bf16.msra.mxu0 0
    %2283 = vmatprep.subr.bf16.mxu0 0
    %2284 = vmatpush1.bf16.msra.mxu0 0
    %2285 = vmatprep.subr.bf16.mxu0 0
    %2286 = vmatpush1.bf16.msra.mxu0 0
    %2287 = vmatprep.subr.bf16.mxu0 0
    %2288 = vmatpush1.bf16.msra.mxu0 0
    %2289 = vmatprep.subr.bf16.mxu0 0
    %2290 = vmatpush1.bf16.msra.mxu0 0
    %2291 = vmatprep.subr.bf16.mxu0 0
    %2292 = vmatpush1.bf16.msra.mxu0 0
    %2293 = vmatprep.subr.bf16.mxu0 0
    %2294 = vmatpush1.bf16.msra.mxu0 0
    %2295 = vmatprep.subr.bf16.mxu0 0
    %2296 = vmatpush1.bf16.msra.mxu0 0
    %2297 = vmatprep.subr.bf16.mxu0 0
    %2298 = vmatpush1.bf16.msra.mxu0 0
    %2299 = vmatprep.subr.bf16.mxu0 0
    %2300 = vmatpush1.bf16.msra.mxu0 0
    %2301 = vmatprep.mubr.bf16.mxu0 0
    %2302 = vmatmul.mubr.bf16.gmra.mrb[0].mxu0 %v2267
    %v2303 = vpop.f32.mrb[0].mxu0
    %v2304 = vadd.f32 %v89, %v2303
    %v2305 = vpop.f32.mrb[0].mxu0
    %v2306 = vpop.f32.mrb[0].mxu0
    %v2307 = vpop.f32.mrb[0].mxu0
    %2308 = vdwg.mxu0
    %v2309 = vadd.f32 %v737, %v2304
    %v2310 = vxor.u32 %v2309, 2147483648
    %v2311 = vmul.f32 %v2310, 1.442695
    %v2312 = vpow.pop %v2311
    %v2313 = vadd.f32 %v2312, 1.0
    %v2314 = vrcp.pop %v2313
    %v2315 = vmul.f32 1.0, %v2314
    %2317 = vrot.lane.b32.xlu0 %v2304, 64
    %v2318 = vpop.permute.xlu0 %2317
    %v2320 = vmul.f32 %v2315, %v2318
    %2322 = vrot.lane.b32.xlu0 %v2320, 64
    %v2323 = vpop.permute.xlu0 %2322
    %v2325 = vadd.f32 %v737, %v2323
    %v2326 = vtanh.pop %v2325
    %v2327 = vsub.f32 1.0, %v2315
    %2329 = vrot.lane.b32.xlu0 %v2326, 96
    %v2330 = vpop.permute.xlu0 %2329
    %v2332 = vmul.f32 %v2327, %v2330
    %v2333 = vmul.f32 %v2315, %v2116
    %v2334 = vadd.f32 %v2332, %v2333
    %v2335 = vpack.c.bf16 %v2334, %v2334
    %v2336 = vpack.c.bf16 %v2191, %v2191
    %2338 = vrot.lane.b32.xlu0 %v2335, 96
    %v2339 = vpop.permute.xlu0 %2338
    %v2342 = vsel %vm740, %v2339, %v2336
    %v2343 = vsel %vm816, %v2342, 0
    %2345 = vmatprep.subr.bf16.mxu0 0
    %2346 = vmatpush1.bf16.msra.mxu0 %v76
    %2347 = vmatprep.subr.bf16.mxu0 0
    %2348 = vmatpush1.bf16.msra.mxu0 %v77
    %2349 = vmatprep.subr.bf16.mxu0 0
    %2350 = vmatpush1.bf16.msra.mxu0 %v78
    %2351 = vmatprep.subr.bf16.mxu0 0
    %2352 = vmatpush1.bf16.msra.mxu0 %v79
    %2353 = vmatprep.subr.bf16.mxu0 0
    %2354 = vmatpush1.bf16.msra.mxu0 0
    %2355 = vmatprep.subr.bf16.mxu0 0
    %2356 = vmatpush1.bf16.msra.mxu0 0
    %2357 = vmatprep.subr.bf16.mxu0 0
    %2358 = vmatpush1.bf16.msra.mxu0 0
    %2359 = vmatprep.subr.bf16.mxu0 0
    %2360 = vmatpush1.bf16.msra.mxu0 0
    %2361 = vmatprep.subr.bf16.mxu0 0
    %2362 = vmatpush1.bf16.msra.mxu0 0
    %2363 = vmatprep.subr.bf16.mxu0 0
    %2364 = vmatpush1.bf16.msra.mxu0 0
    %2365 = vmatprep.subr.bf16.mxu0 0
    %2366 = vmatpush1.bf16.msra.mxu0 0
    %2367 = vmatprep.subr.bf16.mxu0 0
    %2368 = vmatpush1.bf16.msra.mxu0 0
    %2369 = vmatprep.subr.bf16.mxu0 0
    %2370 = vmatpush1.bf16.msra.mxu0 0
    %2371 = vmatprep.subr.bf16.mxu0 0
    %2372 = vmatpush1.bf16.msra.mxu0 0
    %2373 = vmatprep.subr.bf16.mxu0 0
    %2374 = vmatpush1.bf16.msra.mxu0 0
    %2375 = vmatprep.subr.bf16.mxu0 0
    %2376 = vmatpush1.bf16.msra.mxu0 0
    %2377 = vmatprep.mubr.bf16.mxu0 0
    %2378 = vmatmul.mubr.bf16.gmra.mrb[0].mxu0 %v2343
    %v2379 = vpop.f32.mrb[0].mxu0
    %v2380 = vadd.f32 %v96, %v2379
    %v2381 = vpop.f32.mrb[0].mxu0
    %v2382 = vpop.f32.mrb[0].mxu0
    %v2383 = vpop.f32.mrb[0].mxu0
    %2384 = vdwg.mxu0
    %v2385 = vxor.u32 %v2380, 2147483648
    %v2386 = vmul.f32 %v2385, 1.442695
    %v2387 = vpow.pop %v2386
    %v2388 = vadd.f32 %v2387, 1.0
    %v2389 = vrcp.pop %v2388
    %v2390 = vmul.f32 1.0, %v2389
    %2392 = vrot.lane.b32.xlu0 %v2380, 32
    %v2393 = vpop.permute.xlu0 %2392
    %v2395 = vmul.f32 %v2390, %v2393
    %2397 = vrot.lane.b32.xlu0 %v2395, 64
    %v2398 = vpop.permute.xlu0 %2397
    %v2400 = vadd.f32 %v2380, %v2398
    %v2401 = vtanh.pop %v2400
    %v2402 = vsub.f32 1.0, %v2390
    %2404 = vrot.lane.b32.xlu0 %v2401, 96
    %v2405 = vpop.permute.xlu0 %2404
    %v2407 = vmul.f32 %v2402, %v2405
    %v2408 = vmul.f32 %v2390, %v2191
    %v2409 = vadd.f32 %v2407, %v2408
    %2411 = vrot.lane.b32.xlu0 %v2409, 96
    %v2412 = vpop.permute.xlu0 %2411
    %v2413 = vsel %vm740, %v2412, 0
    %2415 = vmatprep.subr.mxu0 0.0
    %2416 = vmatpush1.msra.mxu0 %v80
    %2417 = vmatprep.subr.mxu0 0.0
    %2418 = vmatpush1.msra.mxu0 %v81
    %2419 = vmatprep.subr.mxu0 0.0
    %2420 = vmatpush1.msra.mxu0 %v82
    %2421 = vmatprep.subr.mxu0 0.0
    %2422 = vmatpush1.msra.mxu0 %v83
    %2423 = vmatprep.subr.mxu0 0.0
    %2424 = vmatpush1.msra.mxu0 0.0
    %2425 = vmatprep.subr.mxu0 0.0
    %2426 = vmatpush1.msra.mxu0 0.0
    %2427 = vmatprep.subr.mxu0 0.0
    %2428 = vmatpush1.msra.mxu0 0.0
    %2429 = vmatprep.subr.mxu0 0.0
    %2430 = vmatpush1.msra.mxu0 0.0
    %2431 = vmatprep.subr.mxu0 0.0
    %2432 = vmatpush1.msra.mxu0 0.0
    %2433 = vmatprep.subr.mxu0 0.0
    %2434 = vmatpush1.msra.mxu0 0.0
    %2435 = vmatprep.subr.mxu0 0.0
    %2436 = vmatpush1.msra.mxu0 0.0
    %2437 = vmatprep.subr.mxu0 0.0
    %2438 = vmatpush1.msra.mxu0 0.0
    %2439 = vmatprep.subr.mxu0 0.0
    %2440 = vmatpush1.msra.mxu0 0.0
    %2441 = vmatprep.subr.mxu0 0.0
    %2442 = vmatpush1.msra.mxu0 0.0
    %2443 = vmatprep.subr.mxu0 0.0
    %2444 = vmatpush1.msra.mxu0 0.0
    %2445 = vmatprep.subr.mxu0 0.0
    %2446 = vmatpush1.msra.mxu0 0.0
    %2447 = vmatprep.subr.mxu0 0.0
    %2448 = vmatpush1.msra.mxu0 0.0
    %2449 = vmatprep.subr.mxu0 0.0
    %2450 = vmatpush1.msra.mxu0 0.0
    %2451 = vmatprep.subr.mxu0 0.0
    %2452 = vmatpush1.msra.mxu0 0.0
    %2453 = vmatprep.subr.mxu0 0.0
    %2454 = vmatpush1.msra.mxu0 0.0
    %2455 = vmatprep.subr.mxu0 0.0
    %2456 = vmatpush1.msra.mxu0 0.0
    %2457 = vmatprep.subr.mxu0 0.0
    %2458 = vmatpush1.msra.mxu0 0.0
    %2459 = vmatprep.subr.mxu0 0.0
    %2460 = vmatpush1.msra.mxu0 0.0
    %2461 = vmatprep.subr.mxu0 0.0
    %2462 = vmatpush1.msra.mxu0 0.0
    %2463 = vmatprep.subr.mxu0 0.0
    %2464 = vmatpush1.msra.mxu0 0.0
    %2465 = vmatprep.subr.mxu0 0.0
    %2466 = vmatpush1.msra.mxu0 0.0
    %2467 = vmatprep.subr.mxu0 0.0
    %2468 = vmatpush1.msra.mxu0 0.0
    %2469 = vmatprep.subr.mxu0 0.0
    %2470 = vmatpush1.msra.mxu0 0.0
    %2471 = vmatprep.subr.mxu0 0.0
    %2472 = vmatpush1.msra.mxu0 0.0
    %2473 = vmatprep.subr.mxu0 0.0
    %2474 = vmatpush1.msra.mxu0 0.0
    %2475 = vmatprep.subr.mxu0 0.0
    %2476 = vmatpush1.msra.mxu0 0.0
    %2477 = vmatprep.subr.mxu0 0.0
    %2478 = vmatpush1.msra.mxu0 0.0
    %2479 = vmatprep.mubr.f32.mxu0 0.0
    %2480 = vmatmul.mubr.f32.gmra.mrb[0].mxu0 %v2413
    %v2481 = vpop.f32.mrb[0].mxu0
    %v2482 = vadd.f32 %v103, %v2481
    %v2483 = vpop.f32.mrb[0].mxu0
    %2484 = vdwg.mxu0
    %2486 = vrot.lane.b32.xlu0 %v1174, 16
    %v2487 = vpop.permute.xlu0 %2486
    %2490 = vrot.lane.b32.xlu0 %v1392, 32
    %v2491 = vpop.permute.xlu0 %2490
    %2494 = vrot.lane.b32.xlu0 %v1610, 48
    %v2495 = vpop.permute.xlu0 %2494
    %2498 = vrot.lane.b32.xlu0 %v1828, 64
    %v2499 = vpop.permute.xlu0 %2498
    %2502 = vrot.lane.b32.xlu0 %v2046, 80
    %v2503 = vpop.permute.xlu0 %2502
    %2506 = vrot.lane.b32.xlu0 %v2264, 96
    %v2507 = vpop.permute.xlu0 %2506
    %2510 = vrot.lane.b32.xlu0 %v2482, 112
    %v2511 = vpop.permute.xlu0 %2510
    %v2513 = vsel %vm113, %v956, %v2487
    %v2514 = vsel %vm740, %v2513, %v2491
    %vm2515 = vcmask 392192
    %v2516 = vsel %vm2515, %v2514, %v2495
    %v2517 = vsel %vm816, %v2516, %v2499
    %vm2518 = vcmask 654336
    %v2519 = vsel %vm2518, %v2517, %v2503
    %vm2520 = vcmask 785408
    %v2521 = vsel %vm2520, %v2519, %v2507
    %vm2522 = vcmask 916480
    %v2523 = vsel %vm2522, %v2521, %v2511
    %2524 = vst [vmem:[%s8] sm:$0xf] %v2523
    %2526 = vrot.lane.b32.xlu0 %v2334, 96
    %v2527 = vpop.permute.xlu0 %2526
    %vm2529 = vcmask 257024
    %2530 = vst.msk [vmem:[#allocation7] sm:$0xf] %vm2529, %v2527
    %s2532 = scalar_lea.vmem [#allocation7], 4
    %2533 = vst.msk [vmem:[%s2532] sm:$0xf] %vm2529, %v2412
    // Predicated region
    $region42: #{rnn_forward.1} parent=1 // pred_check
      _
    $region43: #{rnn_forward.1} parent=1 // pred_check_branch
      %2535 = sbr.rel (0) target = $region45
    $region44: #{rnn_forward.1} parent=1 // pred_region
      _
    $region45: #{rnn_forward.1} parent=1 // pred_fallthru
      _
    // Predicated region
    $region46: #{rnn_forward.1} parent=1 // pred_check
      _
    $region47: #{rnn_forward.1} parent=1 // pred_check_branch
      %2537 = sbr.rel (0) target = $region49
    $region48: #{rnn_forward.1} parent=1 // pred_region
      %s2539 = ssub.s32 128, 128
      %2540 = vsyncadd [#allocation4], %s2539
      %s2541 = sshll.u32 [#allocation7], 4
      %s2542 = int_to_ptr.vmem [resolvable:$true] %s2541
      %2547 = dma.vmem_to_hbm [thread:$0]  %s2542, 128, %s9, [#allocation4], 64, 64, 4
    $region49: #{rnn_forward.1} parent=1 // pred_fallthru
      _
    // Predicated region
    $region50: #{rnn_forward.1} parent=1 // pred_check
      _
    $region51: #{rnn_forward.1} parent=1 // pred_check_branch
      %2549 = sbr.rel (0) target = $region53
    $region52: #{rnn_forward.1} parent=1 // pred_region
      _
    $region53: #{rnn_forward.1} parent=1 // pred_fallthru
      _
    // Predicated region
    $region54: #{rnn_forward.1} parent=1 // pred_check
      _
    $region55: #{rnn_forward.1} parent=1 // pred_check_branch
      %2551 = sbr.rel (0) target = $region57
    $region56: #{rnn_forward.1} parent=1 // pred_region
      %2552 = dma.done [#allocation4], 128
    $region57: #{rnn_forward.1} parent=1 // pred_fallthru
      _
    %2553 = vsyncpa [#allocation3], 1
    %2554 = vsyncpa [#allocation6], 1
    %2555 = vsyncpa [#allocation4], 1

</llo_original>
